<compile_context>
chip_gen: v6e
topology: v6e:2x2x1
jax: 0.10.0
libtpu: 0.0.40
codegen_flags: <defaults>
</compile_context>

<pallas_src>
from functools import partial

import jax
import jax.numpy as jnp
from jax import lax
from jax.experimental import pallas as pl
from jax.experimental.pallas import tpu as pltpu


def _pick_kv_tile(m, max_tile=512):
    """Largest multiple-of-8 divisor of m that is <= max_tile (else m)."""
    if m <= max_tile:
        return m
    best = m
    for t in range(8, max_tile + 1, 8):
        if m % t == 0:
            best = t
    return best


# ---------------------------------------------------------------------------
# Fused kernel: projections + head-batched online-softmax attention + output
# projection.  Grid = (batch, kv_tiles).
# ---------------------------------------------------------------------------
def _fused_attention_kernel(
    x_ref,      # (1, n, Dq)          matmul_dtype
    ctx_ref,    # (1, tk, Dc)         matmul_dtype
    wq_ref,     # (heads, d, Dq)      matmul_dtype (scale pre-folded)
    wk_ref,     # (heads, d, Dc)      matmul_dtype
    wv_ref,     # (heads, d, Dc)      matmul_dtype
    wo_ref,     # (heads, Dq, d)      matmul_dtype
    bout_ref,   # (1, Dq)             f32
    o_ref,      # (1, n, Dq)
    q_sc,       # (heads, n, d)       matmul_dtype   scratch
    k_sc,       # (heads, tk, d)      matmul_dtype   scratch
    v_sc,       # (heads, tk, d)      matmul_dtype   scratch
    m_sc,       # (heads, n, 1)       f32            scratch
    l_sc,       # (heads, n, 1)       f32            scratch
    acc_sc,     # (heads, n, d)       f32            scratch
    *,
    heads,
    matmul_dtype,
):
    f32 = jnp.float32
    nt = (((1,), (1,)), ((), ()))          # 2-D  A @ B.T   (contract last dims)
    bnt = (((2,), (2,)), ((0,), (0,)))     # heads-batched  A @ B.T
    bnn = (((2,), (1,)), ((0,), (0,)))     # heads-batched  A @ B

    kv = pl.program_id(1)

    # ---- per-batch-element init (runs once, at the first KV tile) ----------
    @pl.when(kv == 0)
    def _init():
        x = x_ref[0]                                               # (n, Dq)
        for h in range(heads):                                     # static, small
            # wq_ref[h] is a sublane-aligned (d, Dq) slab -> free "slice".
            q_sc[h] = lax.dot_general(
                x, wq_ref[h], nt, preferred_element_type=f32
            ).astype(matmul_dtype)
        m_sc[...] = jnp.full(m_sc.shape, -jnp.inf, dtype=f32)
        l_sc[...] = jnp.zeros(l_sc.shape, dtype=f32)
        acc_sc[...] = jnp.zeros(acc_sc.shape, dtype=f32)

    # ---- project this KV tile to head-major K / V --------------------------
    ctx = ctx_ref[0]                                               # (tk, Dc)
    for h in range(heads):
        k_sc[h] = lax.dot_general(
            ctx, wk_ref[h], nt, preferred_element_type=f32).astype(matmul_dtype)
        v_sc[h] = lax.dot_general(
            ctx, wv_ref[h], nt, preferred_element_type=f32).astype(matmul_dtype)

    q = q_sc[...]                                                  # (h, n, d)
    kh = k_sc[...]                                                 # (h, tk, d)
    vh = v_sc[...]                                                 # (h, tk, d)

    # ---- heads-batched scores + online softmax update ----------------------
    sim = lax.dot_general(q, kh, bnt, preferred_element_type=f32)  # (h, n, tk) f32

    m_prev = m_sc[...]
    m_new = jnp.maximum(m_prev, jnp.max(sim, axis=-1, keepdims=True))
    alpha = jnp.exp(m_prev - m_new)                                # (h, n, 1)
    p = jnp.exp(sim - m_new)                                       # f32 (EUP)
    l_sc[...] = alpha * l_sc[...] + jnp.sum(p, axis=-1, keepdims=True)
    pv = lax.dot_general(p.astype(matmul_dtype), vh, bnn,
                         preferred_element_type=f32)               # (h, n, d)
    acc_sc[...] = alpha * acc_sc[...] + pv
    m_sc[...] = m_new

    # ---- finalize: normalize, merge heads via output projection ------------
    @pl.when(kv == pl.num_programs(1) - 1)
    def _finalize():
        inv_l = pl.reciprocal(l_sc[...], approx=True)              # (h, n, 1)
        out_h = (acc_sc[...] * inv_l).astype(matmul_dtype)         # (h, n, d)
        # heads-batched output projection, then a cheap leading-axis reduce
        # (avoids the head-merge relayout; equivalent to (n, inner) @ Wout.T).
        yh = lax.dot_general(out_h, wo_ref[...], bnt,
                             preferred_element_type=f32)           # (h, n, Dq)
        y = jnp.sum(yh, axis=0) + bout_ref[...]                    # (n, Dq)
        o_ref[0] = y.astype(o_ref.dtype)


# ---------------------------------------------------------------------------
# Module forward (eval mode: Dropout(p) is identity)
# ---------------------------------------------------------------------------
def attention_forward(
    x, context, w_q, w_kv, w_out, b_out, *, heads, dim_head,
    matmul_dtype=jnp.bfloat16, kv_tile_max=512,
):
    """x: (b, n, Dq); context: (b, m, Dc); torch.nn.Linear weight layout
    (out_features, in_features).

    matmul_dtype=jnp.bfloat16 is recommended on v5e/v6e/v7x (MXU runs bf16 at
    full rate; softmax statistics and all accumulation stay in f32).  Use
    jnp.float32 for a numerically exact path (modulo the EUP approx
    reciprocal in the softmax normalizer)."""
    b, n, query_dim = x.shape
    _, m, context_dim = context.shape
    inner = heads * dim_head
    assert w_q.shape == (inner, query_dim)
    assert w_kv.shape == (2 * inner, context_dim)
    assert w_out.shape == (query_dim, inner)
    assert b_out.shape == (query_dim,)

    scale = dim_head ** (-0.5)
    out_dtype = x.dtype

    kv_tile = _pick_kv_tile(m, kv_tile_max)
    num_kv = m // kv_tile

    # Wrapper-side weight prep: head-major slabs, matmul dtype, scale folded
    # into W_q.  (== torch .chunk(2, dim=-1) on the kv projection.)
    wq_h = (w_q * scale).reshape(heads, dim_head, query_dim).astype(matmul_dtype)
    wk_h = w_kv[:inner].reshape(heads, dim_head, context_dim).astype(matmul_dtype)
    wv_h = w_kv[inner:].reshape(heads, dim_head, context_dim).astype(matmul_dtype)
    wo_h = (w_out.reshape(query_dim, heads, dim_head)
                 .transpose(1, 0, 2).astype(matmul_dtype))          # (h, Dq, d)
    bias2d = b_out.reshape(1, query_dim).astype(jnp.float32)
    x_mm = x.astype(matmul_dtype)
    ctx_mm = context.astype(matmul_dtype)

    # VMEM budget (blocks are double-buffered by the pipeline; scratch single).
    mm_b = jnp.dtype(matmul_dtype).itemsize
    out_b = jnp.dtype(out_dtype).itemsize
    weight_bytes = int(wq_h.size + wk_h.size + wv_h.size + wo_h.size) * mm_b
    est = (
        2 * (n * query_dim + kv_tile * context_dim) * mm_b          # x / ctx blocks
        + 2 * n * query_dim * out_b                                 # out block
        + 2 * (weight_bytes + bias2d.size * 4)                      # weights + bias
        + heads * n * dim_head * (mm_b + 4)                         # q_sc + acc_sc
        + 2 * heads * kv_tile * dim_head * mm_b                     # k_sc + v_sc
        + 2 * heads * n * 4                                         # m_sc + l_sc
        + 2 * heads * n * kv_tile * 4                               # live sim / p
    )
    vmem_limit = int(min(96 * 2**20, max(32 * 2**20, 2 * est)))

    flops = 2 * b * (
        n * query_dim * inner            # q projection
        + 2 * m * context_dim * inner    # k, v projections
        + 2 * heads * n * m * dim_head   # scores + PV
        + n * inner * query_dim          # output projection
    )
    transcendentals = b * heads * n * (m + num_kv)
    bytes_accessed = int(
        (x_mm.size + ctx_mm.size) * mm_b + weight_bytes
        + bias2d.size * 4 + b * n * query_dim * out_b
    )

    kernel = partial(_fused_attention_kernel, heads=heads, matmul_dtype=matmul_dtype)

    return pl.pallas_call(
        kernel,
        out_shape=jax.ShapeDtypeStruct((b, n, query_dim), out_dtype),
        grid_spec=pltpu.PrefetchScalarGridSpec(
            num_scalar_prefetch=0,
            grid=(b, num_kv),
            in_specs=[
                pl.BlockSpec((1, n, query_dim), lambda i, k: (i, 0, 0)),
                pl.BlockSpec((1, kv_tile, context_dim), lambda i, k: (i, k, 0)),
                # Weights / bias: constant index_map -> resident across steps.
                pl.BlockSpec((heads, dim_head, query_dim), lambda i, k: (0, 0, 0)),
                pl.BlockSpec((heads, dim_head, context_dim), lambda i, k: (0, 0, 0)),
                pl.BlockSpec((heads, dim_head, context_dim), lambda i, k: (0, 0, 0)),
                pl.BlockSpec((heads, query_dim, dim_head), lambda i, k: (0, 0, 0)),
                pl.BlockSpec((1, query_dim), lambda i, k: (0, 0)),
            ],
            out_specs=pl.BlockSpec((1, n, query_dim), lambda i, k: (i, 0, 0)),
            scratch_shapes=[
                pltpu.VMEM((heads, n, dim_head), matmul_dtype),       # q
                pltpu.VMEM((heads, kv_tile, dim_head), matmul_dtype), # k tile
                pltpu.VMEM((heads, kv_tile, dim_head), matmul_dtype), # v tile
                pltpu.VMEM((heads, n, 1), jnp.float32),               # running max
                pltpu.VMEM((heads, n, 1), jnp.float32),               # running sum
                pltpu.VMEM((heads, n, dim_head), jnp.float32),        # acc
            ],
        ),
        compiler_params=pltpu.CompilerParams(
            dimension_semantics=("parallel", "arbitrary"),
            vmem_limit_bytes=vmem_limit,
        ),
        cost_estimate=pl.CostEstimate(
            flops=int(flops),
            transcendentals=int(transcendentals),
            bytes_accessed=bytes_accessed,
        ),
    )(x_mm, ctx_mm, wq_h, wk_h, wv_h, wo_h, bias2d)


# ---------------------------------------------------------------------------
# Pure-JAX reference for verification
# ---------------------------------------------------------------------------
def attention_ref(x, context, w_q, w_kv, w_out, b_out, *, heads, dim_head):
    b, n, _ = x.shape
    _, m, _ = context.shape
    inner = heads * dim_head
    scale = dim_head ** (-0.5)
    q = x @ w_q.T
    kv = context @ w_kv.T
    k, v = kv[..., :inner], kv[..., inner:]

    def sh(t, seq):
        return t.reshape(b, seq, heads, dim_head).transpose(0, 2, 1, 3)

    qh, kh, vh = sh(q, n), sh(k, m), sh(v, m)
    sim = jnp.einsum("bhid,bhjd->bhij", qh, kh) * scale
    attn = jax.nn.softmax(sim, axis=-1)
    out = jnp.einsum("bhij,bhjd->bhid", attn, vh)
    out = out.transpose(0, 2, 1, 3).reshape(b, n, inner)
    return out @ w_out.T + b_out


if __name__ == "__main__":
    key = jax.random.PRNGKey(0)
    b, n, m = 2, 8, 16
    query_dim = 32
    context_dim = 32
    heads, dim_head = 4, 16
    inner = heads * dim_head

    k1, k2, k3, k4, k5, k6 = jax.random.split(key, 6)
    x = jax.random.normal(k1, (b, n, query_dim), jnp.float32)
    context = jax.random.normal(k2, (b, m, context_dim), jnp.float32)

    # deterministic synthetic parameters (torch.nn.Linear shapes)
    w_q = jax.random.normal(k3, (inner, query_dim), jnp.float32) * 0.05
    w_kv = jax.random.normal(k4, (2 * inner, context_dim), jnp.float32) * 0.05
    w_out = jax.random.normal(k5, (query_dim, inner), jnp.float32) * 0.05
    b_out = jax.random.normal(k6, (query_dim,), jnp.float32) * 0.05

    ref = attention_ref(
        x, context, w_q, w_kv, w_out, b_out, heads=heads, dim_head=dim_head
    )

    # f32 MXU operands (exact path modulo the approx reciprocal on the EUP).
    out_f32 = attention_forward(
        x, context, w_q, w_kv, w_out, b_out,
        heads=heads, dim_head=dim_head, matmul_dtype=jnp.float32,
    )
    out_f32 = jax.block_until_ready(out_f32)
    assert out_f32.shape == (b, n, query_dim)
    assert jnp.allclose(out_f32, ref, atol=2e-3, rtol=2e-3)

    # bf16 MXU operands (recommended on v5e/v6e/v7x): f32 accumulation and
    # f32 softmax statistics are kept, so only a small numerical delta.
    out_bf16 = attention_forward(
        x, context, w_q, w_kv, w_out, b_out,
        heads=heads, dim_head=dim_head, matmul_dtype=jnp.bfloat16,
    )
    out_bf16 = jax.block_until_ready(out_bf16)
    assert jnp.allclose(out_bf16, ref, atol=2e-2, rtol=2e-2)

    print("KERNEL_OK")
</pallas_src>

<mosaic_0001>
module attributes {stable_mosaic.version = 11 : i64} {
  func.func @_fused_attention_kernel(%arg0: i32, %arg1: i32, %arg2: memref<1x8x32xf32, #tpu.memory_space<vmem>>, %arg3: memref<1x16x32xf32, #tpu.memory_space<vmem>>, %arg4: memref<4x16x32xf32, #tpu.memory_space<vmem>>, %arg5: memref<4x16x32xf32, #tpu.memory_space<vmem>>, %arg6: memref<4x16x32xf32, #tpu.memory_space<vmem>>, %arg7: memref<4x32x16xf32, #tpu.memory_space<vmem>>, %arg8: memref<1x32xf32, #tpu.memory_space<vmem>>, %arg9: memref<1x8x32xf32, #tpu.memory_space<vmem>>, %arg10: memref<4x8x16xf32, #tpu.memory_space<vmem>>, %arg11: memref<4x16x16xf32, #tpu.memory_space<vmem>>, %arg12: memref<4x16x16xf32, #tpu.memory_space<vmem>>, %arg13: memref<4x8x1xf32, #tpu.memory_space<vmem>>, %arg14: memref<4x8x1xf32, #tpu.memory_space<vmem>>, %arg15: memref<4x8x16xf32, #tpu.memory_space<vmem>>) attributes {dimension_semantics = [#tpu.dimension_semantics<parallel>, #tpu.dimension_semantics<arbitrary>], iteration_bounds = array<i64: 2, 1>, scalar_prefetch = 0 : i64, scratch_operands = 6 : i64, tpu.core_type = #tpu.core_type<tc>, window_params = [{transform_indices = @transform_0, window_bounds = array<i64: 1, 8, 32>}, {transform_indices = @transform_1, window_bounds = array<i64: 1, 16, 32>}, {pipeline_mode = #tpu.pipeline_mode<synchronous>, transform_indices = @transform_2, window_bounds = array<i64: 4, 16, 32>}, {pipeline_mode = #tpu.pipeline_mode<synchronous>, transform_indices = @transform_3, window_bounds = array<i64: 4, 16, 32>}, {pipeline_mode = #tpu.pipeline_mode<synchronous>, transform_indices = @transform_4, window_bounds = array<i64: 4, 16, 32>}, {pipeline_mode = #tpu.pipeline_mode<synchronous>, transform_indices = @transform_5, window_bounds = array<i64: 4, 32, 16>}, {pipeline_mode = #tpu.pipeline_mode<synchronous>, transform_indices = @transform_6, window_bounds = array<i64: 1, 32>}, {transform_indices = @transform_7, window_bounds = array<i64: 1, 8, 32>}]} {
    %c0_i32 = arith.constant 0 : i32
    %0 = arith.cmpi eq, %arg1, %c0_i32 : i32
    %1 = arith.extui %0 : i1 to i32
    %c0_i32_0 = arith.constant 0 : i32
    %2 = arith.cmpi ne, %1, %c0_i32_0 : i32
    scf.if %2 {
      %c0_88 = arith.constant 0 : index
      %c0_89 = arith.constant 0 : index
      %c0_90 = arith.constant 0 : index
      %82 = vector.load %arg2[%c0_88, %c0_89, %c0_90] : memref<1x8x32xf32, #tpu.memory_space<vmem>>, vector<1x8x32xf32>
      %83 = vector.shape_cast %82 : vector<1x8x32xf32> to vector<8x32xf32>
      %c0_91 = arith.constant 0 : index
      %c0_92 = arith.constant 0 : index
      %c0_93 = arith.constant 0 : index
      %84 = vector.load %arg4[%c0_91, %c0_92, %c0_93] : memref<4x16x32xf32, #tpu.memory_space<vmem>>, vector<1x16x32xf32>
      %85 = vector.shape_cast %84 : vector<1x16x32xf32> to vector<16x32xf32>
      %cst_94 = arith.constant dense<0.000000e+00> : vector<8x16xf32>
      %86 = tpu.matmul %83, %85, %cst_94 {dimension_numbers = #tpu.dot_dimension_numbers<[1], [1], [0], [0], [0, 0, 1, 0], [], []>} : vector<8x32xf32>, vector<16x32xf32>, vector<8x16xf32> -> vector<8x16xf32>
      %c0_95 = arith.constant 0 : index
      %c0_96 = arith.constant 0 : index
      %c0_97 = arith.constant 0 : index
      %87 = vector.load %arg10[%c0_95, %c0_96, %c0_97] : memref<4x8x16xf32, #tpu.memory_space<vmem>>, vector<1x8x16xf32>
      %88 = vector.shape_cast %87 : vector<1x8x16xf32> to vector<8x16xf32>
      %89 = vector.shape_cast %86 : vector<8x16xf32> to vector<1x8x16xf32>
      tpu.vector_store %arg10[%c0_95, %c0_96, %c0_97], %89 {strides = array<i32>} : memref<4x8x16xf32, #tpu.memory_space<vmem>>, vector<1x8x16xf32>,
      %c1_98 = arith.constant 1 : index
      %c0_99 = arith.constant 0 : index
      %c0_100 = arith.constant 0 : index
      %90 = vector.load %arg4[%c1_98, %c0_99, %c0_100] : memref<4x16x32xf32, #tpu.memory_space<vmem>>, vector<1x16x32xf32>
      %91 = vector.shape_cast %90 : vector<1x16x32xf32> to vector<16x32xf32>
      %cst_101 = arith.constant dense<0.000000e+00> : vector<8x16xf32>
      %92 = tpu.matmul %83, %91, %cst_101 {dimension_numbers = #tpu.dot_dimension_numbers<[1], [1], [0], [0], [0, 0, 1, 0], [], []>} : vector<8x32xf32>, vector<16x32xf32>, vector<8x16xf32> -> vector<8x16xf32>
      %c1_102 = arith.constant 1 : index
      %c0_103 = arith.constant 0 : index
      %c0_104 = arith.constant 0 : index
      %93 = vector.load %arg10[%c1_102, %c0_103, %c0_104] : memref<4x8x16xf32, #tpu.memory_space<vmem>>, vector<1x8x16xf32>
      %94 = vector.shape_cast %93 : vector<1x8x16xf32> to vector<8x16xf32>
      %95 = vector.shape_cast %92 : vector<8x16xf32> to vector<1x8x16xf32>
      tpu.vector_store %arg10[%c1_102, %c0_103, %c0_104], %95 {strides = array<i32>} : memref<4x8x16xf32, #tpu.memory_space<vmem>>, vector<1x8x16xf32>,
      %c2_105 = arith.constant 2 : index
      %c0_106 = arith.constant 0 : index
      %c0_107 = arith.constant 0 : index
      %96 = vector.load %arg4[%c2_105, %c0_106, %c0_107] : memref<4x16x32xf32, #tpu.memory_space<vmem>>, vector<1x16x32xf32>
      %97 = vector.shape_cast %96 : vector<1x16x32xf32> to vector<16x32xf32>
      %cst_108 = arith.constant dense<0.000000e+00> : vector<8x16xf32>
      %98 = tpu.matmul %83, %97, %cst_108 {dimension_numbers = #tpu.dot_dimension_numbers<[1], [1], [0], [0], [0, 0, 1, 0], [], []>} : vector<8x32xf32>, vector<16x32xf32>, vector<8x16xf32> -> vector<8x16xf32>
      %c2_109 = arith.constant 2 : index
      %c0_110 = arith.constant 0 : index
      %c0_111 = arith.constant 0 : index
      %99 = vector.load %arg10[%c2_109, %c0_110, %c0_111] : memref<4x8x16xf32, #tpu.memory_space<vmem>>, vector<1x8x16xf32>
      %100 = vector.shape_cast %99 : vector<1x8x16xf32> to vector<8x16xf32>
      %101 = vector.shape_cast %98 : vector<8x16xf32> to vector<1x8x16xf32>
      tpu.vector_store %arg10[%c2_109, %c0_110, %c0_111], %101 {strides = array<i32>} : memref<4x8x16xf32, #tpu.memory_space<vmem>>, vector<1x8x16xf32>,
      %c3_112 = arith.constant 3 : index
      %c0_113 = arith.constant 0 : index
      %c0_114 = arith.constant 0 : index
      %102 = vector.load %arg4[%c3_112, %c0_113, %c0_114] : memref<4x16x32xf32, #tpu.memory_space<vmem>>, vector<1x16x32xf32>
      %103 = vector.shape_cast %102 : vector<1x16x32xf32> to vector<16x32xf32>
      %cst_115 = arith.constant dense<0.000000e+00> : vector<8x16xf32>
      %104 = tpu.matmul %83, %103, %cst_115 {dimension_numbers = #tpu.dot_dimension_numbers<[1], [1], [0], [0], [0, 0, 1, 0], [], []>} : vector<8x32xf32>, vector<16x32xf32>, vector<8x16xf32> -> vector<8x16xf32>
      %c3_116 = arith.constant 3 : index
      %c0_117 = arith.constant 0 : index
      %c0_118 = arith.constant 0 : index
      %105 = vector.load %arg10[%c3_116, %c0_117, %c0_118] : memref<4x8x16xf32, #tpu.memory_space<vmem>>, vector<1x8x16xf32>
      %106 = vector.shape_cast %105 : vector<1x8x16xf32> to vector<8x16xf32>
      %107 = vector.shape_cast %104 : vector<8x16xf32> to vector<1x8x16xf32>
      tpu.vector_store %arg10[%c3_116, %c0_117, %c0_118], %107 {strides = array<i32>} : memref<4x8x16xf32, #tpu.memory_space<vmem>>, vector<1x8x16xf32>,
      %cst_119 = arith.constant 0xFF800000 : f32
      %108 = vector.broadcast %cst_119 : f32 to vector<4x8x1xf32>
      %c0_120 = arith.constant 0 : index
      %c0_121 = arith.constant 0 : index
      %c0_122 = arith.constant 0 : index
      %109 = vector.load %arg13[%c0_120, %c0_121, %c0_122] : memref<4x8x1xf32, #tpu.memory_space<vmem>>, vector<4x8x1xf32>
      tpu.vector_store %arg13[%c0_120, %c0_121, %c0_122], %108 {strides = array<i32>} : memref<4x8x1xf32, #tpu.memory_space<vmem>>, vector<4x8x1xf32>,
      %cst_123 = arith.constant 0.000000e+00 : f32
      %110 = vector.broadcast %cst_123 : f32 to vector<4x8x1xf32>
      %c0_124 = arith.constant 0 : index
      %c0_125 = arith.constant 0 : index
      %c0_126 = arith.constant 0 : index
      %111 = vector.load %arg14[%c0_124, %c0_125, %c0_126] : memref<4x8x1xf32, #tpu.memory_space<vmem>>, vector<4x8x1xf32>
      tpu.vector_store %arg14[%c0_124, %c0_125, %c0_126], %110 {strides = array<i32>} : memref<4x8x1xf32, #tpu.memory_space<vmem>>, vector<4x8x1xf32>,
      %cst_127 = arith.constant 0.000000e+00 : f32
      %112 = vector.broadcast %cst_127 : f32 to vector<4x8x16xf32>
      %c0_128 = arith.constant 0 : index
      %c0_129 = arith.constant 0 : index
      %c0_130 = arith.constant 0 : index
      %113 = vector.load %arg15[%c0_128, %c0_129, %c0_130] : memref<4x8x16xf32, #tpu.memory_space<vmem>>, vector<4x8x16xf32>
      tpu.vector_store %arg15[%c0_128, %c0_129, %c0_130], %112 {strides = array<i32>} : memref<4x8x16xf32, #tpu.memory_space<vmem>>, vector<4x8x16xf32>,
    } else {
    }
    %c0 = arith.constant 0 : index
    %c0_1 = arith.constant 0 : index
    %c0_2 = arith.constant 0 : index
    %3 = vector.load %arg3[%c0, %c0_1, %c0_2] : memref<1x16x32xf32, #tpu.memory_space<vmem>>, vector<1x16x32xf32>
    %4 = vector.shape_cast %3 : vector<1x16x32xf32> to vector<16x32xf32>
    %c0_3 = arith.constant 0 : index
    %c0_4 = arith.constant 0 : index
    %c0_5 = arith.constant 0 : index
    %5 = vector.load %arg5[%c0_3, %c0_4, %c0_5] : memref<4x16x32xf32, #tpu.memory_space<vmem>>, vector<1x16x32xf32>
    %6 = vector.shape_cast %5 : vector<1x16x32xf32> to vector<16x32xf32>
    %cst = arith.constant dense<0.000000e+00> : vector<16x16xf32>
    %7 = tpu.matmul %4, %6, %cst {dimension_numbers = #tpu.dot_dimension_numbers<[1], [1], [0], [0], [0, 0, 1, 0], [], []>} : vector<16x32xf32>, vector<16x32xf32>, vector<16x16xf32> -> vector<16x16xf32>
    %c0_6 = arith.constant 0 : index
    %c0_7 = arith.constant 0 : index
    %c0_8 = arith.constant 0 : index
    %8 = vector.load %arg11[%c0_6, %c0_7, %c0_8] : memref<4x16x16xf32, #tpu.memory_space<vmem>>, vector<1x16x16xf32>
    %9 = vector.shape_cast %8 : vector<1x16x16xf32> to vector<16x16xf32>
    %10 = vector.shape_cast %7 : vector<16x16xf32> to vector<1x16x16xf32>
    tpu.vector_store %arg11[%c0_6, %c0_7, %c0_8], %10 {strides = array<i32>} : memref<4x16x16xf32, #tpu.memory_space<vmem>>, vector<1x16x16xf32>,
    %c0_9 = arith.constant 0 : index
    %c0_10 = arith.constant 0 : index
    %c0_11 = arith.constant 0 : index
    %11 = vector.load %arg6[%c0_9, %c0_10, %c0_11] : memref<4x16x32xf32, #tpu.memory_space<vmem>>, vector<1x16x32xf32>
    %12 = vector.shape_cast %11 : vector<1x16x32xf32> to vector<16x32xf32>
    %cst_12 = arith.constant dense<0.000000e+00> : vector<16x16xf32>
    %13 = tpu.matmul %4, %12, %cst_12 {dimension_numbers = #tpu.dot_dimension_numbers<[1], [1], [0], [0], [0, 0, 1, 0], [], []>} : vector<16x32xf32>, vector<16x32xf32>, vector<16x16xf32> -> vector<16x16xf32>
    %c0_13 = arith.constant 0 : index
    %c0_14 = arith.constant 0 : index
    %c0_15 = arith.constant 0 : index
    %14 = vector.load %arg12[%c0_13, %c0_14, %c0_15] : memref<4x16x16xf32, #tpu.memory_space<vmem>>, vector<1x16x16xf32>
    %15 = vector.shape_cast %14 : vector<1x16x16xf32> to vector<16x16xf32>
    %16 = vector.shape_cast %13 : vector<16x16xf32> to vector<1x16x16xf32>
    tpu.vector_store %arg12[%c0_13, %c0_14, %c0_15], %16 {strides = array<i32>} : memref<4x16x16xf32, #tpu.memory_space<vmem>>, vector<1x16x16xf32>,
    %c1 = arith.constant 1 : index
    %c0_16 = arith.constant 0 : index
    %c0_17 = arith.constant 0 : index
    %17 = vector.load %arg5[%c1, %c0_16, %c0_17] : memref<4x16x32xf32, #tpu.memory_space<vmem>>, vector<1x16x32xf32>
    %18 = vector.shape_cast %17 : vector<1x16x32xf32> to vector<16x32xf32>
    %cst_18 = arith.constant dense<0.000000e+00> : vector<16x16xf32>
    %19 = tpu.matmul %4, %18, %cst_18 {dimension_numbers = #tpu.dot_dimension_numbers<[1], [1], [0], [0], [0, 0, 1, 0], [], []>} : vector<16x32xf32>, vector<16x32xf32>, vector<16x16xf32> -> vector<16x16xf32>
    %c1_19 = arith.constant 1 : index
    %c0_20 = arith.constant 0 : index
    %c0_21 = arith.constant 0 : index
    %20 = vector.load %arg11[%c1_19, %c0_20, %c0_21] : memref<4x16x16xf32, #tpu.memory_space<vmem>>, vector<1x16x16xf32>
    %21 = vector.shape_cast %20 : vector<1x16x16xf32> to vector<16x16xf32>
    %22 = vector.shape_cast %19 : vector<16x16xf32> to vector<1x16x16xf32>
    tpu.vector_store %arg11[%c1_19, %c0_20, %c0_21], %22 {strides = array<i32>} : memref<4x16x16xf32, #tpu.memory_space<vmem>>, vector<1x16x16xf32>,
    %c1_22 = arith.constant 1 : index
    %c0_23 = arith.constant 0 : index
    %c0_24 = arith.constant 0 : index
    %23 = vector.load %arg6[%c1_22, %c0_23, %c0_24] : memref<4x16x32xf32, #tpu.memory_space<vmem>>, vector<1x16x32xf32>
    %24 = vector.shape_cast %23 : vector<1x16x32xf32> to vector<16x32xf32>
    %cst_25 = arith.constant dense<0.000000e+00> : vector<16x16xf32>
    %25 = tpu.matmul %4, %24, %cst_25 {dimension_numbers = #tpu.dot_dimension_numbers<[1], [1], [0], [0], [0, 0, 1, 0], [], []>} : vector<16x32xf32>, vector<16x32xf32>, vector<16x16xf32> -> vector<16x16xf32>
    %c1_26 = arith.constant 1 : index
    %c0_27 = arith.constant 0 : index
    %c0_28 = arith.constant 0 : index
    %26 = vector.load %arg12[%c1_26, %c0_27, %c0_28] : memref<4x16x16xf32, #tpu.memory_space<vmem>>, vector<1x16x16xf32>
    %27 = vector.shape_cast %26 : vector<1x16x16xf32> to vector<16x16xf32>
    %28 = vector.shape_cast %25 : vector<16x16xf32> to vector<1x16x16xf32>
    tpu.vector_store %arg12[%c1_26, %c0_27, %c0_28], %28 {strides = array<i32>} : memref<4x16x16xf32, #tpu.memory_space<vmem>>, vector<1x16x16xf32>,
    %c2 = arith.constant 2 : index
    %c0_29 = arith.constant 0 : index
    %c0_30 = arith.constant 0 : index
    %29 = vector.load %arg5[%c2, %c0_29, %c0_30] : memref<4x16x32xf32, #tpu.memory_space<vmem>>, vector<1x16x32xf32>
    %30 = vector.shape_cast %29 : vector<1x16x32xf32> to vector<16x32xf32>
    %cst_31 = arith.constant dense<0.000000e+00> : vector<16x16xf32>
    %31 = tpu.matmul %4, %30, %cst_31 {dimension_numbers = #tpu.dot_dimension_numbers<[1], [1], [0], [0], [0, 0, 1, 0], [], []>} : vector<16x32xf32>, vector<16x32xf32>, vector<16x16xf32> -> vector<16x16xf32>
    %c2_32 = arith.constant 2 : index
    %c0_33 = arith.constant 0 : index
    %c0_34 = arith.constant 0 : index
    %32 = vector.load %arg11[%c2_32, %c0_33, %c0_34] : memref<4x16x16xf32, #tpu.memory_space<vmem>>, vector<1x16x16xf32>
    %33 = vector.shape_cast %32 : vector<1x16x16xf32> to vector<16x16xf32>
    %34 = vector.shape_cast %31 : vector<16x16xf32> to vector<1x16x16xf32>
    tpu.vector_store %arg11[%c2_32, %c0_33, %c0_34], %34 {strides = array<i32>} : memref<4x16x16xf32, #tpu.memory_space<vmem>>, vector<1x16x16xf32>,
    %c2_35 = arith.constant 2 : index
    %c0_36 = arith.constant 0 : index
    %c0_37 = arith.constant 0 : index
    %35 = vector.load %arg6[%c2_35, %c0_36, %c0_37] : memref<4x16x32xf32, #tpu.memory_space<vmem>>, vector<1x16x32xf32>
    %36 = vector.shape_cast %35 : vector<1x16x32xf32> to vector<16x32xf32>
    %cst_38 = arith.constant dense<0.000000e+00> : vector<16x16xf32>
    %37 = tpu.matmul %4, %36, %cst_38 {dimension_numbers = #tpu.dot_dimension_numbers<[1], [1], [0], [0], [0, 0, 1, 0], [], []>} : vector<16x32xf32>, vector<16x32xf32>, vector<16x16xf32> -> vector<16x16xf32>
    %c2_39 = arith.constant 2 : index
    %c0_40 = arith.constant 0 : index
    %c0_41 = arith.constant 0 : index
    %38 = vector.load %arg12[%c2_39, %c0_40, %c0_41] : memref<4x16x16xf32, #tpu.memory_space<vmem>>, vector<1x16x16xf32>
    %39 = vector.shape_cast %38 : vector<1x16x16xf32> to vector<16x16xf32>
    %40 = vector.shape_cast %37 : vector<16x16xf32> to vector<1x16x16xf32>
    tpu.vector_store %arg12[%c2_39, %c0_40, %c0_41], %40 {strides = array<i32>} : memref<4x16x16xf32, #tpu.memory_space<vmem>>, vector<1x16x16xf32>,
    %c3 = arith.constant 3 : index
    %c0_42 = arith.constant 0 : index
    %c0_43 = arith.constant 0 : index
    %41 = vector.load %arg5[%c3, %c0_42, %c0_43] : memref<4x16x32xf32, #tpu.memory_space<vmem>>, vector<1x16x32xf32>
    %42 = vector.shape_cast %41 : vector<1x16x32xf32> to vector<16x32xf32>
    %cst_44 = arith.constant dense<0.000000e+00> : vector<16x16xf32>
    %43 = tpu.matmul %4, %42, %cst_44 {dimension_numbers = #tpu.dot_dimension_numbers<[1], [1], [0], [0], [0, 0, 1, 0], [], []>} : vector<16x32xf32>, vector<16x32xf32>, vector<16x16xf32> -> vector<16x16xf32>
    %c3_45 = arith.constant 3 : index
    %c0_46 = arith.constant 0 : index
    %c0_47 = arith.constant 0 : index
    %44 = vector.load %arg11[%c3_45, %c0_46, %c0_47] : memref<4x16x16xf32, #tpu.memory_space<vmem>>, vector<1x16x16xf32>
    %45 = vector.shape_cast %44 : vector<1x16x16xf32> to vector<16x16xf32>
    %46 = vector.shape_cast %43 : vector<16x16xf32> to vector<1x16x16xf32>
    tpu.vector_store %arg11[%c3_45, %c0_46, %c0_47], %46 {strides = array<i32>} : memref<4x16x16xf32, #tpu.memory_space<vmem>>, vector<1x16x16xf32>,
    %c3_48 = arith.constant 3 : index
    %c0_49 = arith.constant 0 : index
    %c0_50 = arith.constant 0 : index
    %47 = vector.load %arg6[%c3_48, %c0_49, %c0_50] : memref<4x16x32xf32, #tpu.memory_space<vmem>>, vector<1x16x32xf32>
    %48 = vector.shape_cast %47 : vector<1x16x32xf32> to vector<16x32xf32>
    %cst_51 = arith.constant dense<0.000000e+00> : vector<16x16xf32>
    %49 = tpu.matmul %4, %48, %cst_51 {dimension_numbers = #tpu.dot_dimension_numbers<[1], [1], [0], [0], [0, 0, 1, 0], [], []>} : vector<16x32xf32>, vector<16x32xf32>, vector<16x16xf32> -> vector<16x16xf32>
    %c3_52 = arith.constant 3 : index
    %c0_53 = arith.constant 0 : index
    %c0_54 = arith.constant 0 : index
    %50 = vector.load %arg12[%c3_52, %c0_53, %c0_54] : memref<4x16x16xf32, #tpu.memory_space<vmem>>, vector<1x16x16xf32>
    %51 = vector.shape_cast %50 : vector<1x16x16xf32> to vector<16x16xf32>
    %52 = vector.shape_cast %49 : vector<16x16xf32> to vector<1x16x16xf32>
    tpu.vector_store %arg12[%c3_52, %c0_53, %c0_54], %52 {strides = array<i32>} : memref<4x16x16xf32, #tpu.memory_space<vmem>>, vector<1x16x16xf32>,
    %c0_55 = arith.constant 0 : index
    %c0_56 = arith.constant 0 : index
    %c0_57 = arith.constant 0 : index
    %53 = vector.load %arg10[%c0_55, %c0_56, %c0_57] : memref<4x8x16xf32, #tpu.memory_space<vmem>>, vector<4x8x16xf32>
    %c0_58 = arith.constant 0 : index
    %c0_59 = arith.constant 0 : index
    %c0_60 = arith.constant 0 : index
    %54 = vector.load %arg11[%c0_58, %c0_59, %c0_60] : memref<4x16x16xf32, #tpu.memory_space<vmem>>, vector<4x16x16xf32>
    %c0_61 = arith.constant 0 : index
    %c0_62 = arith.constant 0 : index
    %c0_63 = arith.constant 0 : index
    %55 = vector.load %arg12[%c0_61, %c0_62, %c0_63] : memref<4x16x16xf32, #tpu.memory_space<vmem>>, vector<4x16x16xf32>
    %cst_64 = arith.constant dense<0.000000e+00> : vector<4x8x16xf32>
    %56 = tpu.matmul %53, %54, %cst_64 {dimension_numbers = #tpu.dot_dimension_numbers<[2], [2], [1], [1], [0, 0, 0, 1, 1, 1], [0], [0]>} : vector<4x8x16xf32>, vector<4x16x16xf32>, vector<4x8x16xf32> -> vector<4x8x16xf32>
    %c0_65 = arith.constant 0 : index
    %c0_66 = arith.constant 0 : index
    %c0_67 = arith.constant 0 : index
    %57 = vector.load %arg13[%c0_65, %c0_66, %c0_67] : memref<4x8x1xf32, #tpu.memory_space<vmem>>, vector<4x8x1xf32>
    %cst_68 = arith.constant dense<0xFF800000> : vector<4x8xf32>
    %58 = vector.multi_reduction <maximumf>, %56, %cst_68 [2] : vector<4x8x16xf32> to vector<4x8xf32>
    %59 = vector.shape_cast %58 : vector<4x8xf32> to vector<4x8x1xf32>
    %60 = arith.maximumf %57, %59 : vector<4x8x1xf32>
    %61 = arith.subf %57, %60 : vector<4x8x1xf32>
    %62 = math.exp %61 : vector<4x8x1xf32>
    %63 = vector.broadcast %60 : vector<4x8x1xf32> to vector<4x8x16xf32>
    %64 = arith.subf %56, %63 : vector<4x8x16xf32>
    %65 = math.exp %64 : vector<4x8x16xf32>
    %c0_69 = arith.constant 0 : index
    %c0_70 = arith.constant 0 : index
    %c0_71 = arith.constant 0 : index
    %66 = vector.load %arg14[%c0_69, %c0_70, %c0_71] : memref<4x8x1xf32, #tpu.memory_space<vmem>>, vector<4x8x1xf32>
    %67 = arith.mulf %62, %66 : vector<4x8x1xf32>
    %cst_72 = arith.constant dense<0.000000e+00> : vector<4x8xf32>
    %68 = vector.multi_reduction <add>, %65, %cst_72 [2] : vector<4x8x16xf32> to vector<4x8xf32>
    %69 = vector.shape_cast %68 : vector<4x8xf32> to vector<4x8x1xf32>
    %70 = arith.addf %67, %69 : vector<4x8x1xf32>
    %c0_73 = arith.constant 0 : index
    %c0_74 = arith.constant 0 : index
    %c0_75 = arith.constant 0 : index
    %71 = vector.load %arg14[%c0_73, %c0_74, %c0_75] : memref<4x8x1xf32, #tpu.memory_space<vmem>>, vector<4x8x1xf32>
    tpu.vector_store %arg14[%c0_73, %c0_74, %c0_75], %70 {strides = array<i32>} : memref<4x8x1xf32, #tpu.memory_space<vmem>>, vector<4x8x1xf32>,
    %cst_76 = arith.constant dense<0.000000e+00> : vector<4x8x16xf32>
    %72 = tpu.matmul %65, %55, %cst_76 {dimension_numbers = #tpu.dot_dimension_numbers<[2], [1], [1], [2], [0, 0, 0, 1, 1, 2], [0], [0]>} : vector<4x8x16xf32>, vector<4x16x16xf32>, vector<4x8x16xf32> -> vector<4x8x16xf32>
    %c0_77 = arith.constant 0 : index
    %c0_78 = arith.constant 0 : index
    %c0_79 = arith.constant 0 : index
    %73 = vector.load %arg15[%c0_77, %c0_78, %c0_79] : memref<4x8x16xf32, #tpu.memory_space<vmem>>, vector<4x8x16xf32>
    %74 = vector.broadcast %62 : vector<4x8x1xf32> to vector<4x8x16xf32>
    %75 = arith.mulf %74, %73 : vector<4x8x16xf32>
    %76 = arith.addf %75, %72 : vector<4x8x16xf32>
    %c0_80 = arith.constant 0 : index
    %c0_81 = arith.constant 0 : index
    %c0_82 = arith.constant 0 : index
    %77 = vector.load %arg15[%c0_80, %c0_81, %c0_82] : memref<4x8x16xf32, #tpu.memory_space<vmem>>, vector<4x8x16xf32>
    tpu.vector_store %arg15[%c0_80, %c0_81, %c0_82], %76 {strides = array<i32>} : memref<4x8x16xf32, #tpu.memory_space<vmem>>, vector<4x8x16xf32>,
    %c0_83 = arith.constant 0 : index
    %c0_84 = arith.constant 0 : index
    %c0_85 = arith.constant 0 : index
    %78 = vector.load %arg13[%c0_83, %c0_84, %c0_85] : memref<4x8x1xf32, #tpu.memory_space<vmem>>, vector<4x8x1xf32>
    tpu.vector_store %arg13[%c0_83, %c0_84, %c0_85], %60 {strides = array<i32>} : memref<4x8x1xf32, #tpu.memory_space<vmem>>, vector<4x8x1xf32>,
    %c0_i32_86 = arith.constant 0 : i32
    %79 = arith.cmpi eq, %arg1, %c0_i32_86 : i32
    %80 = arith.extui %79 : i1 to i32
    %c0_i32_87 = arith.constant 0 : i32
    %81 = arith.cmpi ne, %80, %c0_i32_87 : i32
    scf.if %81 {
      %c0_88 = arith.constant 0 : index
      %c0_89 = arith.constant 0 : index
      %c0_90 = arith.constant 0 : index
      %82 = vector.load %arg14[%c0_88, %c0_89, %c0_90] : memref<4x8x1xf32, #tpu.memory_space<vmem>>, vector<4x8x1xf32>
      %83 = tpu.reciprocal %82 {approx = true} : vector<4x8x1xf32> -> vector<4x8x1xf32>
      %c0_91 = arith.constant 0 : index
      %c0_92 = arith.constant 0 : index
      %c0_93 = arith.constant 0 : index
      %84 = vector.load %arg15[%c0_91, %c0_92, %c0_93] : memref<4x8x16xf32, #tpu.memory_space<vmem>>, vector<4x8x16xf32>
      %85 = vector.broadcast %83 : vector<4x8x1xf32> to vector<4x8x16xf32>
      %86 = arith.mulf %84, %85 : vector<4x8x16xf32>
      %c0_94 = arith.constant 0 : index
      %c0_95 = arith.constant 0 : index
      %c0_96 = arith.constant 0 : index
      %87 = vector.load %arg7[%c0_94, %c0_95, %c0_96] : memref<4x32x16xf32, #tpu.memory_space<vmem>>, vector<4x32x16xf32>
      %cst_97 = arith.constant dense<0.000000e+00> : vector<4x8x32xf32>
      %88 = tpu.matmul %86, %87, %cst_97 {dimension_numbers = #tpu.dot_dimension_numbers<[2], [2], [1], [1], [0, 0, 0, 1, 1, 1], [0], [0]>} : vector<4x8x16xf32>, vector<4x32x16xf32>, vector<4x8x32xf32> -> vector<4x8x32xf32>
      %cst_98 = arith.constant dense<0.000000e+00> : vector<8x32xf32>
      %89 = vector.multi_reduction <add>, %88, %cst_98 [0] : vector<4x8x32xf32> to vector<8x32xf32>
      %c0_99 = arith.constant 0 : index
      %c0_100 = arith.constant 0 : index
      %90 = vector.load %arg8[%c0_99, %c0_100] : memref<1x32xf32, #tpu.memory_space<vmem>>, vector<1x32xf32>
      %91 = vector.broadcast %90 : vector<1x32xf32> to vector<8x32xf32>
      %92 = arith.addf %89, %91 : vector<8x32xf32>
      %c0_101 = arith.constant 0 : index
      %c0_102 = arith.constant 0 : index
      %c0_103 = arith.constant 0 : index
      %93 = vector.load %arg9[%c0_101, %c0_102, %c0_103] : memref<1x8x32xf32, #tpu.memory_space<vmem>>, vector<1x8x32xf32>
      %94 = vector.shape_cast %93 : vector<1x8x32xf32> to vector<8x32xf32>
      %95 = vector.shape_cast %92 : vector<8x32xf32> to vector<1x8x32xf32>
      tpu.vector_store %arg9[%c0_101, %c0_102, %c0_103], %95 {strides = array<i32>} : memref<1x8x32xf32, #tpu.memory_space<vmem>>, vector<1x8x32xf32>,
    } else {
    }
    return
  }
  func.func @transform_0(%arg0: i32, %arg1: i32) -> (i32, i32, i32) {
    %c0_i32 = arith.constant 0 : i32
    %c0_i32_0 = arith.constant 0 : i32
    %c0_i32_1 = arith.constant 0 : i32
    return %arg0, %c0_i32, %c0_i32_0 : i32, i32, i32
  }
  func.func @transform_1(%arg0: i32, %arg1: i32) -> (i32, i32, i32) {
    %c0_i32 = arith.constant 0 : i32
    %c0_i32_0 = arith.constant 0 : i32
    return %arg0, %arg1, %c0_i32 : i32, i32, i32
  }
  func.func @transform_2(%arg0: i32, %arg1: i32) -> (i32, i32, i32) {
    %c0_i32 = arith.constant 0 : i32
    %c0_i32_0 = arith.constant 0 : i32
    %c0_i32_1 = arith.constant 0 : i32
    %c0_i32_2 = arith.constant 0 : i32
    return %c0_i32, %c0_i32_0, %c0_i32_1 : i32, i32, i32
  }
  func.func @transform_3(%arg0: i32, %arg1: i32) -> (i32, i32, i32) {
    %c0_i32 = arith.constant 0 : i32
    %c0_i32_0 = arith.constant 0 : i32
    %c0_i32_1 = arith.constant 0 : i32
    %c0_i32_2 = arith.constant 0 : i32
    return %c0_i32, %c0_i32_0, %c0_i32_1 : i32, i32, i32
  }
  func.func @transform_4(%arg0: i32, %arg1: i32) -> (i32, i32, i32) {
    %c0_i32 = arith.constant 0 : i32
    %c0_i32_0 = arith.constant 0 : i32
    %c0_i32_1 = arith.constant 0 : i32
    %c0_i32_2 = arith.constant 0 : i32
    return %c0_i32, %c0_i32_0, %c0_i32_1 : i32, i32, i32
  }
  func.func @transform_5(%arg0: i32, %arg1: i32) -> (i32, i32, i32) {
    %c0_i32 = arith.constant 0 : i32
    %c0_i32_0 = arith.constant 0 : i32
    %c0_i32_1 = arith.constant 0 : i32
    %c0_i32_2 = arith.constant 0 : i32
    return %c0_i32, %c0_i32_0, %c0_i32_1 : i32, i32, i32
  }
  func.func @transform_6(%arg0: i32, %arg1: i32) -> (i32, i32) {
    %c0_i32 = arith.constant 0 : i32
    %c0_i32_0 = arith.constant 0 : i32
    %c0_i32_1 = arith.constant 0 : i32
    return %c0_i32, %c0_i32_0 : i32, i32
  }
  func.func @transform_7(%arg0: i32, %arg1: i32) -> (i32, i32, i32) {
    %c0_i32 = arith.constant 0 : i32
    %c0_i32_0 = arith.constant 0 : i32
    %c0_i32_1 = arith.constant 0 : i32
    return %arg0, %c0_i32, %c0_i32_0 : i32, i32, i32
  }
}

</mosaic_0001>

<llo_original>
// kernel: tpu_custom_call.1
$region0: #{tpu_custom_call.1}
  #allocation0 [shape = 'u32[]', space=smem, size = 0x4, offset = 0x4, fixed_abs, tag = 'smem constant byte address 0x4 - core index']
  #allocation1 [shape = 'u32[144,128]{1,0:T(1,128)}', space=vmem, size = 0x12000, scoped, tag = 'internal scratch']
  #allocation2 [shape = 'f32[4,8,16]{2,1,0:T(8,128)}', space=vmem, size = 0x4000, scoped, tag = 'scratch operand']
  #allocation3 [shape = 'f32[4,16,16]{2,1,0:T(8,128)}', space=vmem, size = 0x8000, scoped, tag = 'scratch operand']
  #allocation4 [shape = 'f32[4,16,16]{2,1,0:T(8,128)}', space=vmem, size = 0x8000, scoped, tag = 'scratch operand']
  #allocation5 [shape = 'f32[4,8,1]{2,1,0:T(8,128)}', space=vmem, size = 0x4000, scoped, tag = 'scratch operand']
  #allocation6 [shape = 'f32[4,8,1]{2,1,0:T(8,128)}', space=vmem, size = 0x4000, scoped, tag = 'scratch operand']
  #allocation7 [shape = 'f32[4,8,16]{2,1,0:T(8,128)}', space=vmem, size = 0x4000, scoped, tag = 'scratch operand']
  %s0 = inlined_call_operand.hbm [shape: f32[2,8,32], index: 0, kind: input, shape index: {}]
  %s1 = inlined_call_operand.hbm [shape: f32[2,16,32], index: 1, kind: input, shape index: {}]
  %s2 = inlined_call_operand.vmem [shape: f32[4,16,32], index: 2, kind: input, shape index: {}]
  %s3 = inlined_call_operand.vmem [shape: f32[4,16,32], index: 3, kind: input, shape index: {}]
  %s4 = inlined_call_operand.vmem [shape: f32[4,16,32], index: 4, kind: input, shape index: {}]
  %s5 = inlined_call_operand.vmem [shape: f32[4,32,16], index: 5, kind: input, shape index: {}]
  %s6 = inlined_call_operand.vmem [shape: f32[1,32], index: 6, kind: input, shape index: {}]
  %s7 = inlined_call_operand.hbm [shape: f32[2,8,32], index: 7, kind: output, shape index: {}]
  %s8 = sld [smem:[#allocation0]]
  $region77: #{tpu_custom_call.1} parent=0
    _
  %s10 = ssub.s32 1, %s8
  %s11 = scalar_select 0, %s10, %s8
  $region1: #{tpu_custom_call.1} parent=0
    #allocation8 [shape = 'u8[8192]{0}', space=vmem, size = 0x2000, scoped, tag = 'input window, operand 0']
    #allocation9 [shape = 's32[2]{0}', space=sflag, size = 0x8, scoped, tag = 'scoped memory for tpu_custom_call.1']
    #allocation10 [shape = 's32[2]{0}', space=sflag, size = 0x8, scoped, tag = 'scoped memory for tpu_custom_call.1']
    #allocation11 [shape = 'u8[16384]{0}', space=vmem, size = 0x4000, scoped, tag = 'input window, operand 1']
    #allocation12 [shape = 's32[2]{0}', space=sflag, size = 0x8, scoped, tag = 'scoped memory for tpu_custom_call.1']
    #allocation13 [shape = 'u8[8192]{0}', space=vmem, size = 0x2000, scoped, tag = 'output window, operand 0']
    %12 = vsyncpa [#allocation9], 0
    %s13 = scalar_lea.sflag [#allocation9], 1
    %14 = vsyncpa %s13, 0
    %15 = vsyncpa [#allocation12], 0
    %s16 = scalar_lea.sflag [#allocation12], 1
    %17 = vsyncpa %s16, 0
    %18 = vsyncpa [#allocation10], 0
    %s19 = scalar_lea.sflag [#allocation10], 1
    %20 = vsyncpa %s19, 0
    loop: start=0, step=1, limit=4
    $region2: #{tpu_custom_call.1} parent=1 // loop_pre_header
      _
    $region3: #{tpu_custom_call.1} parent=1 // loop_header
      %s22 = sphi 0, %s26
      %p23 = scmp.ge.s32.totalorder %s22, 4
      %s29 = sphi 0, %s41
      %s30 = sphi 0, %s37
      %s31 = sphi 0, %s29
      %s32 = sphi 0, %s30
      %s33 = sphi 0, %s31
      %s34 = sphi 0, %s32
      %s44 = sphi 0, %s46
      %s47 = sphi 0, %s44
      %s48 = sphi 0, %s47
      %s64 = sphi 0, %s48
      %s72 = sphi 0, %s74
      %s75 = sphi 0, %s72
      %s76 = sphi 0, %s75
      %s92 = sphi 0, %s76
      %s96 = sphi 0, %s96
      %s98 = sphi 0, %s96
      %s99 = sphi 0, %s98
      %s113 = sphi 0, %s99
      %s117 = sphi 0, %s117
      %s119 = sphi 0, %s117
      %s120 = sphi 0, %s119
      %s134 = sphi 0, %s120
      %s138 = sphi 0, %s138
      %s140 = sphi 0, %s138
      %s141 = sphi 0, %s140
      %s155 = sphi 0, %s141
      %s159 = sphi 0, %s159
      %s161 = sphi 0, %s159
      %s162 = sphi 0, %s161
      %s176 = sphi 0, %s162
      %s180 = sphi 0, %s180
      %s182 = sphi 0, %s180
      %s183 = sphi 0, %s182
      %s197 = sphi 0, %s183
      %s203 = sphi 0, %s205
      %s206 = sphi 0, %s203
      %s207 = sphi 0, %s206
      %s223 = sphi 0, %s207
    $region4: #{tpu_custom_call.1} parent=1 // loop_header_branch
      %25 = sbr.rel (%p23) target = $region8
    $region5: #{tpu_custom_call.1} parent=1 // loop_body
      %s27 = ssub.s32 %s22, 1
      %s28 = ssub.s32 %s22, 2
      %s35 = sadd.s32 1, %s30
      %p36 = scmp.ge.s32.totalorder %s35, 1
      %s37 = scalar_select %p36, 0, %s35
      %s38 = sadd.s32 1, %s29
      %s39 = scalar_select %p36, %s38, %s29
      %p40 = scmp.ge.s32.totalorder %s39, 2
      %s41 = scalar_select %p40, 0, %s39
      %s42 = ssub.s32 %s29, %s41
      %p43 = scmp.eq.s32.totalorder %s42, 0
      %s45 = sadd.s32 %s44, 1
      %s46 = scalar_select %p43, %s44, %s45
      %p49 = pneg %p43
      %p50 = scmp.eq.s32.totalorder %s22, 1
      %p51 = por %p49, %p50
      %p52 = scmp.ne.s32.totalorder %s44, %s47
      %p53 = scmp.eq.s32.totalorder %s22, 0
      %p54 = por %p52, %p53
      %p55 = scmp.ne.s32.totalorder %s44, %s47
      %p56 = scmp.eq.s32.totalorder %s27, 1
      %p57 = por %p55, %p56
      %p58 = scmp.ne.s32.totalorder %s47, %s48
      %p59 = scmp.eq.s32.totalorder %s27, 0
      %p60 = por %p58, %p59
      %p61 = scmp.ne.s32.totalorder %s47, %s48
      %p62 = scmp.eq.s32.totalorder %s28, 1
      %p63 = por %p61, %p62
      %p65 = scmp.ne.s32.totalorder %s48, %s64
      %p66 = scmp.eq.s32.totalorder %s28, 0
      %p67 = por %p65, %p66
      %s68 = ssub.s32 %s29, %s41
      %s69 = ssub.s32 %s30, %s37
      %s70 = sor.u32 %s68, %s69
      %p71 = scmp.eq.s32.totalorder %s70, 0
      %s73 = sadd.s32 %s72, 1
      %s74 = scalar_select %p71, %s72, %s73
      %p77 = pneg %p71
      %p78 = scmp.eq.s32.totalorder %s22, 1
      %p79 = por %p77, %p78
      %p80 = scmp.ne.s32.totalorder %s72, %s75
      %p81 = scmp.eq.s32.totalorder %s22, 0
      %p82 = por %p80, %p81
      %p83 = scmp.ne.s32.totalorder %s72, %s75
      %p84 = scmp.eq.s32.totalorder %s27, 1
      %p85 = por %p83, %p84
      %p86 = scmp.ne.s32.totalorder %s75, %s76
      %p87 = scmp.eq.s32.totalorder %s27, 0
      %p88 = por %p86, %p87
      %p89 = scmp.ne.s32.totalorder %s75, %s76
      %p90 = scmp.eq.s32.totalorder %s28, 1
      %p91 = por %p89, %p90
      %p93 = scmp.ne.s32.totalorder %s76, %s92
      %p94 = scmp.eq.s32.totalorder %s28, 0
      %p95 = por %p93, %p94
      %s97 = sadd.s32 %s96, 1
      %p100 = scmp.eq.s32.totalorder %s22, 1
      %p101 = scmp.ne.s32.totalorder %s96, %s98
      %p102 = scmp.eq.s32.totalorder %s22, 0
      %p103 = por %p101, %p102
      %p104 = scmp.ne.s32.totalorder %s96, %s98
      %p105 = scmp.eq.s32.totalorder %s27, 1
      %p106 = por %p104, %p105
      %p107 = scmp.ne.s32.totalorder %s98, %s99
      %p108 = scmp.eq.s32.totalorder %s27, 0
      %p109 = por %p107, %p108
      %p110 = scmp.ne.s32.totalorder %s98, %s99
      %p111 = scmp.eq.s32.totalorder %s28, 1
      %p112 = por %p110, %p111
      %p114 = scmp.ne.s32.totalorder %s99, %s113
      %p115 = scmp.eq.s32.totalorder %s28, 0
      %p116 = por %p114, %p115
      %s118 = sadd.s32 %s117, 1
      %p121 = scmp.eq.s32.totalorder %s22, 1
      %p122 = scmp.ne.s32.totalorder %s117, %s119
      %p123 = scmp.eq.s32.totalorder %s22, 0
      %p124 = por %p122, %p123
      %p125 = scmp.ne.s32.totalorder %s117, %s119
      %p126 = scmp.eq.s32.totalorder %s27, 1
      %p127 = por %p125, %p126
      %p128 = scmp.ne.s32.totalorder %s119, %s120
      %p129 = scmp.eq.s32.totalorder %s27, 0
      %p130 = por %p128, %p129
      %p131 = scmp.ne.s32.totalorder %s119, %s120
      %p132 = scmp.eq.s32.totalorder %s28, 1
      %p133 = por %p131, %p132
      %p135 = scmp.ne.s32.totalorder %s120, %s134
      %p136 = scmp.eq.s32.totalorder %s28, 0
      %p137 = por %p135, %p136
      %s139 = sadd.s32 %s138, 1
      %p142 = scmp.eq.s32.totalorder %s22, 1
      %p143 = scmp.ne.s32.totalorder %s138, %s140
      %p144 = scmp.eq.s32.totalorder %s22, 0
      %p145 = por %p143, %p144
      %p146 = scmp.ne.s32.totalorder %s138, %s140
      %p147 = scmp.eq.s32.totalorder %s27, 1
      %p148 = por %p146, %p147
      %p149 = scmp.ne.s32.totalorder %s140, %s141
      %p150 = scmp.eq.s32.totalorder %s27, 0
      %p151 = por %p149, %p150
      %p152 = scmp.ne.s32.totalorder %s140, %s141
      %p153 = scmp.eq.s32.totalorder %s28, 1
      %p154 = por %p152, %p153
      %p156 = scmp.ne.s32.totalorder %s141, %s155
      %p157 = scmp.eq.s32.totalorder %s28, 0
      %p158 = por %p156, %p157
      %s160 = sadd.s32 %s159, 1
      %p163 = scmp.eq.s32.totalorder %s22, 1
      %p164 = scmp.ne.s32.totalorder %s159, %s161
      %p165 = scmp.eq.s32.totalorder %s22, 0
      %p166 = por %p164, %p165
      %p167 = scmp.ne.s32.totalorder %s159, %s161
      %p168 = scmp.eq.s32.totalorder %s27, 1
      %p169 = por %p167, %p168
      %p170 = scmp.ne.s32.totalorder %s161, %s162
      %p171 = scmp.eq.s32.totalorder %s27, 0
      %p172 = por %p170, %p171
      %p173 = scmp.ne.s32.totalorder %s161, %s162
      %p174 = scmp.eq.s32.totalorder %s28, 1
      %p175 = por %p173, %p174
      %p177 = scmp.ne.s32.totalorder %s162, %s176
      %p178 = scmp.eq.s32.totalorder %s28, 0
      %p179 = por %p177, %p178
      %s181 = sadd.s32 %s180, 1
      %p184 = scmp.eq.s32.totalorder %s22, 1
      %p185 = scmp.ne.s32.totalorder %s180, %s182
      %p186 = scmp.eq.s32.totalorder %s22, 0
      %p187 = por %p185, %p186
      %p188 = scmp.ne.s32.totalorder %s180, %s182
      %p189 = scmp.eq.s32.totalorder %s27, 1
      %p190 = por %p188, %p189
      %p191 = scmp.ne.s32.totalorder %s182, %s183
      %p192 = scmp.eq.s32.totalorder %s27, 0
      %p193 = por %p191, %p192
      %p194 = scmp.ne.s32.totalorder %s182, %s183
      %p195 = scmp.eq.s32.totalorder %s28, 1
      %p196 = por %p194, %p195
      %p198 = scmp.ne.s32.totalorder %s183, %s197
      %p199 = scmp.eq.s32.totalorder %s28, 0
      %p200 = por %p198, %p199
      %s201 = ssub.s32 %s29, %s41
      %p202 = scmp.eq.s32.totalorder %s201, 0
      %s204 = sadd.s32 %s203, 1
      %s205 = scalar_select %p202, %s203, %s204
      %p208 = pneg %p202
      %p209 = scmp.eq.s32.totalorder %s22, 1
      %p210 = por %p208, %p209
      %p211 = scmp.ne.s32.totalorder %s203, %s206
      %p212 = scmp.eq.s32.totalorder %s22, 0
      %p213 = por %p211, %p212
      %p214 = scmp.ne.s32.totalorder %s203, %s206
      %p215 = scmp.eq.s32.totalorder %s27, 1
      %p216 = por %p214, %p215
      %p217 = scmp.ne.s32.totalorder %s206, %s207
      %p218 = scmp.eq.s32.totalorder %s27, 0
      %p219 = por %p217, %p218
      %p220 = scmp.ne.s32.totalorder %s206, %s207
      %p221 = scmp.eq.s32.totalorder %s28, 1
      %p222 = por %p220, %p221
      %p224 = scmp.ne.s32.totalorder %s207, %s223
      %p225 = scmp.eq.s32.totalorder %s28, 0
      %p226 = por %p224, %p225
      %p227 = scmp.le.s32.totalorder 1, %s22
      %p228 = scmp.lt.s32.totalorder %s22, 3
      %p229 = pnand %p227, %p228
      %p230 = pneg %p229
      // Predicated region
      $region9: #{tpu_custom_call.1} parent=5 // pred_check
        _
      $region10: #{tpu_custom_call.1} parent=5 // pred_check_branch
        %232 = sbr.rel (%p229) target = $region12
      $region11: #{tpu_custom_call.1} parent=5 // pred_region
        %s233 = ssub.s32 %s22, 1
        // Predicated region
        $region13: #{tpu_custom_call.1} parent=11 // pred_check
          %p234 = pneg %p109
        $region14: #{tpu_custom_call.1} parent=11 // pred_check_branch
          %236 = sbr.rel (%p234) target = $region16
        $region15: #{tpu_custom_call.1} parent=11 // pred_region
          _
        $region16: #{tpu_custom_call.1} parent=11 // pred_fallthru
          _
        // Predicated region
        $region17: #{tpu_custom_call.1} parent=11 // pred_check
          %p237 = pneg %p130
        $region18: #{tpu_custom_call.1} parent=11 // pred_check_branch
          %239 = sbr.rel (%p237) target = $region20
        $region19: #{tpu_custom_call.1} parent=11 // pred_region
          _
        $region20: #{tpu_custom_call.1} parent=11 // pred_fallthru
          _
        // Predicated region
        $region21: #{tpu_custom_call.1} parent=11 // pred_check
          %p240 = pneg %p151
        $region22: #{tpu_custom_call.1} parent=11 // pred_check_branch
          %242 = sbr.rel (%p240) target = $region24
        $region23: #{tpu_custom_call.1} parent=11 // pred_region
          _
        $region24: #{tpu_custom_call.1} parent=11 // pred_fallthru
          _
        // Predicated region
        $region25: #{tpu_custom_call.1} parent=11 // pred_check
          %p243 = pneg %p172
        $region26: #{tpu_custom_call.1} parent=11 // pred_check_branch
          %245 = sbr.rel (%p243) target = $region28
        $region27: #{tpu_custom_call.1} parent=11 // pred_region
          _
        $region28: #{tpu_custom_call.1} parent=11 // pred_fallthru
          _
        // Predicated region
        $region29: #{tpu_custom_call.1} parent=11 // pred_check
          %p246 = pneg %p193
        $region30: #{tpu_custom_call.1} parent=11 // pred_check_branch
          %248 = sbr.rel (%p246) target = $region32
        $region31: #{tpu_custom_call.1} parent=11 // pred_region
          _
        $region32: #{tpu_custom_call.1} parent=11 // pred_fallthru
          _
      $region12: #{tpu_custom_call.1} parent=5 // pred_fallthru
        _
      %p249 = scmp.lt.s32.totalorder %s22, 2
      // Predicated region
      $region33: #{tpu_custom_call.1} parent=5 // pred_check
        %p250 = pneg %p249
      $region34: #{tpu_custom_call.1} parent=5 // pred_check_branch
        %252 = sbr.rel (%p250) target = $region36
      $region35: #{tpu_custom_call.1} parent=5 // pred_region
        // Predicated region
        $region37: #{tpu_custom_call.1} parent=35 // pred_check
          %p253 = pneg %p54
        $region38: #{tpu_custom_call.1} parent=35 // pred_check_branch
          %255 = sbr.rel (%p253) target = $region40
        $region39: #{tpu_custom_call.1} parent=35 // pred_region
          %s256 = sand.u32 %s44, 1
          %s257 = scalar_lea.sflag [#allocation9], %s256
          %s258 = sand.u32 %s44, 1
          %s259 = smul.addr %s258, 8
          %s260 = scalar_lea.vmem [#allocation8], %s259
          %s262 = ssub.s32 128, 128
          %263 = vsyncadd %s257, %s262
          %s264 = smul.addr %s29, 128
          %s265 = scalar_lea.hbm %s0, %s264
          %s267 = sshll.u32 %s260, 4
          %s268 = int_to_ptr.vmem [resolvable:$true] %s267
          %270 = dma.hbm_to_vmem [thread:$0]  %s265, 128, %s268, %s257
        $region40: #{tpu_custom_call.1} parent=35 // pred_fallthru
          _
        // Predicated region
        $region41: #{tpu_custom_call.1} parent=35 // pred_check
          %p271 = pneg %p82
        $region42: #{tpu_custom_call.1} parent=35 // pred_check_branch
          %273 = sbr.rel (%p271) target = $region44
        $region43: #{tpu_custom_call.1} parent=35 // pred_region
          %s274 = sand.u32 %s72, 1
          %s275 = scalar_lea.sflag [#allocation12], %s274
          %s276 = sand.u32 %s72, 1
          %s277 = smul.addr %s276, 16
          %s278 = scalar_lea.vmem [#allocation11], %s277
          %s279 = smul.u32 2, %s30
          %s281 = ssub.s32 256, 256
          %282 = vsyncadd %s275, %s281
          %s283 = smul.addr %s29, 2
          %s284 = sadd.s32 %s279, %s283
          %s285 = smul.addr %s284, 128
          %s286 = scalar_lea.hbm %s1, %s285
          %s287 = sshll.u32 %s278, 4
          %s288 = int_to_ptr.vmem [resolvable:$true] %s287
          %293 = dma.hbm_to_vmem [thread:$0]  %s286, 256, %s288, %s275, 128, 128, 8
        $region44: #{tpu_custom_call.1} parent=35 // pred_fallthru
          _
      $region36: #{tpu_custom_call.1} parent=5 // pred_fallthru
        _
      %p294 = scmp.le.s32.totalorder 1, %s22
      %p295 = scmp.lt.s32.totalorder %s22, 3
      %p296 = pnand %p294, %p295
      %p297 = pneg %p296
      // Predicated region
      $region45: #{tpu_custom_call.1} parent=5 // pred_check
        _
      $region46: #{tpu_custom_call.1} parent=5 // pred_check_branch
        %299 = sbr.rel (%p296) target = $region48
      $region47: #{tpu_custom_call.1} parent=5 // pred_region
        %s300 = ssub.s32 %s22, 1
        %s301 = sand.u32 %s47, 1
        %s302 = scalar_lea.sflag [#allocation9], %s301
        %s303 = sand.u32 %s47, 1
        %s304 = smul.addr %s303, 8
        %s305 = scalar_lea.vmem [#allocation8], %s304
        // Predicated region
        $region49: #{tpu_custom_call.1} parent=47 // pred_check
          %p306 = pneg %p60
        $region50: #{tpu_custom_call.1} parent=47 // pred_check_branch
          %308 = sbr.rel (%p306) target = $region52
        $region51: #{tpu_custom_call.1} parent=47 // pred_region
          %309 = dma.done %s302, 128
        $region52: #{tpu_custom_call.1} parent=47 // pred_fallthru
          _
        %s310 = sand.u32 %s75, 1
        %s311 = scalar_lea.sflag [#allocation12], %s310
        %s312 = sand.u32 %s75, 1
        %s313 = smul.addr %s312, 16
        %s314 = scalar_lea.vmem [#allocation11], %s313
        // Predicated region
        $region53: #{tpu_custom_call.1} parent=47 // pred_check
          %p315 = pneg %p88
        $region54: #{tpu_custom_call.1} parent=47 // pred_check_branch
          %317 = sbr.rel (%p315) target = $region56
        $region55: #{tpu_custom_call.1} parent=47 // pred_region
          %318 = dma.done %s311, 256
        $region56: #{tpu_custom_call.1} parent=47 // pred_fallthru
          _
        %s319 = sand.u32 %s47, 1
        %s320 = scalar_lea.sflag [#allocation9], %s319
        %s321 = sand.u32 %s47, 1
        %s322 = smul.addr %s321, 8
        %s323 = scalar_lea.vmem [#allocation8], %s322
        %p324 = pneg %p60
        %p325 = pneg %p57
        %s326 = sand.u32 %s75, 1
        %s327 = scalar_lea.sflag [#allocation12], %s326
        %s328 = sand.u32 %s75, 1
        %s329 = smul.addr %s328, 16
        %s330 = scalar_lea.vmem [#allocation11], %s329
        %p331 = pneg %p88
        %p332 = pneg %p85
        %p333 = pneg %p109
        %p334 = pneg %p106
        %p335 = pneg %p130
        %p336 = pneg %p127
        %p337 = pneg %p151
        %p338 = pneg %p148
        %p339 = pneg %p172
        %p340 = pneg %p169
        %p341 = pneg %p193
        %p342 = pneg %p190
        %p343 = pneg %p219
        %p344 = pneg %p216
        %s345 = sand.u32 %s206, 1
        %s346 = scalar_lea.sflag [#allocation10], %s345
        %s347 = sand.u32 %s206, 1
        %s348 = smul.addr %s347, 8
        %s349 = scalar_lea.vmem [#allocation13], %s348
        %s350 = smul.u32 2, %s32
        %p351 = scmp.eq.s32.totalorder %s32, 0
        // Predicated region
        $region57: #{tpu_custom_call.1} parent=47 // pred_check
          %p352 = pneg %p351
        $region58: #{tpu_custom_call.1} parent=47 // pred_check_branch
          %354 = sbr.rel (%p352) target = $region60
        $region59: #{tpu_custom_call.1} parent=47 // pred_region
          %v355 = vld [vmem:[%s305] sm:$0xff]
          %v356 = vld [vmem:[%s2] sm:$0xff]
          %v357 = vld [vmem:[%s2 + $0x8] sm:$0xff]
          %vm358 = vcmask 261120
          %v360 = vsel %vm358, %v355, 0
          %v363 = vsel %vm358, %v356, 0
          %v366 = vsel %vm358, %v357, 0
          %368 = vmatprep.subr.mxu0 0.0
          %369 = vmatpush1.xpose.msra.mxu0 0.0
          %370 = vmatprep.subr.mxu0 0.0
          %371 = vmatpush1.xpose.msra.mxu0 0.0
          %372 = vmatprep.subr.mxu0 0.0
          %373 = vmatpush1.xpose.msra.mxu0 0.0
          %374 = vmatprep.subr.mxu0 0.0
          %375 = vmatpush1.xpose.msra.mxu0 0.0
          %376 = vmatprep.subr.mxu0 0.0
          %377 = vmatpush1.xpose.msra.mxu0 0.0
          %378 = vmatprep.subr.mxu0 0.0
          %379 = vmatpush1.xpose.msra.mxu0 0.0
          %380 = vmatprep.subr.mxu0 0.0
          %381 = vmatpush1.xpose.msra.mxu0 0.0
          %382 = vmatprep.subr.mxu0 0.0
          %383 = vmatpush1.xpose.msra.mxu0 0.0
          %384 = vmatprep.subr.mxu0 0.0
          %385 = vmatpush1.xpose.msra.mxu0 0.0
          %386 = vmatprep.subr.mxu0 0.0
          %387 = vmatpush1.xpose.msra.mxu0 0.0
          %388 = vmatprep.subr.mxu0 0.0
          %389 = vmatpush1.xpose.msra.mxu0 0.0
          %390 = vmatprep.subr.mxu0 0.0
          %391 = vmatpush1.xpose.msra.mxu0 0.0
          %392 = vmatprep.subr.mxu0 0.0
          %393 = vmatpush1.xpose.msra.mxu0 0.0
          %394 = vmatprep.subr.mxu0 0.0
          %395 = vmatpush1.xpose.msra.mxu0 0.0
          %396 = vmatprep.subr.mxu0 0.0
          %397 = vmatpush1.xpose.msra.mxu0 %v366
          %398 = vmatprep.subr.mxu0 0.0
          %399 = vmatpush1.xpose.msra.mxu0 %v363
          %400 = vmatprep.subr.mxu0 0.0
          %401 = vmatpush2.xpose.msra.mxu0 0.0
          %402 = vmatprep.subr.mxu0 0.0
          %403 = vmatpush2.xpose.msra.mxu0 0.0
          %404 = vmatprep.subr.mxu0 0.0
          %405 = vmatpush2.xpose.msra.mxu0 0.0
          %406 = vmatprep.subr.mxu0 0.0
          %407 = vmatpush2.xpose.msra.mxu0 0.0
          %408 = vmatprep.subr.mxu0 0.0
          %409 = vmatpush2.xpose.msra.mxu0 0.0
          %410 = vmatprep.subr.mxu0 0.0
          %411 = vmatpush2.xpose.msra.mxu0 0.0
          %412 = vmatprep.subr.mxu0 0.0
          %413 = vmatpush2.xpose.msra.mxu0 0.0
          %414 = vmatprep.subr.mxu0 0.0
          %415 = vmatpush2.xpose.msra.mxu0 0.0
          %416 = vmatprep.subr.mxu0 0.0
          %417 = vmatpush2.xpose.msra.mxu0 0.0
          %418 = vmatprep.subr.mxu0 0.0
          %419 = vmatpush2.xpose.msra.mxu0 0.0
          %420 = vmatprep.subr.mxu0 0.0
          %421 = vmatpush2.xpose.msra.mxu0 0.0
          %422 = vmatprep.subr.mxu0 0.0
          %423 = vmatpush2.xpose.msra.mxu0 0.0
          %424 = vmatprep.subr.mxu0 0.0
          %425 = vmatpush2.xpose.msra.mxu0 0.0
          %426 = vmatprep.subr.mxu0 0.0
          %427 = vmatpush2.xpose.msra.mxu0 0.0
          %428 = vmatprep.subr.mxu0 0.0
          %429 = vmatpush2.xpose.msra.mxu0 0.0
          %430 = vmatprep.subr.mxu0 0.0
          %431 = vmatpush2.xpose.msra.mxu0 0.0
          %432 = vmatprep.mubr.f32.mxu0 0.0
          %433 = vmatmul.mubr.f32.gmra.mxu0 %v360
          %v434 = vpop.f32.mrf.mxu0
          %v435 = vadd.f32 0.0, %v434
          %v436 = vpop.f32.mrf.mxu0
          %437 = vdwg.mxu0
          %vm438 = vcmask 130048
          %439 = vst.msk [vmem:[#allocation2] sm:$0xff] %vm438, %v435
          %s440 = scalar_lea.vmem %s2, 16
          %v441 = vld [vmem:[%s440] sm:$0xff]
          %v442 = vld [vmem:[%s440 + $0x8] sm:$0xff]
          %v444 = vsel %vm358, %v441, 0
          %v447 = vsel %vm358, %v442, 0
          %449 = vmatprep.subr.mxu0 0.0
          %450 = vmatpush1.xpose.msra.mxu0 0.0
          %451 = vmatprep.subr.mxu0 0.0
          %452 = vmatpush1.xpose.msra.mxu0 0.0
          %453 = vmatprep.subr.mxu0 0.0
          %454 = vmatpush1.xpose.msra.mxu0 0.0
          %455 = vmatprep.subr.mxu0 0.0
          %456 = vmatpush1.xpose.msra.mxu0 0.0
          %457 = vmatprep.subr.mxu0 0.0
          %458 = vmatpush1.xpose.msra.mxu0 0.0
          %459 = vmatprep.subr.mxu0 0.0
          %460 = vmatpush1.xpose.msra.mxu0 0.0
          %461 = vmatprep.subr.mxu0 0.0
          %462 = vmatpush1.xpose.msra.mxu0 0.0
          %463 = vmatprep.subr.mxu0 0.0
          %464 = vmatpush1.xpose.msra.mxu0 0.0
          %465 = vmatprep.subr.mxu0 0.0
          %466 = vmatpush1.xpose.msra.mxu0 0.0
          %467 = vmatprep.subr.mxu0 0.0
          %468 = vmatpush1.xpose.msra.mxu0 0.0
          %469 = vmatprep.subr.mxu0 0.0
          %470 = vmatpush1.xpose.msra.mxu0 0.0
          %471 = vmatprep.subr.mxu0 0.0
          %472 = vmatpush1.xpose.msra.mxu0 0.0
          %473 = vmatprep.subr.mxu0 0.0
          %474 = vmatpush1.xpose.msra.mxu0 0.0
          %475 = vmatprep.subr.mxu0 0.0
          %476 = vmatpush1.xpose.msra.mxu0 0.0
          %477 = vmatprep.subr.mxu0 0.0
          %478 = vmatpush1.xpose.msra.mxu0 %v447
          %479 = vmatprep.subr.mxu0 0.0
          %480 = vmatpush1.xpose.msra.mxu0 %v444
          %481 = vmatprep.subr.mxu0 0.0
          %482 = vmatpush2.xpose.msra.mxu0 0.0
          %483 = vmatprep.subr.mxu0 0.0
          %484 = vmatpush2.xpose.msra.mxu0 0.0
          %485 = vmatprep.subr.mxu0 0.0
          %486 = vmatpush2.xpose.msra.mxu0 0.0
          %487 = vmatprep.subr.mxu0 0.0
          %488 = vmatpush2.xpose.msra.mxu0 0.0
          %489 = vmatprep.subr.mxu0 0.0
          %490 = vmatpush2.xpose.msra.mxu0 0.0
          %491 = vmatprep.subr.mxu0 0.0
          %492 = vmatpush2.xpose.msra.mxu0 0.0
          %493 = vmatprep.subr.mxu0 0.0
          %494 = vmatpush2.xpose.msra.mxu0 0.0
          %495 = vmatprep.subr.mxu0 0.0
          %496 = vmatpush2.xpose.msra.mxu0 0.0
          %497 = vmatprep.subr.mxu0 0.0
          %498 = vmatpush2.xpose.msra.mxu0 0.0
          %499 = vmatprep.subr.mxu0 0.0
          %500 = vmatpush2.xpose.msra.mxu0 0.0
          %501 = vmatprep.subr.mxu0 0.0
          %502 = vmatpush2.xpose.msra.mxu0 0.0
          %503 = vmatprep.subr.mxu0 0.0
          %504 = vmatpush2.xpose.msra.mxu0 0.0
          %505 = vmatprep.subr.mxu0 0.0
          %506 = vmatpush2.xpose.msra.mxu0 0.0
          %507 = vmatprep.subr.mxu0 0.0
          %508 = vmatpush2.xpose.msra.mxu0 0.0
          %509 = vmatprep.subr.mxu0 0.0
          %510 = vmatpush2.xpose.msra.mxu0 0.0
          %511 = vmatprep.subr.mxu0 0.0
          %512 = vmatpush2.xpose.msra.mxu0 0.0
          %513 = vmatprep.mubr.f32.mxu0 0.0
          %514 = vmatmul.mubr.f32.gmra.mxu0 %v360
          %v515 = vpop.f32.mrf.mxu0
          %v516 = vadd.f32 0.0, %v515
          %v517 = vpop.f32.mrf.mxu0
          %518 = vdwg.mxu0
          %s519 = scalar_lea.vmem [#allocation2], 8
          %520 = vst.msk [vmem:[%s519] sm:$0xff] %vm438, %v516
          %s521 = scalar_lea.vmem %s2, 32
          %v522 = vld [vmem:[%s521] sm:$0xff]
          %v523 = vld [vmem:[%s521 + $0x8] sm:$0xff]
          %v525 = vsel %vm358, %v522, 0
          %v528 = vsel %vm358, %v523, 0
          %530 = vmatprep.subr.mxu0 0.0
          %531 = vmatpush1.xpose.msra.mxu0 0.0
          %532 = vmatprep.subr.mxu0 0.0
          %533 = vmatpush1.xpose.msra.mxu0 0.0
          %534 = vmatprep.subr.mxu0 0.0
          %535 = vmatpush1.xpose.msra.mxu0 0.0
          %536 = vmatprep.subr.mxu0 0.0
          %537 = vmatpush1.xpose.msra.mxu0 0.0
          %538 = vmatprep.subr.mxu0 0.0
          %539 = vmatpush1.xpose.msra.mxu0 0.0
          %540 = vmatprep.subr.mxu0 0.0
          %541 = vmatpush1.xpose.msra.mxu0 0.0
          %542 = vmatprep.subr.mxu0 0.0
          %543 = vmatpush1.xpose.msra.mxu0 0.0
          %544 = vmatprep.subr.mxu0 0.0
          %545 = vmatpush1.xpose.msra.mxu0 0.0
          %546 = vmatprep.subr.mxu0 0.0
          %547 = vmatpush1.xpose.msra.mxu0 0.0
          %548 = vmatprep.subr.mxu0 0.0
          %549 = vmatpush1.xpose.msra.mxu0 0.0
          %550 = vmatprep.subr.mxu0 0.0
          %551 = vmatpush1.xpose.msra.mxu0 0.0
          %552 = vmatprep.subr.mxu0 0.0
          %553 = vmatpush1.xpose.msra.mxu0 0.0
          %554 = vmatprep.subr.mxu0 0.0
          %555 = vmatpush1.xpose.msra.mxu0 0.0
          %556 = vmatprep.subr.mxu0 0.0
          %557 = vmatpush1.xpose.msra.mxu0 0.0
          %558 = vmatprep.subr.mxu0 0.0
          %559 = vmatpush1.xpose.msra.mxu0 %v528
          %560 = vmatprep.subr.mxu0 0.0
          %561 = vmatpush1.xpose.msra.mxu0 %v525
          %562 = vmatprep.subr.mxu0 0.0
          %563 = vmatpush2.xpose.msra.mxu0 0.0
          %564 = vmatprep.subr.mxu0 0.0
          %565 = vmatpush2.xpose.msra.mxu0 0.0
          %566 = vmatprep.subr.mxu0 0.0
          %567 = vmatpush2.xpose.msra.mxu0 0.0
          %568 = vmatprep.subr.mxu0 0.0
          %569 = vmatpush2.xpose.msra.mxu0 0.0
          %570 = vmatprep.subr.mxu0 0.0
          %571 = vmatpush2.xpose.msra.mxu0 0.0
          %572 = vmatprep.subr.mxu0 0.0
          %573 = vmatpush2.xpose.msra.mxu0 0.0
          %574 = vmatprep.subr.mxu0 0.0
          %575 = vmatpush2.xpose.msra.mxu0 0.0
          %576 = vmatprep.subr.mxu0 0.0
          %577 = vmatpush2.xpose.msra.mxu0 0.0
          %578 = vmatprep.subr.mxu0 0.0
          %579 = vmatpush2.xpose.msra.mxu0 0.0
          %580 = vmatprep.subr.mxu0 0.0
          %581 = vmatpush2.xpose.msra.mxu0 0.0
          %582 = vmatprep.subr.mxu0 0.0
          %583 = vmatpush2.xpose.msra.mxu0 0.0
          %584 = vmatprep.subr.mxu0 0.0
          %585 = vmatpush2.xpose.msra.mxu0 0.0
          %586 = vmatprep.subr.mxu0 0.0
          %587 = vmatpush2.xpose.msra.mxu0 0.0
          %588 = vmatprep.subr.mxu0 0.0
          %589 = vmatpush2.xpose.msra.mxu0 0.0
          %590 = vmatprep.subr.mxu0 0.0
          %591 = vmatpush2.xpose.msra.mxu0 0.0
          %592 = vmatprep.subr.mxu0 0.0
          %593 = vmatpush2.xpose.msra.mxu0 0.0
          %594 = vmatprep.mubr.f32.mxu0 0.0
          %595 = vmatmul.mubr.f32.gmra.mxu0 %v360
          %v596 = vpop.f32.mrf.mxu0
          %v597 = vadd.f32 0.0, %v596
          %v598 = vpop.f32.mrf.mxu0
          %599 = vdwg.mxu0
          %s600 = scalar_lea.vmem [#allocation2], 16
          %601 = vst.msk [vmem:[%s600] sm:$0xff] %vm438, %v597
          %s602 = scalar_lea.vmem %s2, 48
          %v603 = vld [vmem:[%s602] sm:$0xff]
          %v604 = vld [vmem:[%s602 + $0x8] sm:$0xff]
          %v606 = vsel %vm358, %v603, 0
          %v609 = vsel %vm358, %v604, 0
          %611 = vmatprep.subr.mxu0 0.0
          %612 = vmatpush1.xpose.msra.mxu0 0.0
          %613 = vmatprep.subr.mxu0 0.0
          %614 = vmatpush1.xpose.msra.mxu0 0.0
          %615 = vmatprep.subr.mxu0 0.0
          %616 = vmatpush1.xpose.msra.mxu0 0.0
          %617 = vmatprep.subr.mxu0 0.0
          %618 = vmatpush1.xpose.msra.mxu0 0.0
          %619 = vmatprep.subr.mxu0 0.0
          %620 = vmatpush1.xpose.msra.mxu0 0.0
          %621 = vmatprep.subr.mxu0 0.0
          %622 = vmatpush1.xpose.msra.mxu0 0.0
          %623 = vmatprep.subr.mxu0 0.0
          %624 = vmatpush1.xpose.msra.mxu0 0.0
          %625 = vmatprep.subr.mxu0 0.0
          %626 = vmatpush1.xpose.msra.mxu0 0.0
          %627 = vmatprep.subr.mxu0 0.0
          %628 = vmatpush1.xpose.msra.mxu0 0.0
          %629 = vmatprep.subr.mxu0 0.0
          %630 = vmatpush1.xpose.msra.mxu0 0.0
          %631 = vmatprep.subr.mxu0 0.0
          %632 = vmatpush1.xpose.msra.mxu0 0.0
          %633 = vmatprep.subr.mxu0 0.0
          %634 = vmatpush1.xpose.msra.mxu0 0.0
          %635 = vmatprep.subr.mxu0 0.0
          %636 = vmatpush1.xpose.msra.mxu0 0.0
          %637 = vmatprep.subr.mxu0 0.0
          %638 = vmatpush1.xpose.msra.mxu0 0.0
          %639 = vmatprep.subr.mxu0 0.0
          %640 = vmatpush1.xpose.msra.mxu0 %v609
          %641 = vmatprep.subr.mxu0 0.0
          %642 = vmatpush1.xpose.msra.mxu0 %v606
          %643 = vmatprep.subr.mxu0 0.0
          %644 = vmatpush2.xpose.msra.mxu0 0.0
          %645 = vmatprep.subr.mxu0 0.0
          %646 = vmatpush2.xpose.msra.mxu0 0.0
          %647 = vmatprep.subr.mxu0 0.0
          %648 = vmatpush2.xpose.msra.mxu0 0.0
          %649 = vmatprep.subr.mxu0 0.0
          %650 = vmatpush2.xpose.msra.mxu0 0.0
          %651 = vmatprep.subr.mxu0 0.0
          %652 = vmatpush2.xpose.msra.mxu0 0.0
          %653 = vmatprep.subr.mxu0 0.0
          %654 = vmatpush2.xpose.msra.mxu0 0.0
          %655 = vmatprep.subr.mxu0 0.0
          %656 = vmatpush2.xpose.msra.mxu0 0.0
          %657 = vmatprep.subr.mxu0 0.0
          %658 = vmatpush2.xpose.msra.mxu0 0.0
          %659 = vmatprep.subr.mxu0 0.0
          %660 = vmatpush2.xpose.msra.mxu0 0.0
          %661 = vmatprep.subr.mxu0 0.0
          %662 = vmatpush2.xpose.msra.mxu0 0.0
          %663 = vmatprep.subr.mxu0 0.0
          %664 = vmatpush2.xpose.msra.mxu0 0.0
          %665 = vmatprep.subr.mxu0 0.0
          %666 = vmatpush2.xpose.msra.mxu0 0.0
          %667 = vmatprep.subr.mxu0 0.0
          %668 = vmatpush2.xpose.msra.mxu0 0.0
          %669 = vmatprep.subr.mxu0 0.0
          %670 = vmatpush2.xpose.msra.mxu0 0.0
          %671 = vmatprep.subr.mxu0 0.0
          %672 = vmatpush2.xpose.msra.mxu0 0.0
          %673 = vmatprep.subr.mxu0 0.0
          %674 = vmatpush2.xpose.msra.mxu0 0.0
          %675 = vmatprep.mubr.f32.mxu0 0.0
          %676 = vmatmul.mubr.f32.gmra.mxu0 %v360
          %v677 = vpop.f32.mrf.mxu0
          %v678 = vadd.f32 0.0, %v677
          %v679 = vpop.f32.mrf.mxu0
          %680 = vdwg.mxu0
          %s681 = scalar_lea.vmem [#allocation2], 24
          %682 = vst.msk [vmem:[%s681] sm:$0xff] %vm438, %v678
          %vm683 = vcmask 7168
          %684 = vst.msk [vmem:[#allocation5] sm:$0xff] %vm683, -inf
          %685 = vst.msk [vmem:[#allocation5 + $0x8] sm:$0xff] %vm683, -inf
          %686 = vst.msk [vmem:[#allocation5 + $0x10] sm:$0xff] %vm683, -inf
          %687 = vst.msk [vmem:[#allocation5 + $0x18] sm:$0xff] %vm683, -inf
          %688 = vst.msk [vmem:[#allocation6] sm:$0xff] %vm683, 0.0
          %689 = vst.msk [vmem:[#allocation6 + $0x8] sm:$0xff] %vm683, 0.0
          %690 = vst.msk [vmem:[#allocation6 + $0x10] sm:$0xff] %vm683, 0.0
          %691 = vst.msk [vmem:[#allocation6 + $0x18] sm:$0xff] %vm683, 0.0
          %692 = vst.msk [vmem:[#allocation7] sm:$0xff] %vm438, 0.0
          %693 = vst.msk [vmem:[#allocation7 + $0x8] sm:$0xff] %vm438, 0.0
          %694 = vst.msk [vmem:[#allocation7 + $0x10] sm:$0xff] %vm438, 0.0
          %695 = vst.msk [vmem:[#allocation7 + $0x18] sm:$0xff] %vm438, 0.0
        $region60: #{tpu_custom_call.1} parent=47 // pred_fallthru
          _
        %v696 = vld [vmem:[%s314] sm:$0xff]
        %v697 = vld [vmem:[%s314 + $0x8] sm:$0xff]
        %v698 = vld [vmem:[%s3] sm:$0xff]
        %v699 = vld [vmem:[%s3 + $0x8] sm:$0xff]
        %vm700 = vcmask 261120
        %v702 = vsel %vm700, %v696, 0
        %v705 = vsel %vm700, %v697, 0
        %v708 = vsel %vm700, %v698, 0
        %v711 = vsel %vm700, %v699, 0
        %713 = vmatprep.subr.mxu0 0.0
        %714 = vmatpush1.xpose.msra.mxu0 0.0
        %715 = vmatprep.subr.mxu0 0.0
        %716 = vmatpush1.xpose.msra.mxu0 0.0
        %717 = vmatprep.subr.mxu0 0.0
        %718 = vmatpush1.xpose.msra.mxu0 0.0
        %719 = vmatprep.subr.mxu0 0.0
        %720 = vmatpush1.xpose.msra.mxu0 0.0
        %721 = vmatprep.subr.mxu0 0.0
        %722 = vmatpush1.xpose.msra.mxu0 0.0
        %723 = vmatprep.subr.mxu0 0.0
        %724 = vmatpush1.xpose.msra.mxu0 0.0
        %725 = vmatprep.subr.mxu0 0.0
        %726 = vmatpush1.xpose.msra.mxu0 0.0
        %727 = vmatprep.subr.mxu0 0.0
        %728 = vmatpush1.xpose.msra.mxu0 0.0
        %729 = vmatprep.subr.mxu0 0.0
        %730 = vmatpush1.xpose.msra.mxu0 0.0
        %731 = vmatprep.subr.mxu0 0.0
        %732 = vmatpush1.xpose.msra.mxu0 0.0
        %733 = vmatprep.subr.mxu0 0.0
        %734 = vmatpush1.xpose.msra.mxu0 0.0
        %735 = vmatprep.subr.mxu0 0.0
        %736 = vmatpush1.xpose.msra.mxu0 0.0
        %737 = vmatprep.subr.mxu0 0.0
        %738 = vmatpush1.xpose.msra.mxu0 0.0
        %739 = vmatprep.subr.mxu0 0.0
        %740 = vmatpush1.xpose.msra.mxu0 0.0
        %741 = vmatprep.subr.mxu0 0.0
        %742 = vmatpush1.xpose.msra.mxu0 %v711
        %743 = vmatprep.subr.mxu0 0.0
        %744 = vmatpush1.xpose.msra.mxu0 %v708
        %745 = vmatprep.subr.mxu0 0.0
        %746 = vmatpush2.xpose.msra.mxu0 0.0
        %747 = vmatprep.subr.mxu0 0.0
        %748 = vmatpush2.xpose.msra.mxu0 0.0
        %749 = vmatprep.subr.mxu0 0.0
        %750 = vmatpush2.xpose.msra.mxu0 0.0
        %751 = vmatprep.subr.mxu0 0.0
        %752 = vmatpush2.xpose.msra.mxu0 0.0
        %753 = vmatprep.subr.mxu0 0.0
        %754 = vmatpush2.xpose.msra.mxu0 0.0
        %755 = vmatprep.subr.mxu0 0.0
        %756 = vmatpush2.xpose.msra.mxu0 0.0
        %757 = vmatprep.subr.mxu0 0.0
        %758 = vmatpush2.xpose.msra.mxu0 0.0
        %759 = vmatprep.subr.mxu0 0.0
        %760 = vmatpush2.xpose.msra.mxu0 0.0
        %761 = vmatprep.subr.mxu0 0.0
        %762 = vmatpush2.xpose.msra.mxu0 0.0
        %763 = vmatprep.subr.mxu0 0.0
        %764 = vmatpush2.xpose.msra.mxu0 0.0
        %765 = vmatprep.subr.mxu0 0.0
        %766 = vmatpush2.xpose.msra.mxu0 0.0
        %767 = vmatprep.subr.mxu0 0.0
        %768 = vmatpush2.xpose.msra.mxu0 0.0
        %769 = vmatprep.subr.mxu0 0.0
        %770 = vmatpush2.xpose.msra.mxu0 0.0
        %771 = vmatprep.subr.mxu0 0.0
        %772 = vmatpush2.xpose.msra.mxu0 0.0
        %773 = vmatprep.subr.mxu0 0.0
        %774 = vmatpush2.xpose.msra.mxu0 0.0
        %775 = vmatprep.subr.mxu0 0.0
        %776 = vmatpush2.xpose.msra.mxu0 0.0
        %777 = vmatprep.mubr.f32.mxu0 0.0
        %778 = vmatmul.mubr.f32.gmra.mxu0 %v702
        %v779 = vpop.f32.mrf.mxu0
        %v780 = vadd.f32 0.0, %v779
        %v781 = vpop.f32.mrf.mxu0
        %782 = vmatprep.mubr.f32.mxu0 0.0
        %783 = vmatmul.mubr.f32.gmra.mxu0 %v705
        %v784 = vpop.f32.mrf.mxu0
        %v785 = vadd.f32 0.0, %v784
        %v786 = vpop.f32.mrf.mxu0
        %787 = vdwg.mxu0
        %vm788 = vcmask 130048
        %789 = vst.msk [vmem:[#allocation3] sm:$0xff] %vm788, %v780
        %790 = vst.msk [vmem:[#allocation3 + $0x8] sm:$0xff] %vm788, %v785
        %v791 = vld [vmem:[%s4] sm:$0xff]
        %v792 = vld [vmem:[%s4 + $0x8] sm:$0xff]
        %v794 = vsel %vm700, %v791, 0
        %v797 = vsel %vm700, %v792, 0
        %799 = vmatprep.subr.mxu0 0.0
        %800 = vmatpush1.xpose.msra.mxu0 0.0
        %801 = vmatprep.subr.mxu0 0.0
        %802 = vmatpush1.xpose.msra.mxu0 0.0
        %803 = vmatprep.subr.mxu0 0.0
        %804 = vmatpush1.xpose.msra.mxu0 0.0
        %805 = vmatprep.subr.mxu0 0.0
        %806 = vmatpush1.xpose.msra.mxu0 0.0
        %807 = vmatprep.subr.mxu0 0.0
        %808 = vmatpush1.xpose.msra.mxu0 0.0
        %809 = vmatprep.subr.mxu0 0.0
        %810 = vmatpush1.xpose.msra.mxu0 0.0
        %811 = vmatprep.subr.mxu0 0.0
        %812 = vmatpush1.xpose.msra.mxu0 0.0
        %813 = vmatprep.subr.mxu0 0.0
        %814 = vmatpush1.xpose.msra.mxu0 0.0
        %815 = vmatprep.subr.mxu0 0.0
        %816 = vmatpush1.xpose.msra.mxu0 0.0
        %817 = vmatprep.subr.mxu0 0.0
        %818 = vmatpush1.xpose.msra.mxu0 0.0
        %819 = vmatprep.subr.mxu0 0.0
        %820 = vmatpush1.xpose.msra.mxu0 0.0
        %821 = vmatprep.subr.mxu0 0.0
        %822 = vmatpush1.xpose.msra.mxu0 0.0
        %823 = vmatprep.subr.mxu0 0.0
        %824 = vmatpush1.xpose.msra.mxu0 0.0
        %825 = vmatprep.subr.mxu0 0.0
        %826 = vmatpush1.xpose.msra.mxu0 0.0
        %827 = vmatprep.subr.mxu0 0.0
        %828 = vmatpush1.xpose.msra.mxu0 %v797
        %829 = vmatprep.subr.mxu0 0.0
        %830 = vmatpush1.xpose.msra.mxu0 %v794
        %831 = vmatprep.subr.mxu0 0.0
        %832 = vmatpush2.xpose.msra.mxu0 0.0
        %833 = vmatprep.subr.mxu0 0.0
        %834 = vmatpush2.xpose.msra.mxu0 0.0
        %835 = vmatprep.subr.mxu0 0.0
        %836 = vmatpush2.xpose.msra.mxu0 0.0
        %837 = vmatprep.subr.mxu0 0.0
        %838 = vmatpush2.xpose.msra.mxu0 0.0
        %839 = vmatprep.subr.mxu0 0.0
        %840 = vmatpush2.xpose.msra.mxu0 0.0
        %841 = vmatprep.subr.mxu0 0.0
        %842 = vmatpush2.xpose.msra.mxu0 0.0
        %843 = vmatprep.subr.mxu0 0.0
        %844 = vmatpush2.xpose.msra.mxu0 0.0
        %845 = vmatprep.subr.mxu0 0.0
        %846 = vmatpush2.xpose.msra.mxu0 0.0
        %847 = vmatprep.subr.mxu0 0.0
        %848 = vmatpush2.xpose.msra.mxu0 0.0
        %849 = vmatprep.subr.mxu0 0.0
        %850 = vmatpush2.xpose.msra.mxu0 0.0
        %851 = vmatprep.subr.mxu0 0.0
        %852 = vmatpush2.xpose.msra.mxu0 0.0
        %853 = vmatprep.subr.mxu0 0.0
        %854 = vmatpush2.xpose.msra.mxu0 0.0
        %855 = vmatprep.subr.mxu0 0.0
        %856 = vmatpush2.xpose.msra.mxu0 0.0
        %857 = vmatprep.subr.mxu0 0.0
        %858 = vmatpush2.xpose.msra.mxu0 0.0
        %859 = vmatprep.subr.mxu0 0.0
        %860 = vmatpush2.xpose.msra.mxu0 0.0
        %861 = vmatprep.subr.mxu0 0.0
        %862 = vmatpush2.xpose.msra.mxu0 0.0
        %863 = vmatprep.mubr.f32.mxu0 0.0
        %864 = vmatmul.mubr.f32.gmra.mxu0 %v702
        %v865 = vpop.f32.mrf.mxu0
        %v866 = vadd.f32 0.0, %v865
        %v867 = vpop.f32.mrf.mxu0
        %868 = vmatprep.mubr.f32.mxu0 0.0
        %869 = vmatmul.mubr.f32.gmra.mxu0 %v705
        %v870 = vpop.f32.mrf.mxu0
        %v871 = vadd.f32 0.0, %v870
        %v872 = vpop.f32.mrf.mxu0
        %873 = vdwg.mxu0
        %874 = vst.msk [vmem:[#allocation4] sm:$0xff] %vm788, %v866
        %875 = vst.msk [vmem:[#allocation4 + $0x8] sm:$0xff] %vm788, %v871
        %s876 = scalar_lea.vmem %s3, 16
        %v877 = vld [vmem:[%s876] sm:$0xff]
        %v878 = vld [vmem:[%s876 + $0x8] sm:$0xff]
        %v880 = vsel %vm700, %v877, 0
        %v883 = vsel %vm700, %v878, 0
        %885 = vmatprep.subr.mxu0 0.0
        %886 = vmatpush1.xpose.msra.mxu0 0.0
        %887 = vmatprep.subr.mxu0 0.0
        %888 = vmatpush1.xpose.msra.mxu0 0.0
        %889 = vmatprep.subr.mxu0 0.0
        %890 = vmatpush1.xpose.msra.mxu0 0.0
        %891 = vmatprep.subr.mxu0 0.0
        %892 = vmatpush1.xpose.msra.mxu0 0.0
        %893 = vmatprep.subr.mxu0 0.0
        %894 = vmatpush1.xpose.msra.mxu0 0.0
        %895 = vmatprep.subr.mxu0 0.0
        %896 = vmatpush1.xpose.msra.mxu0 0.0
        %897 = vmatprep.subr.mxu0 0.0
        %898 = vmatpush1.xpose.msra.mxu0 0.0
        %899 = vmatprep.subr.mxu0 0.0
        %900 = vmatpush1.xpose.msra.mxu0 0.0
        %901 = vmatprep.subr.mxu0 0.0
        %902 = vmatpush1.xpose.msra.mxu0 0.0
        %903 = vmatprep.subr.mxu0 0.0
        %904 = vmatpush1.xpose.msra.mxu0 0.0
        %905 = vmatprep.subr.mxu0 0.0
        %906 = vmatpush1.xpose.msra.mxu0 0.0
        %907 = vmatprep.subr.mxu0 0.0
        %908 = vmatpush1.xpose.msra.mxu0 0.0
        %909 = vmatprep.subr.mxu0 0.0
        %910 = vmatpush1.xpose.msra.mxu0 0.0
        %911 = vmatprep.subr.mxu0 0.0
        %912 = vmatpush1.xpose.msra.mxu0 0.0
        %913 = vmatprep.subr.mxu0 0.0
        %914 = vmatpush1.xpose.msra.mxu0 %v883
        %915 = vmatprep.subr.mxu0 0.0
        %916 = vmatpush1.xpose.msra.mxu0 %v880
        %917 = vmatprep.subr.mxu0 0.0
        %918 = vmatpush2.xpose.msra.mxu0 0.0
        %919 = vmatprep.subr.mxu0 0.0
        %920 = vmatpush2.xpose.msra.mxu0 0.0
        %921 = vmatprep.subr.mxu0 0.0
        %922 = vmatpush2.xpose.msra.mxu0 0.0
        %923 = vmatprep.subr.mxu0 0.0
        %924 = vmatpush2.xpose.msra.mxu0 0.0
        %925 = vmatprep.subr.mxu0 0.0
        %926 = vmatpush2.xpose.msra.mxu0 0.0
        %927 = vmatprep.subr.mxu0 0.0
        %928 = vmatpush2.xpose.msra.mxu0 0.0
        %929 = vmatprep.subr.mxu0 0.0
        %930 = vmatpush2.xpose.msra.mxu0 0.0
        %931 = vmatprep.subr.mxu0 0.0
        %932 = vmatpush2.xpose.msra.mxu0 0.0
        %933 = vmatprep.subr.mxu0 0.0
        %934 = vmatpush2.xpose.msra.mxu0 0.0
        %935 = vmatprep.subr.mxu0 0.0
        %936 = vmatpush2.xpose.msra.mxu0 0.0
        %937 = vmatprep.subr.mxu0 0.0
        %938 = vmatpush2.xpose.msra.mxu0 0.0
        %939 = vmatprep.subr.mxu0 0.0
        %940 = vmatpush2.xpose.msra.mxu0 0.0
        %941 = vmatprep.subr.mxu0 0.0
        %942 = vmatpush2.xpose.msra.mxu0 0.0
        %943 = vmatprep.subr.mxu0 0.0
        %944 = vmatpush2.xpose.msra.mxu0 0.0
        %945 = vmatprep.subr.mxu0 0.0
        %946 = vmatpush2.xpose.msra.mxu0 0.0
        %947 = vmatprep.subr.mxu0 0.0
        %948 = vmatpush2.xpose.msra.mxu0 0.0
        %949 = vmatprep.mubr.f32.mxu0 0.0
        %950 = vmatmul.mubr.f32.gmra.mxu0 %v702
        %v951 = vpop.f32.mrf.mxu0
        %v952 = vadd.f32 0.0, %v951
        %v953 = vpop.f32.mrf.mxu0
        %954 = vmatprep.mubr.f32.mxu0 0.0
        %955 = vmatmul.mubr.f32.gmra.mxu0 %v705
        %v956 = vpop.f32.mrf.mxu0
        %v957 = vadd.f32 0.0, %v956
        %v958 = vpop.f32.mrf.mxu0
        %959 = vdwg.mxu0
        %s960 = scalar_lea.vmem [#allocation3], 16
        %961 = vst.msk [vmem:[%s960] sm:$0xff] %vm788, %v952
        %962 = vst.msk [vmem:[%s960 + $0x8] sm:$0xff] %vm788, %v957
        %s963 = scalar_lea.vmem %s4, 16
        %v964 = vld [vmem:[%s963] sm:$0xff]
        %v965 = vld [vmem:[%s963 + $0x8] sm:$0xff]
        %v967 = vsel %vm700, %v964, 0
        %v970 = vsel %vm700, %v965, 0
        %972 = vmatprep.subr.mxu0 0.0
        %973 = vmatpush1.xpose.msra.mxu0 0.0
        %974 = vmatprep.subr.mxu0 0.0
        %975 = vmatpush1.xpose.msra.mxu0 0.0
        %976 = vmatprep.subr.mxu0 0.0
        %977 = vmatpush1.xpose.msra.mxu0 0.0
        %978 = vmatprep.subr.mxu0 0.0
        %979 = vmatpush1.xpose.msra.mxu0 0.0
        %980 = vmatprep.subr.mxu0 0.0
        %981 = vmatpush1.xpose.msra.mxu0 0.0
        %982 = vmatprep.subr.mxu0 0.0
        %983 = vmatpush1.xpose.msra.mxu0 0.0
        %984 = vmatprep.subr.mxu0 0.0
        %985 = vmatpush1.xpose.msra.mxu0 0.0
        %986 = vmatprep.subr.mxu0 0.0
        %987 = vmatpush1.xpose.msra.mxu0 0.0
        %988 = vmatprep.subr.mxu0 0.0
        %989 = vmatpush1.xpose.msra.mxu0 0.0
        %990 = vmatprep.subr.mxu0 0.0
        %991 = vmatpush1.xpose.msra.mxu0 0.0
        %992 = vmatprep.subr.mxu0 0.0
        %993 = vmatpush1.xpose.msra.mxu0 0.0
        %994 = vmatprep.subr.mxu0 0.0
        %995 = vmatpush1.xpose.msra.mxu0 0.0
        %996 = vmatprep.subr.mxu0 0.0
        %997 = vmatpush1.xpose.msra.mxu0 0.0
        %998 = vmatprep.subr.mxu0 0.0
        %999 = vmatpush1.xpose.msra.mxu0 0.0
        %1000 = vmatprep.subr.mxu0 0.0
        %1001 = vmatpush1.xpose.msra.mxu0 %v970
        %1002 = vmatprep.subr.mxu0 0.0
        %1003 = vmatpush1.xpose.msra.mxu0 %v967
        %1004 = vmatprep.subr.mxu0 0.0
        %1005 = vmatpush2.xpose.msra.mxu0 0.0
        %1006 = vmatprep.subr.mxu0 0.0
        %1007 = vmatpush2.xpose.msra.mxu0 0.0
        %1008 = vmatprep.subr.mxu0 0.0
        %1009 = vmatpush2.xpose.msra.mxu0 0.0
        %1010 = vmatprep.subr.mxu0 0.0
        %1011 = vmatpush2.xpose.msra.mxu0 0.0
        %1012 = vmatprep.subr.mxu0 0.0
        %1013 = vmatpush2.xpose.msra.mxu0 0.0
        %1014 = vmatprep.subr.mxu0 0.0
        %1015 = vmatpush2.xpose.msra.mxu0 0.0
        %1016 = vmatprep.subr.mxu0 0.0
        %1017 = vmatpush2.xpose.msra.mxu0 0.0
        %1018 = vmatprep.subr.mxu0 0.0
        %1019 = vmatpush2.xpose.msra.mxu0 0.0
        %1020 = vmatprep.subr.mxu0 0.0
        %1021 = vmatpush2.xpose.msra.mxu0 0.0
        %1022 = vmatprep.subr.mxu0 0.0
        %1023 = vmatpush2.xpose.msra.mxu0 0.0
        %1024 = vmatprep.subr.mxu0 0.0
        %1025 = vmatpush2.xpose.msra.mxu0 0.0
        %1026 = vmatprep.subr.mxu0 0.0
        %1027 = vmatpush2.xpose.msra.mxu0 0.0
        %1028 = vmatprep.subr.mxu0 0.0
        %1029 = vmatpush2.xpose.msra.mxu0 0.0
        %1030 = vmatprep.subr.mxu0 0.0
        %1031 = vmatpush2.xpose.msra.mxu0 0.0
        %1032 = vmatprep.subr.mxu0 0.0
        %1033 = vmatpush2.xpose.msra.mxu0 0.0
        %1034 = vmatprep.subr.mxu0 0.0
        %1035 = vmatpush2.xpose.msra.mxu0 0.0
        %1036 = vmatprep.mubr.f32.mxu0 0.0
        %1037 = vmatmul.mubr.f32.gmra.mxu0 %v702
        %v1038 = vpop.f32.mrf.mxu0
        %v1039 = vadd.f32 0.0, %v1038
        %v1040 = vpop.f32.mrf.mxu0
        %1041 = vmatprep.mubr.f32.mxu0 0.0
        %1042 = vmatmul.mubr.f32.gmra.mxu0 %v705
        %v1043 = vpop.f32.mrf.mxu0
        %v1044 = vadd.f32 0.0, %v1043
        %v1045 = vpop.f32.mrf.mxu0
        %1046 = vdwg.mxu0
        %s1047 = scalar_lea.vmem [#allocation4], 16
        %1048 = vst.msk [vmem:[%s1047] sm:$0xff] %vm788, %v1039
        %1049 = vst.msk [vmem:[%s1047 + $0x8] sm:$0xff] %vm788, %v1044
        %s1050 = scalar_lea.vmem %s3, 32
        %v1051 = vld [vmem:[%s1050] sm:$0xff]
        %v1052 = vld [vmem:[%s1050 + $0x8] sm:$0xff]
        %v1054 = vsel %vm700, %v1051, 0
        %v1057 = vsel %vm700, %v1052, 0
        %1059 = vmatprep.subr.mxu0 0.0
        %1060 = vmatpush1.xpose.msra.mxu0 0.0
        %1061 = vmatprep.subr.mxu0 0.0
        %1062 = vmatpush1.xpose.msra.mxu0 0.0
        %1063 = vmatprep.subr.mxu0 0.0
        %1064 = vmatpush1.xpose.msra.mxu0 0.0
        %1065 = vmatprep.subr.mxu0 0.0
        %1066 = vmatpush1.xpose.msra.mxu0 0.0
        %1067 = vmatprep.subr.mxu0 0.0
        %1068 = vmatpush1.xpose.msra.mxu0 0.0
        %1069 = vmatprep.subr.mxu0 0.0
        %1070 = vmatpush1.xpose.msra.mxu0 0.0
        %1071 = vmatprep.subr.mxu0 0.0
        %1072 = vmatpush1.xpose.msra.mxu0 0.0
        %1073 = vmatprep.subr.mxu0 0.0
        %1074 = vmatpush1.xpose.msra.mxu0 0.0
        %1075 = vmatprep.subr.mxu0 0.0
        %1076 = vmatpush1.xpose.msra.mxu0 0.0
        %1077 = vmatprep.subr.mxu0 0.0
        %1078 = vmatpush1.xpose.msra.mxu0 0.0
        %1079 = vmatprep.subr.mxu0 0.0
        %1080 = vmatpush1.xpose.msra.mxu0 0.0
        %1081 = vmatprep.subr.mxu0 0.0
        %1082 = vmatpush1.xpose.msra.mxu0 0.0
        %1083 = vmatprep.subr.mxu0 0.0
        %1084 = vmatpush1.xpose.msra.mxu0 0.0
        %1085 = vmatprep.subr.mxu0 0.0
        %1086 = vmatpush1.xpose.msra.mxu0 0.0
        %1087 = vmatprep.subr.mxu0 0.0
        %1088 = vmatpush1.xpose.msra.mxu0 %v1057
        %1089 = vmatprep.subr.mxu0 0.0
        %1090 = vmatpush1.xpose.msra.mxu0 %v1054
        %1091 = vmatprep.subr.mxu0 0.0
        %1092 = vmatpush2.xpose.msra.mxu0 0.0
        %1093 = vmatprep.subr.mxu0 0.0
        %1094 = vmatpush2.xpose.msra.mxu0 0.0
        %1095 = vmatprep.subr.mxu0 0.0
        %1096 = vmatpush2.xpose.msra.mxu0 0.0
        %1097 = vmatprep.subr.mxu0 0.0
        %1098 = vmatpush2.xpose.msra.mxu0 0.0
        %1099 = vmatprep.subr.mxu0 0.0
        %1100 = vmatpush2.xpose.msra.mxu0 0.0
        %1101 = vmatprep.subr.mxu0 0.0
        %1102 = vmatpush2.xpose.msra.mxu0 0.0
        %1103 = vmatprep.subr.mxu0 0.0
        %1104 = vmatpush2.xpose.msra.mxu0 0.0
        %1105 = vmatprep.subr.mxu0 0.0
        %1106 = vmatpush2.xpose.msra.mxu0 0.0
        %1107 = vmatprep.subr.mxu0 0.0
        %1108 = vmatpush2.xpose.msra.mxu0 0.0
        %1109 = vmatprep.subr.mxu0 0.0
        %1110 = vmatpush2.xpose.msra.mxu0 0.0
        %1111 = vmatprep.subr.mxu0 0.0
        %1112 = vmatpush2.xpose.msra.mxu0 0.0
        %1113 = vmatprep.subr.mxu0 0.0
        %1114 = vmatpush2.xpose.msra.mxu0 0.0
        %1115 = vmatprep.subr.mxu0 0.0
        %1116 = vmatpush2.xpose.msra.mxu0 0.0
        %1117 = vmatprep.subr.mxu0 0.0
        %1118 = vmatpush2.xpose.msra.mxu0 0.0
        %1119 = vmatprep.subr.mxu0 0.0
        %1120 = vmatpush2.xpose.msra.mxu0 0.0
        %1121 = vmatprep.subr.mxu0 0.0
        %1122 = vmatpush2.xpose.msra.mxu0 0.0
        %1123 = vmatprep.mubr.f32.mxu0 0.0
        %1124 = vmatmul.mubr.f32.gmra.mxu0 %v702
        %v1125 = vpop.f32.mrf.mxu0
        %v1126 = vadd.f32 0.0, %v1125
        %v1127 = vpop.f32.mrf.mxu0
        %1128 = vmatprep.mubr.f32.mxu0 0.0
        %1129 = vmatmul.mubr.f32.gmra.mxu0 %v705
        %v1130 = vpop.f32.mrf.mxu0
        %v1131 = vadd.f32 0.0, %v1130
        %v1132 = vpop.f32.mrf.mxu0
        %1133 = vdwg.mxu0
        %s1134 = scalar_lea.vmem [#allocation3], 32
        %1135 = vst.msk [vmem:[%s1134] sm:$0xff] %vm788, %v1126
        %1136 = vst.msk [vmem:[%s1134 + $0x8] sm:$0xff] %vm788, %v1131
        %s1137 = scalar_lea.vmem %s4, 32
        %v1138 = vld [vmem:[%s1137] sm:$0xff]
        %v1139 = vld [vmem:[%s1137 + $0x8] sm:$0xff]
        %v1141 = vsel %vm700, %v1138, 0
        %v1144 = vsel %vm700, %v1139, 0
        %1146 = vmatprep.subr.mxu0 0.0
        %1147 = vmatpush1.xpose.msra.mxu0 0.0
        %1148 = vmatprep.subr.mxu0 0.0
        %1149 = vmatpush1.xpose.msra.mxu0 0.0
        %1150 = vmatprep.subr.mxu0 0.0
        %1151 = vmatpush1.xpose.msra.mxu0 0.0
        %1152 = vmatprep.subr.mxu0 0.0
        %1153 = vmatpush1.xpose.msra.mxu0 0.0
        %1154 = vmatprep.subr.mxu0 0.0
        %1155 = vmatpush1.xpose.msra.mxu0 0.0
        %1156 = vmatprep.subr.mxu0 0.0
        %1157 = vmatpush1.xpose.msra.mxu0 0.0
        %1158 = vmatprep.subr.mxu0 0.0
        %1159 = vmatpush1.xpose.msra.mxu0 0.0
        %1160 = vmatprep.subr.mxu0 0.0
        %1161 = vmatpush1.xpose.msra.mxu0 0.0
        %1162 = vmatprep.subr.mxu0 0.0
        %1163 = vmatpush1.xpose.msra.mxu0 0.0
        %1164 = vmatprep.subr.mxu0 0.0
        %1165 = vmatpush1.xpose.msra.mxu0 0.0
        %1166 = vmatprep.subr.mxu0 0.0
        %1167 = vmatpush1.xpose.msra.mxu0 0.0
        %1168 = vmatprep.subr.mxu0 0.0
        %1169 = vmatpush1.xpose.msra.mxu0 0.0
        %1170 = vmatprep.subr.mxu0 0.0
        %1171 = vmatpush1.xpose.msra.mxu0 0.0
        %1172 = vmatprep.subr.mxu0 0.0
        %1173 = vmatpush1.xpose.msra.mxu0 0.0
        %1174 = vmatprep.subr.mxu0 0.0
        %1175 = vmatpush1.xpose.msra.mxu0 %v1144
        %1176 = vmatprep.subr.mxu0 0.0
        %1177 = vmatpush1.xpose.msra.mxu0 %v1141
        %1178 = vmatprep.subr.mxu0 0.0
        %1179 = vmatpush2.xpose.msra.mxu0 0.0
        %1180 = vmatprep.subr.mxu0 0.0
        %1181 = vmatpush2.xpose.msra.mxu0 0.0
        %1182 = vmatprep.subr.mxu0 0.0
        %1183 = vmatpush2.xpose.msra.mxu0 0.0
        %1184 = vmatprep.subr.mxu0 0.0
        %1185 = vmatpush2.xpose.msra.mxu0 0.0
        %1186 = vmatprep.subr.mxu0 0.0
        %1187 = vmatpush2.xpose.msra.mxu0 0.0
        %1188 = vmatprep.subr.mxu0 0.0
        %1189 = vmatpush2.xpose.msra.mxu0 0.0
        %1190 = vmatprep.subr.mxu0 0.0
        %1191 = vmatpush2.xpose.msra.mxu0 0.0
        %1192 = vmatprep.subr.mxu0 0.0
        %1193 = vmatpush2.xpose.msra.mxu0 0.0
        %1194 = vmatprep.subr.mxu0 0.0
        %1195 = vmatpush2.xpose.msra.mxu0 0.0
        %1196 = vmatprep.subr.mxu0 0.0
        %1197 = vmatpush2.xpose.msra.mxu0 0.0
        %1198 = vmatprep.subr.mxu0 0.0
        %1199 = vmatpush2.xpose.msra.mxu0 0.0
        %1200 = vmatprep.subr.mxu0 0.0
        %1201 = vmatpush2.xpose.msra.mxu0 0.0
        %1202 = vmatprep.subr.mxu0 0.0
        %1203 = vmatpush2.xpose.msra.mxu0 0.0
        %1204 = vmatprep.subr.mxu0 0.0
        %1205 = vmatpush2.xpose.msra.mxu0 0.0
        %1206 = vmatprep.subr.mxu0 0.0
        %1207 = vmatpush2.xpose.msra.mxu0 0.0
        %1208 = vmatprep.subr.mxu0 0.0
        %1209 = vmatpush2.xpose.msra.mxu0 0.0
        %1210 = vmatprep.mubr.f32.mxu0 0.0
        %1211 = vmatmul.mubr.f32.gmra.mxu0 %v702
        %v1212 = vpop.f32.mrf.mxu0
        %v1213 = vadd.f32 0.0, %v1212
        %v1214 = vpop.f32.mrf.mxu0
        %1215 = vmatprep.mubr.f32.mxu0 0.0
        %1216 = vmatmul.mubr.f32.gmra.mxu0 %v705
        %v1217 = vpop.f32.mrf.mxu0
        %v1218 = vadd.f32 0.0, %v1217
        %v1219 = vpop.f32.mrf.mxu0
        %1220 = vdwg.mxu0
        %s1221 = scalar_lea.vmem [#allocation4], 32
        %1222 = vst.msk [vmem:[%s1221] sm:$0xff] %vm788, %v1213
        %1223 = vst.msk [vmem:[%s1221 + $0x8] sm:$0xff] %vm788, %v1218
        %s1224 = scalar_lea.vmem %s3, 48
        %v1225 = vld [vmem:[%s1224] sm:$0xff]
        %v1226 = vld [vmem:[%s1224 + $0x8] sm:$0xff]
        %v1228 = vsel %vm700, %v1225, 0
        %v1231 = vsel %vm700, %v1226, 0
        %1233 = vmatprep.subr.mxu0 0.0
        %1234 = vmatpush1.xpose.msra.mxu0 0.0
        %1235 = vmatprep.subr.mxu0 0.0
        %1236 = vmatpush1.xpose.msra.mxu0 0.0
        %1237 = vmatprep.subr.mxu0 0.0
        %1238 = vmatpush1.xpose.msra.mxu0 0.0
        %1239 = vmatprep.subr.mxu0 0.0
        %1240 = vmatpush1.xpose.msra.mxu0 0.0
        %1241 = vmatprep.subr.mxu0 0.0
        %1242 = vmatpush1.xpose.msra.mxu0 0.0
        %1243 = vmatprep.subr.mxu0 0.0
        %1244 = vmatpush1.xpose.msra.mxu0 0.0
        %1245 = vmatprep.subr.mxu0 0.0
        %1246 = vmatpush1.xpose.msra.mxu0 0.0
        %1247 = vmatprep.subr.mxu0 0.0
        %1248 = vmatpush1.xpose.msra.mxu0 0.0
        %1249 = vmatprep.subr.mxu0 0.0
        %1250 = vmatpush1.xpose.msra.mxu0 0.0
        %1251 = vmatprep.subr.mxu0 0.0
        %1252 = vmatpush1.xpose.msra.mxu0 0.0
        %1253 = vmatprep.subr.mxu0 0.0
        %1254 = vmatpush1.xpose.msra.mxu0 0.0
        %1255 = vmatprep.subr.mxu0 0.0
        %1256 = vmatpush1.xpose.msra.mxu0 0.0
        %1257 = vmatprep.subr.mxu0 0.0
        %1258 = vmatpush1.xpose.msra.mxu0 0.0
        %1259 = vmatprep.subr.mxu0 0.0
        %1260 = vmatpush1.xpose.msra.mxu0 0.0
        %1261 = vmatprep.subr.mxu0 0.0
        %1262 = vmatpush1.xpose.msra.mxu0 %v1231
        %1263 = vmatprep.subr.mxu0 0.0
        %1264 = vmatpush1.xpose.msra.mxu0 %v1228
        %1265 = vmatprep.subr.mxu0 0.0
        %1266 = vmatpush2.xpose.msra.mxu0 0.0
        %1267 = vmatprep.subr.mxu0 0.0
        %1268 = vmatpush2.xpose.msra.mxu0 0.0
        %1269 = vmatprep.subr.mxu0 0.0
        %1270 = vmatpush2.xpose.msra.mxu0 0.0
        %1271 = vmatprep.subr.mxu0 0.0
        %1272 = vmatpush2.xpose.msra.mxu0 0.0
        %1273 = vmatprep.subr.mxu0 0.0
        %1274 = vmatpush2.xpose.msra.mxu0 0.0
        %1275 = vmatprep.subr.mxu0 0.0
        %1276 = vmatpush2.xpose.msra.mxu0 0.0
        %1277 = vmatprep.subr.mxu0 0.0
        %1278 = vmatpush2.xpose.msra.mxu0 0.0
        %1279 = vmatprep.subr.mxu0 0.0
        %1280 = vmatpush2.xpose.msra.mxu0 0.0
        %1281 = vmatprep.subr.mxu0 0.0
        %1282 = vmatpush2.xpose.msra.mxu0 0.0
        %1283 = vmatprep.subr.mxu0 0.0
        %1284 = vmatpush2.xpose.msra.mxu0 0.0
        %1285 = vmatprep.subr.mxu0 0.0
        %1286 = vmatpush2.xpose.msra.mxu0 0.0
        %1287 = vmatprep.subr.mxu0 0.0
        %1288 = vmatpush2.xpose.msra.mxu0 0.0
        %1289 = vmatprep.subr.mxu0 0.0
        %1290 = vmatpush2.xpose.msra.mxu0 0.0
        %1291 = vmatprep.subr.mxu0 0.0
        %1292 = vmatpush2.xpose.msra.mxu0 0.0
        %1293 = vmatprep.subr.mxu0 0.0
        %1294 = vmatpush2.xpose.msra.mxu0 0.0
        %1295 = vmatprep.subr.mxu0 0.0
        %1296 = vmatpush2.xpose.msra.mxu0 0.0
        %1297 = vmatprep.mubr.f32.mxu0 0.0
        %1298 = vmatmul.mubr.f32.gmra.mxu0 %v702
        %v1299 = vpop.f32.mrf.mxu0
        %v1300 = vadd.f32 0.0, %v1299
        %v1301 = vpop.f32.mrf.mxu0
        %1302 = vmatprep.mubr.f32.mxu0 0.0
        %1303 = vmatmul.mubr.f32.gmra.mxu0 %v705
        %v1304 = vpop.f32.mrf.mxu0
        %v1305 = vadd.f32 0.0, %v1304
        %v1306 = vpop.f32.mrf.mxu0
        %1307 = vdwg.mxu0
        %s1308 = scalar_lea.vmem [#allocation3], 48
        %1309 = vst.msk [vmem:[%s1308] sm:$0xff] %vm788, %v1300
        %1310 = vst.msk [vmem:[%s1308 + $0x8] sm:$0xff] %vm788, %v1305
        %s1311 = scalar_lea.vmem %s4, 48
        %v1312 = vld [vmem:[%s1311] sm:$0xff]
        %v1313 = vld [vmem:[%s1311 + $0x8] sm:$0xff]
        %v1315 = vsel %vm700, %v1312, 0
        %v1318 = vsel %vm700, %v1313, 0
        %1320 = vmatprep.subr.mxu0 0.0
        %1321 = vmatpush1.xpose.msra.mxu0 0.0
        %1322 = vmatprep.subr.mxu0 0.0
        %1323 = vmatpush1.xpose.msra.mxu0 0.0
        %1324 = vmatprep.subr.mxu0 0.0
        %1325 = vmatpush1.xpose.msra.mxu0 0.0
        %1326 = vmatprep.subr.mxu0 0.0
        %1327 = vmatpush1.xpose.msra.mxu0 0.0
        %1328 = vmatprep.subr.mxu0 0.0
        %1329 = vmatpush1.xpose.msra.mxu0 0.0
        %1330 = vmatprep.subr.mxu0 0.0
        %1331 = vmatpush1.xpose.msra.mxu0 0.0
        %1332 = vmatprep.subr.mxu0 0.0
        %1333 = vmatpush1.xpose.msra.mxu0 0.0
        %1334 = vmatprep.subr.mxu0 0.0
        %1335 = vmatpush1.xpose.msra.mxu0 0.0
        %1336 = vmatprep.subr.mxu0 0.0
        %1337 = vmatpush1.xpose.msra.mxu0 0.0
        %1338 = vmatprep.subr.mxu0 0.0
        %1339 = vmatpush1.xpose.msra.mxu0 0.0
        %1340 = vmatprep.subr.mxu0 0.0
        %1341 = vmatpush1.xpose.msra.mxu0 0.0
        %1342 = vmatprep.subr.mxu0 0.0
        %1343 = vmatpush1.xpose.msra.mxu0 0.0
        %1344 = vmatprep.subr.mxu0 0.0
        %1345 = vmatpush1.xpose.msra.mxu0 0.0
        %1346 = vmatprep.subr.mxu0 0.0
        %1347 = vmatpush1.xpose.msra.mxu0 0.0
        %1348 = vmatprep.subr.mxu0 0.0
        %1349 = vmatpush1.xpose.msra.mxu0 %v1318
        %1350 = vmatprep.subr.mxu0 0.0
        %1351 = vmatpush1.xpose.msra.mxu0 %v1315
        %1352 = vmatprep.subr.mxu0 0.0
        %1353 = vmatpush2.xpose.msra.mxu0 0.0
        %1354 = vmatprep.subr.mxu0 0.0
        %1355 = vmatpush2.xpose.msra.mxu0 0.0
        %1356 = vmatprep.subr.mxu0 0.0
        %1357 = vmatpush2.xpose.msra.mxu0 0.0
        %1358 = vmatprep.subr.mxu0 0.0
        %1359 = vmatpush2.xpose.msra.mxu0 0.0
        %1360 = vmatprep.subr.mxu0 0.0
        %1361 = vmatpush2.xpose.msra.mxu0 0.0
        %1362 = vmatprep.subr.mxu0 0.0
        %1363 = vmatpush2.xpose.msra.mxu0 0.0
        %1364 = vmatprep.subr.mxu0 0.0
        %1365 = vmatpush2.xpose.msra.mxu0 0.0
        %1366 = vmatprep.subr.mxu0 0.0
        %1367 = vmatpush2.xpose.msra.mxu0 0.0
        %1368 = vmatprep.subr.mxu0 0.0
        %1369 = vmatpush2.xpose.msra.mxu0 0.0
        %1370 = vmatprep.subr.mxu0 0.0
        %1371 = vmatpush2.xpose.msra.mxu0 0.0
        %1372 = vmatprep.subr.mxu0 0.0
        %1373 = vmatpush2.xpose.msra.mxu0 0.0
        %1374 = vmatprep.subr.mxu0 0.0
        %1375 = vmatpush2.xpose.msra.mxu0 0.0
        %1376 = vmatprep.subr.mxu0 0.0
        %1377 = vmatpush2.xpose.msra.mxu0 0.0
        %1378 = vmatprep.subr.mxu0 0.0
        %1379 = vmatpush2.xpose.msra.mxu0 0.0
        %1380 = vmatprep.subr.mxu0 0.0
        %1381 = vmatpush2.xpose.msra.mxu0 0.0
        %1382 = vmatprep.subr.mxu0 0.0
        %1383 = vmatpush2.xpose.msra.mxu0 0.0
        %1384 = vmatprep.mubr.f32.mxu0 0.0
        %1385 = vmatmul.mubr.f32.gmra.mxu0 %v702
        %v1386 = vpop.f32.mrf.mxu0
        %v1387 = vadd.f32 0.0, %v1386
        %v1388 = vpop.f32.mrf.mxu0
        %1389 = vmatprep.mubr.f32.mxu0 0.0
        %1390 = vmatmul.mubr.f32.gmra.mxu0 %v705
        %v1391 = vpop.f32.mrf.mxu0
        %v1392 = vadd.f32 0.0, %v1391
        %v1393 = vpop.f32.mrf.mxu0
        %1394 = vdwg.mxu0
        %s1395 = scalar_lea.vmem [#allocation4], 48
        %1396 = vst.msk [vmem:[%s1395] sm:$0xff] %vm788, %v1387
        %1397 = vst.msk [vmem:[%s1395 + $0x8] sm:$0xff] %vm788, %v1392
        %v1398 = vld [vmem:[#allocation2] sm:$0xff]
        %v1399 = vld [vmem:[#allocation2 + $0x8] sm:$0xff]
        %v1400 = vld [vmem:[#allocation2 + $0x10] sm:$0xff]
        %v1401 = vld [vmem:[#allocation2 + $0x18] sm:$0xff]
        %v1402 = vld [vmem:[#allocation3] sm:$0xff]
        %v1403 = vld [vmem:[#allocation3 + $0x8] sm:$0xff]
        %v1404 = vld [vmem:[#allocation3 + $0x10] sm:$0xff]
        %v1405 = vld [vmem:[#allocation3 + $0x18] sm:$0xff]
        %v1406 = vld [vmem:[#allocation3 + $0x20] sm:$0xff]
        %v1407 = vld [vmem:[#allocation3 + $0x28] sm:$0xff]
        %v1408 = vld [vmem:[#allocation3 + $0x30] sm:$0xff]
        %v1409 = vld [vmem:[#allocation3 + $0x38] sm:$0xff]
        %v1410 = vld [vmem:[#allocation4] sm:$0xff]
        %v1411 = vld [vmem:[#allocation4 + $0x8] sm:$0xff]
        %v1412 = vld [vmem:[#allocation4 + $0x10] sm:$0xff]
        %v1413 = vld [vmem:[#allocation4 + $0x18] sm:$0xff]
        %v1414 = vld [vmem:[#allocation4 + $0x20] sm:$0xff]
        %v1415 = vld [vmem:[#allocation4 + $0x28] sm:$0xff]
        %v1416 = vld [vmem:[#allocation4 + $0x30] sm:$0xff]
        %v1417 = vld [vmem:[#allocation4 + $0x38] sm:$0xff]
        %v1419 = vsel %vm788, %v1398, 0
        %v1422 = vsel %vm788, %v1402, 0
        %v1425 = vsel %vm788, %v1403, 0
        %1427 = vmatprep.subr.mxu0 0.0
        %1428 = vmatpush1.xpose.msra.mxu0 0.0
        %1429 = vmatprep.subr.mxu0 0.0
        %1430 = vmatpush1.xpose.msra.mxu0 0.0
        %1431 = vmatprep.subr.mxu0 0.0
        %1432 = vmatpush1.xpose.msra.mxu0 0.0
        %1433 = vmatprep.subr.mxu0 0.0
        %1434 = vmatpush1.xpose.msra.mxu0 0.0
        %1435 = vmatprep.subr.mxu0 0.0
        %1436 = vmatpush1.xpose.msra.mxu0 0.0
        %1437 = vmatprep.subr.mxu0 0.0
        %1438 = vmatpush1.xpose.msra.mxu0 0.0
        %1439 = vmatprep.subr.mxu0 0.0
        %1440 = vmatpush1.xpose.msra.mxu0 0.0
        %1441 = vmatprep.subr.mxu0 0.0
        %1442 = vmatpush1.xpose.msra.mxu0 0.0
        %1443 = vmatprep.subr.mxu0 0.0
        %1444 = vmatpush1.xpose.msra.mxu0 0.0
        %1445 = vmatprep.subr.mxu0 0.0
        %1446 = vmatpush1.xpose.msra.mxu0 0.0
        %1447 = vmatprep.subr.mxu0 0.0
        %1448 = vmatpush1.xpose.msra.mxu0 0.0
        %1449 = vmatprep.subr.mxu0 0.0
        %1450 = vmatpush1.xpose.msra.mxu0 0.0
        %1451 = vmatprep.subr.mxu0 0.0
        %1452 = vmatpush1.xpose.msra.mxu0 0.0
        %1453 = vmatprep.subr.mxu0 0.0
        %1454 = vmatpush1.xpose.msra.mxu0 0.0
        %1455 = vmatprep.subr.mxu0 0.0
        %1456 = vmatpush1.xpose.msra.mxu0 %v1425
        %1457 = vmatprep.subr.mxu0 0.0
        %1458 = vmatpush1.xpose.msra.mxu0 %v1422
        %1459 = vmatprep.subr.mxu0 0.0
        %1460 = vmatpush2.xpose.msra.mxu0 0.0
        %1461 = vmatprep.subr.mxu0 0.0
        %1462 = vmatpush2.xpose.msra.mxu0 0.0
        %1463 = vmatprep.subr.mxu0 0.0
        %1464 = vmatpush2.xpose.msra.mxu0 0.0
        %1465 = vmatprep.subr.mxu0 0.0
        %1466 = vmatpush2.xpose.msra.mxu0 0.0
        %1467 = vmatprep.subr.mxu0 0.0
        %1468 = vmatpush2.xpose.msra.mxu0 0.0
        %1469 = vmatprep.subr.mxu0 0.0
        %1470 = vmatpush2.xpose.msra.mxu0 0.0
        %1471 = vmatprep.subr.mxu0 0.0
        %1472 = vmatpush2.xpose.msra.mxu0 0.0
        %1473 = vmatprep.subr.mxu0 0.0
        %1474 = vmatpush2.xpose.msra.mxu0 0.0
        %1475 = vmatprep.subr.mxu0 0.0
        %1476 = vmatpush2.xpose.msra.mxu0 0.0
        %1477 = vmatprep.subr.mxu0 0.0
        %1478 = vmatpush2.xpose.msra.mxu0 0.0
        %1479 = vmatprep.subr.mxu0 0.0
        %1480 = vmatpush2.xpose.msra.mxu0 0.0
        %1481 = vmatprep.subr.mxu0 0.0
        %1482 = vmatpush2.xpose.msra.mxu0 0.0
        %1483 = vmatprep.subr.mxu0 0.0
        %1484 = vmatpush2.xpose.msra.mxu0 0.0
        %1485 = vmatprep.subr.mxu0 0.0
        %1486 = vmatpush2.xpose.msra.mxu0 0.0
        %1487 = vmatprep.subr.mxu0 0.0
        %1488 = vmatpush2.xpose.msra.mxu0 0.0
        %1489 = vmatprep.subr.mxu0 0.0
        %1490 = vmatpush2.xpose.msra.mxu0 0.0
        %1491 = vmatprep.mubr.f32.mxu0 0.0
        %1492 = vmatmul.mubr.f32.gmra.mxu0 %v1419
        %v1493 = vpop.f32.mrf.mxu0
        %v1494 = vadd.f32 0.0, %v1493
        %v1495 = vpop.f32.mrf.mxu0
        %1496 = vdwg.mxu0
        %v1498 = vsel %vm788, %v1399, 0
        %v1501 = vsel %vm788, %v1404, 0
        %v1504 = vsel %vm788, %v1405, 0
        %1506 = vmatprep.subr.mxu0 0.0
        %1507 = vmatpush1.xpose.msra.mxu0 0.0
        %1508 = vmatprep.subr.mxu0 0.0
        %1509 = vmatpush1.xpose.msra.mxu0 0.0
        %1510 = vmatprep.subr.mxu0 0.0
        %1511 = vmatpush1.xpose.msra.mxu0 0.0
        %1512 = vmatprep.subr.mxu0 0.0
        %1513 = vmatpush1.xpose.msra.mxu0 0.0
        %1514 = vmatprep.subr.mxu0 0.0
        %1515 = vmatpush1.xpose.msra.mxu0 0.0
        %1516 = vmatprep.subr.mxu0 0.0
        %1517 = vmatpush1.xpose.msra.mxu0 0.0
        %1518 = vmatprep.subr.mxu0 0.0
        %1519 = vmatpush1.xpose.msra.mxu0 0.0
        %1520 = vmatprep.subr.mxu0 0.0
        %1521 = vmatpush1.xpose.msra.mxu0 0.0
        %1522 = vmatprep.subr.mxu0 0.0
        %1523 = vmatpush1.xpose.msra.mxu0 0.0
        %1524 = vmatprep.subr.mxu0 0.0
        %1525 = vmatpush1.xpose.msra.mxu0 0.0
        %1526 = vmatprep.subr.mxu0 0.0
        %1527 = vmatpush1.xpose.msra.mxu0 0.0
        %1528 = vmatprep.subr.mxu0 0.0
        %1529 = vmatpush1.xpose.msra.mxu0 0.0
        %1530 = vmatprep.subr.mxu0 0.0
        %1531 = vmatpush1.xpose.msra.mxu0 0.0
        %1532 = vmatprep.subr.mxu0 0.0
        %1533 = vmatpush1.xpose.msra.mxu0 0.0
        %1534 = vmatprep.subr.mxu0 0.0
        %1535 = vmatpush1.xpose.msra.mxu0 %v1504
        %1536 = vmatprep.subr.mxu0 0.0
        %1537 = vmatpush1.xpose.msra.mxu0 %v1501
        %1538 = vmatprep.subr.mxu0 0.0
        %1539 = vmatpush2.xpose.msra.mxu0 0.0
        %1540 = vmatprep.subr.mxu0 0.0
        %1541 = vmatpush2.xpose.msra.mxu0 0.0
        %1542 = vmatprep.subr.mxu0 0.0
        %1543 = vmatpush2.xpose.msra.mxu0 0.0
        %1544 = vmatprep.subr.mxu0 0.0
        %1545 = vmatpush2.xpose.msra.mxu0 0.0
        %1546 = vmatprep.subr.mxu0 0.0
        %1547 = vmatpush2.xpose.msra.mxu0 0.0
        %1548 = vmatprep.subr.mxu0 0.0
        %1549 = vmatpush2.xpose.msra.mxu0 0.0
        %1550 = vmatprep.subr.mxu0 0.0
        %1551 = vmatpush2.xpose.msra.mxu0 0.0
        %1552 = vmatprep.subr.mxu0 0.0
        %1553 = vmatpush2.xpose.msra.mxu0 0.0
        %1554 = vmatprep.subr.mxu0 0.0
        %1555 = vmatpush2.xpose.msra.mxu0 0.0
        %1556 = vmatprep.subr.mxu0 0.0
        %1557 = vmatpush2.xpose.msra.mxu0 0.0
        %1558 = vmatprep.subr.mxu0 0.0
        %1559 = vmatpush2.xpose.msra.mxu0 0.0
        %1560 = vmatprep.subr.mxu0 0.0
        %1561 = vmatpush2.xpose.msra.mxu0 0.0
        %1562 = vmatprep.subr.mxu0 0.0
        %1563 = vmatpush2.xpose.msra.mxu0 0.0
        %1564 = vmatprep.subr.mxu0 0.0
        %1565 = vmatpush2.xpose.msra.mxu0 0.0
        %1566 = vmatprep.subr.mxu0 0.0
        %1567 = vmatpush2.xpose.msra.mxu0 0.0
        %1568 = vmatprep.subr.mxu0 0.0
        %1569 = vmatpush2.xpose.msra.mxu0 0.0
        %1570 = vmatprep.mubr.f32.mxu0 0.0
        %1571 = vmatmul.mubr.f32.gmra.mxu0 %v1498
        %v1572 = vpop.f32.mrf.mxu0
        %v1573 = vadd.f32 0.0, %v1572
        %v1574 = vpop.f32.mrf.mxu0
        %1575 = vdwg.mxu0
        %v1577 = vsel %vm788, %v1400, 0
        %v1580 = vsel %vm788, %v1406, 0
        %v1583 = vsel %vm788, %v1407, 0
        %1585 = vmatprep.subr.mxu0 0.0
        %1586 = vmatpush1.xpose.msra.mxu0 0.0
        %1587 = vmatprep.subr.mxu0 0.0
        %1588 = vmatpush1.xpose.msra.mxu0 0.0
        %1589 = vmatprep.subr.mxu0 0.0
        %1590 = vmatpush1.xpose.msra.mxu0 0.0
        %1591 = vmatprep.subr.mxu0 0.0
        %1592 = vmatpush1.xpose.msra.mxu0 0.0
        %1593 = vmatprep.subr.mxu0 0.0
        %1594 = vmatpush1.xpose.msra.mxu0 0.0
        %1595 = vmatprep.subr.mxu0 0.0
        %1596 = vmatpush1.xpose.msra.mxu0 0.0
        %1597 = vmatprep.subr.mxu0 0.0
        %1598 = vmatpush1.xpose.msra.mxu0 0.0
        %1599 = vmatprep.subr.mxu0 0.0
        %1600 = vmatpush1.xpose.msra.mxu0 0.0
        %1601 = vmatprep.subr.mxu0 0.0
        %1602 = vmatpush1.xpose.msra.mxu0 0.0
        %1603 = vmatprep.subr.mxu0 0.0
        %1604 = vmatpush1.xpose.msra.mxu0 0.0
        %1605 = vmatprep.subr.mxu0 0.0
        %1606 = vmatpush1.xpose.msra.mxu0 0.0
        %1607 = vmatprep.subr.mxu0 0.0
        %1608 = vmatpush1.xpose.msra.mxu0 0.0
        %1609 = vmatprep.subr.mxu0 0.0
        %1610 = vmatpush1.xpose.msra.mxu0 0.0
        %1611 = vmatprep.subr.mxu0 0.0
        %1612 = vmatpush1.xpose.msra.mxu0 0.0
        %1613 = vmatprep.subr.mxu0 0.0
        %1614 = vmatpush1.xpose.msra.mxu0 %v1583
        %1615 = vmatprep.subr.mxu0 0.0
        %1616 = vmatpush1.xpose.msra.mxu0 %v1580
        %1617 = vmatprep.subr.mxu0 0.0
        %1618 = vmatpush2.xpose.msra.mxu0 0.0
        %1619 = vmatprep.subr.mxu0 0.0
        %1620 = vmatpush2.xpose.msra.mxu0 0.0
        %1621 = vmatprep.subr.mxu0 0.0
        %1622 = vmatpush2.xpose.msra.mxu0 0.0
        %1623 = vmatprep.subr.mxu0 0.0
        %1624 = vmatpush2.xpose.msra.mxu0 0.0
        %1625 = vmatprep.subr.mxu0 0.0
        %1626 = vmatpush2.xpose.msra.mxu0 0.0
        %1627 = vmatprep.subr.mxu0 0.0
        %1628 = vmatpush2.xpose.msra.mxu0 0.0
        %1629 = vmatprep.subr.mxu0 0.0
        %1630 = vmatpush2.xpose.msra.mxu0 0.0
        %1631 = vmatprep.subr.mxu0 0.0
        %1632 = vmatpush2.xpose.msra.mxu0 0.0
        %1633 = vmatprep.subr.mxu0 0.0
        %1634 = vmatpush2.xpose.msra.mxu0 0.0
        %1635 = vmatprep.subr.mxu0 0.0
        %1636 = vmatpush2.xpose.msra.mxu0 0.0
        %1637 = vmatprep.subr.mxu0 0.0
        %1638 = vmatpush2.xpose.msra.mxu0 0.0
        %1639 = vmatprep.subr.mxu0 0.0
        %1640 = vmatpush2.xpose.msra.mxu0 0.0
        %1641 = vmatprep.subr.mxu0 0.0
        %1642 = vmatpush2.xpose.msra.mxu0 0.0
        %1643 = vmatprep.subr.mxu0 0.0
        %1644 = vmatpush2.xpose.msra.mxu0 0.0
        %1645 = vmatprep.subr.mxu0 0.0
        %1646 = vmatpush2.xpose.msra.mxu0 0.0
        %1647 = vmatprep.subr.mxu0 0.0
        %1648 = vmatpush2.xpose.msra.mxu0 0.0
        %1649 = vmatprep.mubr.f32.mxu0 0.0
        %1650 = vmatmul.mubr.f32.gmra.mxu0 %v1577
        %v1651 = vpop.f32.mrf.mxu0
        %v1652 = vadd.f32 0.0, %v1651
        %v1653 = vpop.f32.mrf.mxu0
        %1654 = vdwg.mxu0
        %v1656 = vsel %vm788, %v1401, 0
        %v1659 = vsel %vm788, %v1408, 0
        %v1662 = vsel %vm788, %v1409, 0
        %1664 = vmatprep.subr.mxu0 0.0
        %1665 = vmatpush1.xpose.msra.mxu0 0.0
        %1666 = vmatprep.subr.mxu0 0.0
        %1667 = vmatpush1.xpose.msra.mxu0 0.0
        %1668 = vmatprep.subr.mxu0 0.0
        %1669 = vmatpush1.xpose.msra.mxu0 0.0
        %1670 = vmatprep.subr.mxu0 0.0
        %1671 = vmatpush1.xpose.msra.mxu0 0.0
        %1672 = vmatprep.subr.mxu0 0.0
        %1673 = vmatpush1.xpose.msra.mxu0 0.0
        %1674 = vmatprep.subr.mxu0 0.0
        %1675 = vmatpush1.xpose.msra.mxu0 0.0
        %1676 = vmatprep.subr.mxu0 0.0
        %1677 = vmatpush1.xpose.msra.mxu0 0.0
        %1678 = vmatprep.subr.mxu0 0.0
        %1679 = vmatpush1.xpose.msra.mxu0 0.0
        %1680 = vmatprep.subr.mxu0 0.0
        %1681 = vmatpush1.xpose.msra.mxu0 0.0
        %1682 = vmatprep.subr.mxu0 0.0
        %1683 = vmatpush1.xpose.msra.mxu0 0.0
        %1684 = vmatprep.subr.mxu0 0.0
        %1685 = vmatpush1.xpose.msra.mxu0 0.0
        %1686 = vmatprep.subr.mxu0 0.0
        %1687 = vmatpush1.xpose.msra.mxu0 0.0
        %1688 = vmatprep.subr.mxu0 0.0
        %1689 = vmatpush1.xpose.msra.mxu0 0.0
        %1690 = vmatprep.subr.mxu0 0.0
        %1691 = vmatpush1.xpose.msra.mxu0 0.0
        %1692 = vmatprep.subr.mxu0 0.0
        %1693 = vmatpush1.xpose.msra.mxu0 %v1662
        %1694 = vmatprep.subr.mxu0 0.0
        %1695 = vmatpush1.xpose.msra.mxu0 %v1659
        %1696 = vmatprep.subr.mxu0 0.0
        %1697 = vmatpush2.xpose.msra.mxu0 0.0
        %1698 = vmatprep.subr.mxu0 0.0
        %1699 = vmatpush2.xpose.msra.mxu0 0.0
        %1700 = vmatprep.subr.mxu0 0.0
        %1701 = vmatpush2.xpose.msra.mxu0 0.0
        %1702 = vmatprep.subr.mxu0 0.0
        %1703 = vmatpush2.xpose.msra.mxu0 0.0
        %1704 = vmatprep.subr.mxu0 0.0
        %1705 = vmatpush2.xpose.msra.mxu0 0.0
        %1706 = vmatprep.subr.mxu0 0.0
        %1707 = vmatpush2.xpose.msra.mxu0 0.0
        %1708 = vmatprep.subr.mxu0 0.0
        %1709 = vmatpush2.xpose.msra.mxu0 0.0
        %1710 = vmatprep.subr.mxu0 0.0
        %1711 = vmatpush2.xpose.msra.mxu0 0.0
        %1712 = vmatprep.subr.mxu0 0.0
        %1713 = vmatpush2.xpose.msra.mxu0 0.0
        %1714 = vmatprep.subr.mxu0 0.0
        %1715 = vmatpush2.xpose.msra.mxu0 0.0
        %1716 = vmatprep.subr.mxu0 0.0
        %1717 = vmatpush2.xpose.msra.mxu0 0.0
        %1718 = vmatprep.subr.mxu0 0.0
        %1719 = vmatpush2.xpose.msra.mxu0 0.0
        %1720 = vmatprep.subr.mxu0 0.0
        %1721 = vmatpush2.xpose.msra.mxu0 0.0
        %1722 = vmatprep.subr.mxu0 0.0
        %1723 = vmatpush2.xpose.msra.mxu0 0.0
        %1724 = vmatprep.subr.mxu0 0.0
        %1725 = vmatpush2.xpose.msra.mxu0 0.0
        %1726 = vmatprep.subr.mxu0 0.0
        %1727 = vmatpush2.xpose.msra.mxu0 0.0
        %1728 = vmatprep.mubr.f32.mxu0 0.0
        %1729 = vmatmul.mubr.f32.gmra.mxu0 %v1656
        %v1730 = vpop.f32.mrf.mxu0
        %v1731 = vadd.f32 0.0, %v1730
        %v1732 = vpop.f32.mrf.mxu0
        %1733 = vdwg.mxu0
        %v1734 = vld [vmem:[#allocation5] sm:$0xff]
        %v1735 = vld [vmem:[#allocation5 + $0x8] sm:$0xff]
        %v1736 = vld [vmem:[#allocation5 + $0x10] sm:$0xff]
        %v1737 = vld [vmem:[#allocation5 + $0x18] sm:$0xff]
        %v1738 = vsel %vm788, %v1494, -inf
        %1739 = vmax.xlane.f32.xlu0 %v1738
        %v1740 = vpop.xlane.xlu0 %1739
        %v1741 = vsel %vm788, %v1573, -inf
        %1742 = vmax.xlane.f32.xlu0 %v1741
        %v1743 = vpop.xlane.xlu0 %1742
        %v1744 = vsel %vm788, %v1652, -inf
        %1745 = vmax.xlane.f32.xlu0 %v1744
        %v1746 = vpop.xlane.xlu0 %1745
        %v1747 = vsel %vm788, %v1731, -inf
        %1748 = vmax.xlane.f32.xlu0 %v1747
        %v1749 = vpop.xlane.xlu0 %1748
        %v1750 = vmax.f32 %v1734, %v1740
        %v1751 = vmax.f32 %v1735, %v1743
        %v1752 = vmax.f32 %v1736, %v1746
        %v1753 = vmax.f32 %v1737, %v1749
        %v1754 = vsub.f32 %v1734, %v1750
        %v1755 = vsub.f32 %v1735, %v1751
        %v1756 = vsub.f32 %v1736, %v1752
        %v1757 = vsub.f32 %v1737, %v1753
        %v1758 = vmul.f32 %v1754, 1.442695
        %v1759 = vpow.pop %v1758
        %v1760 = vmul.f32 %v1755, 1.442695
        %v1761 = vpow.pop %v1760
        %v1762 = vmul.f32 %v1756, 1.442695
        %v1763 = vpow.pop %v1762
        %v1764 = vmul.f32 %v1757, 1.442695
        %v1765 = vpow.pop %v1764
        %1767 = vset.pattern.permute.xlu0 0
        %1768 = vperm.xlu0 %1767, %v1750
        %v1769 = vpop.permute.xlu0 %1768
        %1772 = vset.pattern.permute.xlu0 0
        %1773 = vperm.xlu0 %1772, %v1751
        %v1774 = vpop.permute.xlu0 %1773
        %1777 = vset.pattern.permute.xlu0 0
        %1778 = vperm.xlu0 %1777, %v1752
        %v1779 = vpop.permute.xlu0 %1778
        %1782 = vset.pattern.permute.xlu0 0
        %1783 = vperm.xlu0 %1782, %v1753
        %v1784 = vpop.permute.xlu0 %1783
        %v1786 = vsub.f32 %v1494, %v1769
        %v1787 = vsub.f32 %v1573, %v1774
        %v1788 = vsub.f32 %v1652, %v1779
        %v1789 = vsub.f32 %v1731, %v1784
        %v1790 = vmul.f32 %v1786, 1.442695
        %v1791 = vpow.pop %v1790
        %v1792 = vmul.f32 %v1787, 1.442695
        %v1793 = vpow.pop %v1792
        %v1794 = vmul.f32 %v1788, 1.442695
        %v1795 = vpow.pop %v1794
        %v1796 = vmul.f32 %v1789, 1.442695
        %v1797 = vpow.pop %v1796
        %v1798 = vld [vmem:[#allocation6] sm:$0xff]
        %v1799 = vld [vmem:[#allocation6 + $0x8] sm:$0xff]
        %v1800 = vld [vmem:[#allocation6 + $0x10] sm:$0xff]
        %v1801 = vld [vmem:[#allocation6 + $0x18] sm:$0xff]
        %v1802 = vmul.f32 %v1759, %v1798
        %v1803 = vmul.f32 %v1761, %v1799
        %v1804 = vmul.f32 %v1763, %v1800
        %v1805 = vmul.f32 %v1765, %v1801
        %v1806 = vsel %vm788, %v1791, 0.0
        %1807 = vadd.xlane.f32.xlu0 %v1806
        %v1808 = vpop.xlane.xlu0 %1807
        %v1809 = vsel %vm788, %v1793, 0.0
        %1810 = vadd.xlane.f32.xlu0 %v1809
        %v1811 = vpop.xlane.xlu0 %1810
        %v1812 = vsel %vm788, %v1795, 0.0
        %1813 = vadd.xlane.f32.xlu0 %v1812
        %v1814 = vpop.xlane.xlu0 %1813
        %v1815 = vsel %vm788, %v1797, 0.0
        %1816 = vadd.xlane.f32.xlu0 %v1815
        %v1817 = vpop.xlane.xlu0 %1816
        %v1818 = vadd.f32 %v1802, %v1808
        %v1819 = vadd.f32 %v1803, %v1811
        %v1820 = vadd.f32 %v1804, %v1814
        %v1821 = vadd.f32 %v1805, %v1817
        %vm1822 = vcmask 7168
        %1823 = vst.msk [vmem:[#allocation6] sm:$0xff] %vm1822, %v1818
        %1824 = vst.msk [vmem:[#allocation6 + $0x8] sm:$0xff] %vm1822, %v1819
        %1825 = vst.msk [vmem:[#allocation6 + $0x10] sm:$0xff] %vm1822, %v1820
        %1826 = vst.msk [vmem:[#allocation6 + $0x18] sm:$0xff] %vm1822, %v1821
        %v1828 = vsel %vm788, %v1791, 0
        %1830 = vmatprep.subr.mxu0 0.0
        %1831 = vmatpush1.msra.mxu0 0.0
        %1832 = vmatprep.subr.mxu0 0.0
        %1833 = vmatpush1.msra.mxu0 0.0
        %1834 = vmatprep.subr.mxu0 0.0
        %1835 = vmatpush1.msra.mxu0 0.0
        %1836 = vmatprep.subr.mxu0 0.0
        %1837 = vmatpush1.msra.mxu0 0.0
        %1838 = vmatprep.subr.mxu0 0.0
        %1839 = vmatpush1.msra.mxu0 0.0
        %1840 = vmatprep.subr.mxu0 0.0
        %1841 = vmatpush1.msra.mxu0 0.0
        %1842 = vmatprep.subr.mxu0 0.0
        %1843 = vmatpush1.msra.mxu0 0.0
        %1844 = vmatprep.subr.mxu0 0.0
        %1845 = vmatpush1.msra.mxu0 0.0
        %1846 = vmatprep.subr.mxu0 0.0
        %1847 = vmatpush1.msra.mxu0 0.0
        %1848 = vmatprep.subr.mxu0 0.0
        %1849 = vmatpush1.msra.mxu0 0.0
        %1850 = vmatprep.subr.mxu0 0.0
        %1851 = vmatpush1.msra.mxu0 0.0
        %1852 = vmatprep.subr.mxu0 0.0
        %1853 = vmatpush1.msra.mxu0 0.0
        %1854 = vmatprep.subr.mxu0 0.0
        %1855 = vmatpush1.msra.mxu0 0.0
        %1856 = vmatprep.subr.mxu0 0.0
        %1857 = vmatpush1.msra.mxu0 0.0
        %1858 = vmatprep.subr.mxu0 0.0
        %1859 = vmatpush1.msra.mxu0 %v1411
        %1860 = vmatprep.subr.mxu0 0.0
        %1861 = vmatpush1.msra.mxu0 %v1410
        %1862 = vmatprep.subr.mxu0 0.0
        %1863 = vmatpush2.msra.mxu0 0.0
        %1864 = vmatprep.subr.mxu0 0.0
        %1865 = vmatpush2.msra.mxu0 0.0
        %1866 = vmatprep.subr.mxu0 0.0
        %1867 = vmatpush2.msra.mxu0 0.0
        %1868 = vmatprep.subr.mxu0 0.0
        %1869 = vmatpush2.msra.mxu0 0.0
        %1870 = vmatprep.subr.mxu0 0.0
        %1871 = vmatpush2.msra.mxu0 0.0
        %1872 = vmatprep.subr.mxu0 0.0
        %1873 = vmatpush2.msra.mxu0 0.0
        %1874 = vmatprep.subr.mxu0 0.0
        %1875 = vmatpush2.msra.mxu0 0.0
        %1876 = vmatprep.subr.mxu0 0.0
        %1877 = vmatpush2.msra.mxu0 0.0
        %1878 = vmatprep.subr.mxu0 0.0
        %1879 = vmatpush2.msra.mxu0 0.0
        %1880 = vmatprep.subr.mxu0 0.0
        %1881 = vmatpush2.msra.mxu0 0.0
        %1882 = vmatprep.subr.mxu0 0.0
        %1883 = vmatpush2.msra.mxu0 0.0
        %1884 = vmatprep.subr.mxu0 0.0
        %1885 = vmatpush2.msra.mxu0 0.0
        %1886 = vmatprep.subr.mxu0 0.0
        %1887 = vmatpush2.msra.mxu0 0.0
        %1888 = vmatprep.subr.mxu0 0.0
        %1889 = vmatpush2.msra.mxu0 0.0
        %1890 = vmatprep.subr.mxu0 0.0
        %1891 = vmatpush2.msra.mxu0 0.0
        %1892 = vmatprep.subr.mxu0 0.0
        %1893 = vmatpush2.msra.mxu0 0.0
        %1894 = vmatprep.mubr.f32.mxu0 0.0
        %1895 = vmatmul.mubr.f32.gmra.mxu0 %v1828
        %v1896 = vpop.f32.mrf.mxu0
        %v1897 = vadd.f32 0.0, %v1896
        %v1898 = vpop.f32.mrf.mxu0
        %1899 = vdwg.mxu0
        %v1901 = vsel %vm788, %v1793, 0
        %1903 = vmatprep.subr.mxu0 0.0
        %1904 = vmatpush1.msra.mxu0 0.0
        %1905 = vmatprep.subr.mxu0 0.0
        %1906 = vmatpush1.msra.mxu0 0.0
        %1907 = vmatprep.subr.mxu0 0.0
        %1908 = vmatpush1.msra.mxu0 0.0
        %1909 = vmatprep.subr.mxu0 0.0
        %1910 = vmatpush1.msra.mxu0 0.0
        %1911 = vmatprep.subr.mxu0 0.0
        %1912 = vmatpush1.msra.mxu0 0.0
        %1913 = vmatprep.subr.mxu0 0.0
        %1914 = vmatpush1.msra.mxu0 0.0
        %1915 = vmatprep.subr.mxu0 0.0
        %1916 = vmatpush1.msra.mxu0 0.0
        %1917 = vmatprep.subr.mxu0 0.0
        %1918 = vmatpush1.msra.mxu0 0.0
        %1919 = vmatprep.subr.mxu0 0.0
        %1920 = vmatpush1.msra.mxu0 0.0
        %1921 = vmatprep.subr.mxu0 0.0
        %1922 = vmatpush1.msra.mxu0 0.0
        %1923 = vmatprep.subr.mxu0 0.0
        %1924 = vmatpush1.msra.mxu0 0.0
        %1925 = vmatprep.subr.mxu0 0.0
        %1926 = vmatpush1.msra.mxu0 0.0
        %1927 = vmatprep.subr.mxu0 0.0
        %1928 = vmatpush1.msra.mxu0 0.0
        %1929 = vmatprep.subr.mxu0 0.0
        %1930 = vmatpush1.msra.mxu0 0.0
        %1931 = vmatprep.subr.mxu0 0.0
        %1932 = vmatpush1.msra.mxu0 %v1413
        %1933 = vmatprep.subr.mxu0 0.0
        %1934 = vmatpush1.msra.mxu0 %v1412
        %1935 = vmatprep.subr.mxu0 0.0
        %1936 = vmatpush2.msra.mxu0 0.0
        %1937 = vmatprep.subr.mxu0 0.0
        %1938 = vmatpush2.msra.mxu0 0.0
        %1939 = vmatprep.subr.mxu0 0.0
        %1940 = vmatpush2.msra.mxu0 0.0
        %1941 = vmatprep.subr.mxu0 0.0
        %1942 = vmatpush2.msra.mxu0 0.0
        %1943 = vmatprep.subr.mxu0 0.0
        %1944 = vmatpush2.msra.mxu0 0.0
        %1945 = vmatprep.subr.mxu0 0.0
        %1946 = vmatpush2.msra.mxu0 0.0
        %1947 = vmatprep.subr.mxu0 0.0
        %1948 = vmatpush2.msra.mxu0 0.0
        %1949 = vmatprep.subr.mxu0 0.0
        %1950 = vmatpush2.msra.mxu0 0.0
        %1951 = vmatprep.subr.mxu0 0.0
        %1952 = vmatpush2.msra.mxu0 0.0
        %1953 = vmatprep.subr.mxu0 0.0
        %1954 = vmatpush2.msra.mxu0 0.0
        %1955 = vmatprep.subr.mxu0 0.0
        %1956 = vmatpush2.msra.mxu0 0.0
        %1957 = vmatprep.subr.mxu0 0.0
        %1958 = vmatpush2.msra.mxu0 0.0
        %1959 = vmatprep.subr.mxu0 0.0
        %1960 = vmatpush2.msra.mxu0 0.0
        %1961 = vmatprep.subr.mxu0 0.0
        %1962 = vmatpush2.msra.mxu0 0.0
        %1963 = vmatprep.subr.mxu0 0.0
        %1964 = vmatpush2.msra.mxu0 0.0
        %1965 = vmatprep.subr.mxu0 0.0
        %1966 = vmatpush2.msra.mxu0 0.0
        %1967 = vmatprep.mubr.f32.mxu0 0.0
        %1968 = vmatmul.mubr.f32.gmra.mxu0 %v1901
        %v1969 = vpop.f32.mrf.mxu0
        %v1970 = vadd.f32 0.0, %v1969
        %v1971 = vpop.f32.mrf.mxu0
        %1972 = vdwg.mxu0
        %v1974 = vsel %vm788, %v1795, 0
        %1976 = vmatprep.subr.mxu0 0.0
        %1977 = vmatpush1.msra.mxu0 0.0
        %1978 = vmatprep.subr.mxu0 0.0
        %1979 = vmatpush1.msra.mxu0 0.0
        %1980 = vmatprep.subr.mxu0 0.0
        %1981 = vmatpush1.msra.mxu0 0.0
        %1982 = vmatprep.subr.mxu0 0.0
        %1983 = vmatpush1.msra.mxu0 0.0
        %1984 = vmatprep.subr.mxu0 0.0
        %1985 = vmatpush1.msra.mxu0 0.0
        %1986 = vmatprep.subr.mxu0 0.0
        %1987 = vmatpush1.msra.mxu0 0.0
        %1988 = vmatprep.subr.mxu0 0.0
        %1989 = vmatpush1.msra.mxu0 0.0
        %1990 = vmatprep.subr.mxu0 0.0
        %1991 = vmatpush1.msra.mxu0 0.0
        %1992 = vmatprep.subr.mxu0 0.0
        %1993 = vmatpush1.msra.mxu0 0.0
        %1994 = vmatprep.subr.mxu0 0.0
        %1995 = vmatpush1.msra.mxu0 0.0
        %1996 = vmatprep.subr.mxu0 0.0
        %1997 = vmatpush1.msra.mxu0 0.0
        %1998 = vmatprep.subr.mxu0 0.0
        %1999 = vmatpush1.msra.mxu0 0.0
        %2000 = vmatprep.subr.mxu0 0.0
        %2001 = vmatpush1.msra.mxu0 0.0
        %2002 = vmatprep.subr.mxu0 0.0
        %2003 = vmatpush1.msra.mxu0 0.0
        %2004 = vmatprep.subr.mxu0 0.0
        %2005 = vmatpush1.msra.mxu0 %v1415
        %2006 = vmatprep.subr.mxu0 0.0
        %2007 = vmatpush1.msra.mxu0 %v1414
        %2008 = vmatprep.subr.mxu0 0.0
        %2009 = vmatpush2.msra.mxu0 0.0
        %2010 = vmatprep.subr.mxu0 0.0
        %2011 = vmatpush2.msra.mxu0 0.0
        %2012 = vmatprep.subr.mxu0 0.0
        %2013 = vmatpush2.msra.mxu0 0.0
        %2014 = vmatprep.subr.mxu0 0.0
        %2015 = vmatpush2.msra.mxu0 0.0
        %2016 = vmatprep.subr.mxu0 0.0
        %2017 = vmatpush2.msra.mxu0 0.0
        %2018 = vmatprep.subr.mxu0 0.0
        %2019 = vmatpush2.msra.mxu0 0.0
        %2020 = vmatprep.subr.mxu0 0.0
        %2021 = vmatpush2.msra.mxu0 0.0
        %2022 = vmatprep.subr.mxu0 0.0
        %2023 = vmatpush2.msra.mxu0 0.0
        %2024 = vmatprep.subr.mxu0 0.0
        %2025 = vmatpush2.msra.mxu0 0.0
        %2026 = vmatprep.subr.mxu0 0.0
        %2027 = vmatpush2.msra.mxu0 0.0
        %2028 = vmatprep.subr.mxu0 0.0
        %2029 = vmatpush2.msra.mxu0 0.0
        %2030 = vmatprep.subr.mxu0 0.0
        %2031 = vmatpush2.msra.mxu0 0.0
        %2032 = vmatprep.subr.mxu0 0.0
        %2033 = vmatpush2.msra.mxu0 0.0
        %2034 = vmatprep.subr.mxu0 0.0
        %2035 = vmatpush2.msra.mxu0 0.0
        %2036 = vmatprep.subr.mxu0 0.0
        %2037 = vmatpush2.msra.mxu0 0.0
        %2038 = vmatprep.subr.mxu0 0.0
        %2039 = vmatpush2.msra.mxu0 0.0
        %2040 = vmatprep.mubr.f32.mxu0 0.0
        %2041 = vmatmul.mubr.f32.gmra.mxu0 %v1974
        %v2042 = vpop.f32.mrf.mxu0
        %v2043 = vadd.f32 0.0, %v2042
        %v2044 = vpop.f32.mrf.mxu0
        %2045 = vdwg.mxu0
        %v2047 = vsel %vm788, %v1797, 0
        %2049 = vmatprep.subr.mxu0 0.0
        %2050 = vmatpush1.msra.mxu0 0.0
        %2051 = vmatprep.subr.mxu0 0.0
        %2052 = vmatpush1.msra.mxu0 0.0
        %2053 = vmatprep.subr.mxu0 0.0
        %2054 = vmatpush1.msra.mxu0 0.0
        %2055 = vmatprep.subr.mxu0 0.0
        %2056 = vmatpush1.msra.mxu0 0.0
        %2057 = vmatprep.subr.mxu0 0.0
        %2058 = vmatpush1.msra.mxu0 0.0
        %2059 = vmatprep.subr.mxu0 0.0
        %2060 = vmatpush1.msra.mxu0 0.0
        %2061 = vmatprep.subr.mxu0 0.0
        %2062 = vmatpush1.msra.mxu0 0.0
        %2063 = vmatprep.subr.mxu0 0.0
        %2064 = vmatpush1.msra.mxu0 0.0
        %2065 = vmatprep.subr.mxu0 0.0
        %2066 = vmatpush1.msra.mxu0 0.0
        %2067 = vmatprep.subr.mxu0 0.0
        %2068 = vmatpush1.msra.mxu0 0.0
        %2069 = vmatprep.subr.mxu0 0.0
        %2070 = vmatpush1.msra.mxu0 0.0
        %2071 = vmatprep.subr.mxu0 0.0
        %2072 = vmatpush1.msra.mxu0 0.0
        %2073 = vmatprep.subr.mxu0 0.0
        %2074 = vmatpush1.msra.mxu0 0.0
        %2075 = vmatprep.subr.mxu0 0.0
        %2076 = vmatpush1.msra.mxu0 0.0
        %2077 = vmatprep.subr.mxu0 0.0
        %2078 = vmatpush1.msra.mxu0 %v1417
        %2079 = vmatprep.subr.mxu0 0.0
        %2080 = vmatpush1.msra.mxu0 %v1416
        %2081 = vmatprep.subr.mxu0 0.0
        %2082 = vmatpush2.msra.mxu0 0.0
        %2083 = vmatprep.subr.mxu0 0.0
        %2084 = vmatpush2.msra.mxu0 0.0
        %2085 = vmatprep.subr.mxu0 0.0
        %2086 = vmatpush2.msra.mxu0 0.0
        %2087 = vmatprep.subr.mxu0 0.0
        %2088 = vmatpush2.msra.mxu0 0.0
        %2089 = vmatprep.subr.mxu0 0.0
        %2090 = vmatpush2.msra.mxu0 0.0
        %2091 = vmatprep.subr.mxu0 0.0
        %2092 = vmatpush2.msra.mxu0 0.0
        %2093 = vmatprep.subr.mxu0 0.0
        %2094 = vmatpush2.msra.mxu0 0.0
        %2095 = vmatprep.subr.mxu0 0.0
        %2096 = vmatpush2.msra.mxu0 0.0
        %2097 = vmatprep.subr.mxu0 0.0
        %2098 = vmatpush2.msra.mxu0 0.0
        %2099 = vmatprep.subr.mxu0 0.0
        %2100 = vmatpush2.msra.mxu0 0.0
        %2101 = vmatprep.subr.mxu0 0.0
        %2102 = vmatpush2.msra.mxu0 0.0
        %2103 = vmatprep.subr.mxu0 0.0
        %2104 = vmatpush2.msra.mxu0 0.0
        %2105 = vmatprep.subr.mxu0 0.0
        %2106 = vmatpush2.msra.mxu0 0.0
        %2107 = vmatprep.subr.mxu0 0.0
        %2108 = vmatpush2.msra.mxu0 0.0
        %2109 = vmatprep.subr.mxu0 0.0
        %2110 = vmatpush2.msra.mxu0 0.0
        %2111 = vmatprep.subr.mxu0 0.0
        %2112 = vmatpush2.msra.mxu0 0.0
        %2113 = vmatprep.mubr.f32.mxu0 0.0
        %2114 = vmatmul.mubr.f32.gmra.mxu0 %v2047
        %v2115 = vpop.f32.mrf.mxu0
        %v2116 = vadd.f32 0.0, %v2115
        %v2117 = vpop.f32.mrf.mxu0
        %2118 = vdwg.mxu0
        %v2119 = vld [vmem:[#allocation7] sm:$0xff]
        %v2120 = vld [vmem:[#allocation7 + $0x8] sm:$0xff]
        %v2121 = vld [vmem:[#allocation7 + $0x10] sm:$0xff]
        %v2122 = vld [vmem:[#allocation7 + $0x18] sm:$0xff]
        %2124 = vset.pattern.permute.xlu0 0
        %2125 = vperm.xlu0 %2124, %v1759
        %v2126 = vpop.permute.xlu0 %2125
        %2129 = vset.pattern.permute.xlu0 0
        %2130 = vperm.xlu0 %2129, %v1761
        %v2131 = vpop.permute.xlu0 %2130
        %2134 = vset.pattern.permute.xlu0 0
        %2135 = vperm.xlu0 %2134, %v1763
        %v2136 = vpop.permute.xlu0 %2135
        %2139 = vset.pattern.permute.xlu0 0
        %2140 = vperm.xlu0 %2139, %v1765
        %v2141 = vpop.permute.xlu0 %2140
        %v2143 = vmul.f32 %v2126, %v2119
        %v2144 = vmul.f32 %v2131, %v2120
        %v2145 = vmul.f32 %v2136, %v2121
        %v2146 = vmul.f32 %v2141, %v2122
        %v2147 = vadd.f32 %v2143, %v1897
        %v2148 = vadd.f32 %v2144, %v1970
        %v2149 = vadd.f32 %v2145, %v2043
        %v2150 = vadd.f32 %v2146, %v2116
        %2151 = vst.msk [vmem:[#allocation7] sm:$0xff] %vm788, %v2147
        %2152 = vst.msk [vmem:[#allocation7 + $0x8] sm:$0xff] %vm788, %v2148
        %2153 = vst.msk [vmem:[#allocation7 + $0x10] sm:$0xff] %vm788, %v2149
        %2154 = vst.msk [vmem:[#allocation7 + $0x18] sm:$0xff] %vm788, %v2150
        %2155 = vst.msk [vmem:[#allocation5] sm:$0xff] %vm1822, %v1750
        %2156 = vst.msk [vmem:[#allocation5 + $0x8] sm:$0xff] %vm1822, %v1751
        %2157 = vst.msk [vmem:[#allocation5 + $0x10] sm:$0xff] %vm1822, %v1752
        %2158 = vst.msk [vmem:[#allocation5 + $0x18] sm:$0xff] %vm1822, %v1753
        // Predicated region
        $region61: #{tpu_custom_call.1} parent=47 // pred_check
          %p2159 = pneg %p351
        $region62: #{tpu_custom_call.1} parent=47 // pred_check_branch
          %2161 = sbr.rel (%p2159) target = $region64
        $region63: #{tpu_custom_call.1} parent=47 // pred_region
          %v2162 = vld [vmem:[#allocation6] sm:$0xff]
          %v2163 = vld [vmem:[#allocation6 + $0x8] sm:$0xff]
          %v2164 = vld [vmem:[#allocation6 + $0x10] sm:$0xff]
          %v2165 = vld [vmem:[#allocation6 + $0x18] sm:$0xff]
          %v2166 = vrcp.pop %v2162
          %v2167 = vrcp.pop %v2163
          %v2168 = vrcp.pop %v2164
          %v2169 = vrcp.pop %v2165
          %v2170 = vld [vmem:[#allocation7] sm:$0xff]
          %v2171 = vld [vmem:[#allocation7 + $0x8] sm:$0xff]
          %v2172 = vld [vmem:[#allocation7 + $0x10] sm:$0xff]
          %v2173 = vld [vmem:[#allocation7 + $0x18] sm:$0xff]
          %2175 = vset.pattern.permute.xlu0 0
          %2176 = vperm.xlu0 %2175, %v2166
          %v2177 = vpop.permute.xlu0 %2176
          %2180 = vset.pattern.permute.xlu0 0
          %2181 = vperm.xlu0 %2180, %v2167
          %v2182 = vpop.permute.xlu0 %2181
          %2185 = vset.pattern.permute.xlu0 0
          %2186 = vperm.xlu0 %2185, %v2168
          %v2187 = vpop.permute.xlu0 %2186
          %2190 = vset.pattern.permute.xlu0 0
          %2191 = vperm.xlu0 %2190, %v2169
          %v2192 = vpop.permute.xlu0 %2191
          %v2194 = vmul.f32 %v2170, %v2177
          %v2195 = vmul.f32 %v2171, %v2182
          %v2196 = vmul.f32 %v2172, %v2187
          %v2197 = vmul.f32 %v2173, %v2192
          %v2198 = vld [vmem:[%s5] sm:$0xff]
          %v2199 = vld [vmem:[%s5 + $0x8] sm:$0xff]
          %v2200 = vld [vmem:[%s5 + $0x10] sm:$0xff]
          %v2201 = vld [vmem:[%s5 + $0x18] sm:$0xff]
          %v2202 = vld [vmem:[%s5 + $0x20] sm:$0xff]
          %v2203 = vld [vmem:[%s5 + $0x28] sm:$0xff]
          %v2204 = vld [vmem:[%s5 + $0x30] sm:$0xff]
          %v2205 = vld [vmem:[%s5 + $0x38] sm:$0xff]
          %v2206 = vld [vmem:[%s5 + $0x40] sm:$0xff]
          %v2207 = vld [vmem:[%s5 + $0x48] sm:$0xff]
          %v2208 = vld [vmem:[%s5 + $0x50] sm:$0xff]
          %v2209 = vld [vmem:[%s5 + $0x58] sm:$0xff]
          %v2210 = vld [vmem:[%s5 + $0x60] sm:$0xff]
          %v2211 = vld [vmem:[%s5 + $0x68] sm:$0xff]
          %v2212 = vld [vmem:[%s5 + $0x70] sm:$0xff]
          %v2213 = vld [vmem:[%s5 + $0x78] sm:$0xff]
          %v2215 = vsel %vm788, %v2194, 0
          %v2218 = vsel %vm788, %v2198, 0
          %v2221 = vsel %vm788, %v2199, 0
          %v2224 = vsel %vm788, %v2200, 0
          %v2227 = vsel %vm788, %v2201, 0
          %2229 = vmatprep.subr.mxu0 0.0
          %2230 = vmatpush1.xpose.msra.mxu0 0.0
          %2231 = vmatprep.subr.mxu0 0.0
          %2232 = vmatpush1.xpose.msra.mxu0 0.0
          %2233 = vmatprep.subr.mxu0 0.0
          %2234 = vmatpush1.xpose.msra.mxu0 0.0
          %2235 = vmatprep.subr.mxu0 0.0
          %2236 = vmatpush1.xpose.msra.mxu0 0.0
          %2237 = vmatprep.subr.mxu0 0.0
          %2238 = vmatpush1.xpose.msra.mxu0 0.0
          %2239 = vmatprep.subr.mxu0 0.0
          %2240 = vmatpush1.xpose.msra.mxu0 0.0
          %2241 = vmatprep.subr.mxu0 0.0
          %2242 = vmatpush1.xpose.msra.mxu0 0.0
          %2243 = vmatprep.subr.mxu0 0.0
          %2244 = vmatpush1.xpose.msra.mxu0 0.0
          %2245 = vmatprep.subr.mxu0 0.0
          %2246 = vmatpush1.xpose.msra.mxu0 0.0
          %2247 = vmatprep.subr.mxu0 0.0
          %2248 = vmatpush1.xpose.msra.mxu0 0.0
          %2249 = vmatprep.subr.mxu0 0.0
          %2250 = vmatpush1.xpose.msra.mxu0 0.0
          %2251 = vmatprep.subr.mxu0 0.0
          %2252 = vmatpush1.xpose.msra.mxu0 0.0
          %2253 = vmatprep.subr.mxu0 0.0
          %2254 = vmatpush1.xpose.msra.mxu0 %v2227
          %2255 = vmatprep.subr.mxu0 0.0
          %2256 = vmatpush1.xpose.msra.mxu0 %v2224
          %2257 = vmatprep.subr.mxu0 0.0
          %2258 = vmatpush1.xpose.msra.mxu0 %v2221
          %2259 = vmatprep.subr.mxu0 0.0
          %2260 = vmatpush1.xpose.msra.mxu0 %v2218
          %2261 = vmatprep.subr.mxu0 0.0
          %2262 = vmatpush2.xpose.msra.mxu0 0.0
          %2263 = vmatprep.subr.mxu0 0.0
          %2264 = vmatpush2.xpose.msra.mxu0 0.0
          %2265 = vmatprep.subr.mxu0 0.0
          %2266 = vmatpush2.xpose.msra.mxu0 0.0
          %2267 = vmatprep.subr.mxu0 0.0
          %2268 = vmatpush2.xpose.msra.mxu0 0.0
          %2269 = vmatprep.subr.mxu0 0.0
          %2270 = vmatpush2.xpose.msra.mxu0 0.0
          %2271 = vmatprep.subr.mxu0 0.0
          %2272 = vmatpush2.xpose.msra.mxu0 0.0
          %2273 = vmatprep.subr.mxu0 0.0
          %2274 = vmatpush2.xpose.msra.mxu0 0.0
          %2275 = vmatprep.subr.mxu0 0.0
          %2276 = vmatpush2.xpose.msra.mxu0 0.0
          %2277 = vmatprep.subr.mxu0 0.0
          %2278 = vmatpush2.xpose.msra.mxu0 0.0
          %2279 = vmatprep.subr.mxu0 0.0
          %2280 = vmatpush2.xpose.msra.mxu0 0.0
          %2281 = vmatprep.subr.mxu0 0.0
          %2282 = vmatpush2.xpose.msra.mxu0 0.0
          %2283 = vmatprep.subr.mxu0 0.0
          %2284 = vmatpush2.xpose.msra.mxu0 0.0
          %2285 = vmatprep.subr.mxu0 0.0
          %2286 = vmatpush2.xpose.msra.mxu0 0.0
          %2287 = vmatprep.subr.mxu0 0.0
          %2288 = vmatpush2.xpose.msra.mxu0 0.0
          %2289 = vmatprep.subr.mxu0 0.0
          %2290 = vmatpush2.xpose.msra.mxu0 0.0
          %2291 = vmatprep.subr.mxu0 0.0
          %2292 = vmatpush2.xpose.msra.mxu0 0.0
          %2293 = vmatprep.mubr.f32.mxu0 0.0
          %2294 = vmatmul.mubr.f32.gmra.mxu0 %v2215
          %v2295 = vpop.f32.mrf.mxu0
          %v2296 = vadd.f32 0.0, %v2295
          %v2297 = vpop.f32.mrf.mxu0
          %2298 = vdwg.mxu0
          %v2300 = vsel %vm788, %v2195, 0
          %v2303 = vsel %vm788, %v2202, 0
          %v2306 = vsel %vm788, %v2203, 0
          %v2309 = vsel %vm788, %v2204, 0
          %v2312 = vsel %vm788, %v2205, 0
          %2314 = vmatprep.subr.mxu0 0.0
          %2315 = vmatpush1.xpose.msra.mxu0 0.0
          %2316 = vmatprep.subr.mxu0 0.0
          %2317 = vmatpush1.xpose.msra.mxu0 0.0
          %2318 = vmatprep.subr.mxu0 0.0
          %2319 = vmatpush1.xpose.msra.mxu0 0.0
          %2320 = vmatprep.subr.mxu0 0.0
          %2321 = vmatpush1.xpose.msra.mxu0 0.0
          %2322 = vmatprep.subr.mxu0 0.0
          %2323 = vmatpush1.xpose.msra.mxu0 0.0
          %2324 = vmatprep.subr.mxu0 0.0
          %2325 = vmatpush1.xpose.msra.mxu0 0.0
          %2326 = vmatprep.subr.mxu0 0.0
          %2327 = vmatpush1.xpose.msra.mxu0 0.0
          %2328 = vmatprep.subr.mxu0 0.0
          %2329 = vmatpush1.xpose.msra.mxu0 0.0
          %2330 = vmatprep.subr.mxu0 0.0
          %2331 = vmatpush1.xpose.msra.mxu0 0.0
          %2332 = vmatprep.subr.mxu0 0.0
          %2333 = vmatpush1.xpose.msra.mxu0 0.0
          %2334 = vmatprep.subr.mxu0 0.0
          %2335 = vmatpush1.xpose.msra.mxu0 0.0
          %2336 = vmatprep.subr.mxu0 0.0
          %2337 = vmatpush1.xpose.msra.mxu0 0.0
          %2338 = vmatprep.subr.mxu0 0.0
          %2339 = vmatpush1.xpose.msra.mxu0 %v2312
          %2340 = vmatprep.subr.mxu0 0.0
          %2341 = vmatpush1.xpose.msra.mxu0 %v2309
          %2342 = vmatprep.subr.mxu0 0.0
          %2343 = vmatpush1.xpose.msra.mxu0 %v2306
          %2344 = vmatprep.subr.mxu0 0.0
          %2345 = vmatpush1.xpose.msra.mxu0 %v2303
          %2346 = vmatprep.subr.mxu0 0.0
          %2347 = vmatpush2.xpose.msra.mxu0 0.0
          %2348 = vmatprep.subr.mxu0 0.0
          %2349 = vmatpush2.xpose.msra.mxu0 0.0
          %2350 = vmatprep.subr.mxu0 0.0
          %2351 = vmatpush2.xpose.msra.mxu0 0.0
          %2352 = vmatprep.subr.mxu0 0.0
          %2353 = vmatpush2.xpose.msra.mxu0 0.0
          %2354 = vmatprep.subr.mxu0 0.0
          %2355 = vmatpush2.xpose.msra.mxu0 0.0
          %2356 = vmatprep.subr.mxu0 0.0
          %2357 = vmatpush2.xpose.msra.mxu0 0.0
          %2358 = vmatprep.subr.mxu0 0.0
          %2359 = vmatpush2.xpose.msra.mxu0 0.0
          %2360 = vmatprep.subr.mxu0 0.0
          %2361 = vmatpush2.xpose.msra.mxu0 0.0
          %2362 = vmatprep.subr.mxu0 0.0
          %2363 = vmatpush2.xpose.msra.mxu0 0.0
          %2364 = vmatprep.subr.mxu0 0.0
          %2365 = vmatpush2.xpose.msra.mxu0 0.0
          %2366 = vmatprep.subr.mxu0 0.0
          %2367 = vmatpush2.xpose.msra.mxu0 0.0
          %2368 = vmatprep.subr.mxu0 0.0
          %2369 = vmatpush2.xpose.msra.mxu0 0.0
          %2370 = vmatprep.subr.mxu0 0.0
          %2371 = vmatpush2.xpose.msra.mxu0 0.0
          %2372 = vmatprep.subr.mxu0 0.0
          %2373 = vmatpush2.xpose.msra.mxu0 0.0
          %2374 = vmatprep.subr.mxu0 0.0
          %2375 = vmatpush2.xpose.msra.mxu0 0.0
          %2376 = vmatprep.subr.mxu0 0.0
          %2377 = vmatpush2.xpose.msra.mxu0 0.0
          %2378 = vmatprep.mubr.f32.mxu0 0.0
          %2379 = vmatmul.mubr.f32.gmra.mxu0 %v2300
          %v2380 = vpop.f32.mrf.mxu0
          %v2381 = vadd.f32 0.0, %v2380
          %v2382 = vpop.f32.mrf.mxu0
          %2383 = vdwg.mxu0
          %v2385 = vsel %vm788, %v2196, 0
          %v2388 = vsel %vm788, %v2206, 0
          %v2391 = vsel %vm788, %v2207, 0
          %v2394 = vsel %vm788, %v2208, 0
          %v2397 = vsel %vm788, %v2209, 0
          %2399 = vmatprep.subr.mxu0 0.0
          %2400 = vmatpush1.xpose.msra.mxu0 0.0
          %2401 = vmatprep.subr.mxu0 0.0
          %2402 = vmatpush1.xpose.msra.mxu0 0.0
          %2403 = vmatprep.subr.mxu0 0.0
          %2404 = vmatpush1.xpose.msra.mxu0 0.0
          %2405 = vmatprep.subr.mxu0 0.0
          %2406 = vmatpush1.xpose.msra.mxu0 0.0
          %2407 = vmatprep.subr.mxu0 0.0
          %2408 = vmatpush1.xpose.msra.mxu0 0.0
          %2409 = vmatprep.subr.mxu0 0.0
          %2410 = vmatpush1.xpose.msra.mxu0 0.0
          %2411 = vmatprep.subr.mxu0 0.0
          %2412 = vmatpush1.xpose.msra.mxu0 0.0
          %2413 = vmatprep.subr.mxu0 0.0
          %2414 = vmatpush1.xpose.msra.mxu0 0.0
          %2415 = vmatprep.subr.mxu0 0.0
          %2416 = vmatpush1.xpose.msra.mxu0 0.0
          %2417 = vmatprep.subr.mxu0 0.0
          %2418 = vmatpush1.xpose.msra.mxu0 0.0
          %2419 = vmatprep.subr.mxu0 0.0
          %2420 = vmatpush1.xpose.msra.mxu0 0.0
          %2421 = vmatprep.subr.mxu0 0.0
          %2422 = vmatpush1.xpose.msra.mxu0 0.0
          %2423 = vmatprep.subr.mxu0 0.0
          %2424 = vmatpush1.xpose.msra.mxu0 %v2397
          %2425 = vmatprep.subr.mxu0 0.0
          %2426 = vmatpush1.xpose.msra.mxu0 %v2394
          %2427 = vmatprep.subr.mxu0 0.0
          %2428 = vmatpush1.xpose.msra.mxu0 %v2391
          %2429 = vmatprep.subr.mxu0 0.0
          %2430 = vmatpush1.xpose.msra.mxu0 %v2388
          %2431 = vmatprep.subr.mxu0 0.0
          %2432 = vmatpush2.xpose.msra.mxu0 0.0
          %2433 = vmatprep.subr.mxu0 0.0
          %2434 = vmatpush2.xpose.msra.mxu0 0.0
          %2435 = vmatprep.subr.mxu0 0.0
          %2436 = vmatpush2.xpose.msra.mxu0 0.0
          %2437 = vmatprep.subr.mxu0 0.0
          %2438 = vmatpush2.xpose.msra.mxu0 0.0
          %2439 = vmatprep.subr.mxu0 0.0
          %2440 = vmatpush2.xpose.msra.mxu0 0.0
          %2441 = vmatprep.subr.mxu0 0.0
          %2442 = vmatpush2.xpose.msra.mxu0 0.0
          %2443 = vmatprep.subr.mxu0 0.0
          %2444 = vmatpush2.xpose.msra.mxu0 0.0
          %2445 = vmatprep.subr.mxu0 0.0
          %2446 = vmatpush2.xpose.msra.mxu0 0.0
          %2447 = vmatprep.subr.mxu0 0.0
          %2448 = vmatpush2.xpose.msra.mxu0 0.0
          %2449 = vmatprep.subr.mxu0 0.0
          %2450 = vmatpush2.xpose.msra.mxu0 0.0
          %2451 = vmatprep.subr.mxu0 0.0
          %2452 = vmatpush2.xpose.msra.mxu0 0.0
          %2453 = vmatprep.subr.mxu0 0.0
          %2454 = vmatpush2.xpose.msra.mxu0 0.0
          %2455 = vmatprep.subr.mxu0 0.0
          %2456 = vmatpush2.xpose.msra.mxu0 0.0
          %2457 = vmatprep.subr.mxu0 0.0
          %2458 = vmatpush2.xpose.msra.mxu0 0.0
          %2459 = vmatprep.subr.mxu0 0.0
          %2460 = vmatpush2.xpose.msra.mxu0 0.0
          %2461 = vmatprep.subr.mxu0 0.0
          %2462 = vmatpush2.xpose.msra.mxu0 0.0
          %2463 = vmatprep.mubr.f32.mxu0 0.0
          %2464 = vmatmul.mubr.f32.gmra.mxu0 %v2385
          %v2465 = vpop.f32.mrf.mxu0
          %v2466 = vadd.f32 0.0, %v2465
          %v2467 = vpop.f32.mrf.mxu0
          %2468 = vdwg.mxu0
          %v2470 = vsel %vm788, %v2197, 0
          %v2473 = vsel %vm788, %v2210, 0
          %v2476 = vsel %vm788, %v2211, 0
          %v2479 = vsel %vm788, %v2212, 0
          %v2482 = vsel %vm788, %v2213, 0
          %2484 = vmatprep.subr.mxu0 0.0
          %2485 = vmatpush1.xpose.msra.mxu0 0.0
          %2486 = vmatprep.subr.mxu0 0.0
          %2487 = vmatpush1.xpose.msra.mxu0 0.0
          %2488 = vmatprep.subr.mxu0 0.0
          %2489 = vmatpush1.xpose.msra.mxu0 0.0
          %2490 = vmatprep.subr.mxu0 0.0
          %2491 = vmatpush1.xpose.msra.mxu0 0.0
          %2492 = vmatprep.subr.mxu0 0.0
          %2493 = vmatpush1.xpose.msra.mxu0 0.0
          %2494 = vmatprep.subr.mxu0 0.0
          %2495 = vmatpush1.xpose.msra.mxu0 0.0
          %2496 = vmatprep.subr.mxu0 0.0
          %2497 = vmatpush1.xpose.msra.mxu0 0.0
          %2498 = vmatprep.subr.mxu0 0.0
          %2499 = vmatpush1.xpose.msra.mxu0 0.0
          %2500 = vmatprep.subr.mxu0 0.0
          %2501 = vmatpush1.xpose.msra.mxu0 0.0
          %2502 = vmatprep.subr.mxu0 0.0
          %2503 = vmatpush1.xpose.msra.mxu0 0.0
          %2504 = vmatprep.subr.mxu0 0.0
          %2505 = vmatpush1.xpose.msra.mxu0 0.0
          %2506 = vmatprep.subr.mxu0 0.0
          %2507 = vmatpush1.xpose.msra.mxu0 0.0
          %2508 = vmatprep.subr.mxu0 0.0
          %2509 = vmatpush1.xpose.msra.mxu0 %v2482
          %2510 = vmatprep.subr.mxu0 0.0
          %2511 = vmatpush1.xpose.msra.mxu0 %v2479
          %2512 = vmatprep.subr.mxu0 0.0
          %2513 = vmatpush1.xpose.msra.mxu0 %v2476
          %2514 = vmatprep.subr.mxu0 0.0
          %2515 = vmatpush1.xpose.msra.mxu0 %v2473
          %2516 = vmatprep.subr.mxu0 0.0
          %2517 = vmatpush2.xpose.msra.mxu0 0.0
          %2518 = vmatprep.subr.mxu0 0.0
          %2519 = vmatpush2.xpose.msra.mxu0 0.0
          %2520 = vmatprep.subr.mxu0 0.0
          %2521 = vmatpush2.xpose.msra.mxu0 0.0
          %2522 = vmatprep.subr.mxu0 0.0
          %2523 = vmatpush2.xpose.msra.mxu0 0.0
          %2524 = vmatprep.subr.mxu0 0.0
          %2525 = vmatpush2.xpose.msra.mxu0 0.0
          %2526 = vmatprep.subr.mxu0 0.0
          %2527 = vmatpush2.xpose.msra.mxu0 0.0
          %2528 = vmatprep.subr.mxu0 0.0
          %2529 = vmatpush2.xpose.msra.mxu0 0.0
          %2530 = vmatprep.subr.mxu0 0.0
          %2531 = vmatpush2.xpose.msra.mxu0 0.0
          %2532 = vmatprep.subr.mxu0 0.0
          %2533 = vmatpush2.xpose.msra.mxu0 0.0
          %2534 = vmatprep.subr.mxu0 0.0
          %2535 = vmatpush2.xpose.msra.mxu0 0.0
          %2536 = vmatprep.subr.mxu0 0.0
          %2537 = vmatpush2.xpose.msra.mxu0 0.0
          %2538 = vmatprep.subr.mxu0 0.0
          %2539 = vmatpush2.xpose.msra.mxu0 0.0
          %2540 = vmatprep.subr.mxu0 0.0
          %2541 = vmatpush2.xpose.msra.mxu0 0.0
          %2542 = vmatprep.subr.mxu0 0.0
          %2543 = vmatpush2.xpose.msra.mxu0 0.0
          %2544 = vmatprep.subr.mxu0 0.0
          %2545 = vmatpush2.xpose.msra.mxu0 0.0
          %2546 = vmatprep.subr.mxu0 0.0
          %2547 = vmatpush2.xpose.msra.mxu0 0.0
          %2548 = vmatprep.mubr.f32.mxu0 0.0
          %2549 = vmatmul.mubr.f32.gmra.mxu0 %v2470
          %v2550 = vpop.f32.mrf.mxu0
          %v2551 = vadd.f32 0.0, %v2550
          %v2552 = vpop.f32.mrf.mxu0
          %2553 = vdwg.mxu0
          %v2554 = vsel %vm700, %v2296, 0.0
          %v2555 = vsel %vm700, %v2381, 0.0
          %v2556 = vadd.f32 %v2554, %v2555
          %v2557 = vsel %vm700, %v2466, 0.0
          %v2558 = vadd.f32 %v2556, %v2557
          %v2559 = vsel %vm700, %v2551, 0.0
          %v2560 = vadd.f32 %v2558, %v2559
          %v2561 = vld [vmem:[%s6] sm:$0x1]
          %v2563 = vlaneseq
          %v2564 = vshrl.u32 %v2563, 7
          %v2565 = vsub.s32 0, %v2564
          %v2566 = vrot.slane %v2561, %v2565
          %v2568 = vadd.f32 %v2560, %v2566
          %2569 = vst.msk [vmem:[%s349] sm:$0xff] %vm700, %v2568
        $region64: #{tpu_custom_call.1} parent=47 // pred_fallthru
          _
        %s2570 = sand.u32 %s206, 1
        %s2571 = scalar_lea.sflag [#allocation10], %s2570
        %s2572 = sand.u32 %s206, 1
        %s2573 = smul.addr %s2572, 8
        %s2574 = scalar_lea.vmem [#allocation13], %s2573
        // Predicated region
        $region65: #{tpu_custom_call.1} parent=47 // pred_check
          %p2575 = pneg %p216
        $region66: #{tpu_custom_call.1} parent=47 // pred_check_branch
          %2577 = sbr.rel (%p2575) target = $region68
        $region67: #{tpu_custom_call.1} parent=47 // pred_region
          %s2579 = ssub.s32 128, 128
          %2580 = vsyncadd %s2571, %s2579
          %s2581 = smul.addr %s31, 128
          %s2582 = scalar_lea.hbm %s7, %s2581
          %s2584 = sshll.u32 %s2574, 4
          %s2585 = int_to_ptr.vmem [resolvable:$true] %s2584
          %2587 = dma.vmem_to_hbm [thread:$0]  %s2585, 128, %s2582, %s2571
        $region68: #{tpu_custom_call.1} parent=47 // pred_fallthru
          _
      $region48: #{tpu_custom_call.1} parent=5 // pred_fallthru
        _
      %p2588 = scmp.le.s32.totalorder 2, %s22
      // Predicated region
      $region69: #{tpu_custom_call.1} parent=5 // pred_check
        %p2589 = pneg %p2588
      $region70: #{tpu_custom_call.1} parent=5 // pred_check_branch
        %2591 = sbr.rel (%p2589) target = $region72
      $region71: #{tpu_custom_call.1} parent=5 // pred_region
        %s2592 = ssub.s32 %s22, 2
        // Predicated region
        $region73: #{tpu_custom_call.1} parent=71 // pred_check
          %p2593 = pneg %p222
        $region74: #{tpu_custom_call.1} parent=71 // pred_check_branch
          %2595 = sbr.rel (%p2593) target = $region76
        $region75: #{tpu_custom_call.1} parent=71 // pred_region
          %s2596 = sand.u32 %s207, 1
          %s2597 = scalar_lea.sflag [#allocation10], %s2596
          %s2598 = sand.u32 %s207, 1
          %s2599 = smul.addr %s2598, 8
          %s2600 = scalar_lea.vmem [#allocation13], %s2599
          %2601 = dma.done %s2597, 128
        $region76: #{tpu_custom_call.1} parent=71 // pred_fallthru
          _
      $region72: #{tpu_custom_call.1} parent=5 // pred_fallthru
        _
    $region6: #{tpu_custom_call.1} parent=1 // loop_footer
      %s26 = sadd.s32 1, %s22
    $region7: #{tpu_custom_call.1} parent=1 // loop_footer_branch
      %21 = sbr.rel target = $region3
    $region8: #{tpu_custom_call.1} parent=1 // loop_exit
      _
    %2602 = vsyncpa [#allocation9], 1
    %s2603 = scalar_lea.sflag [#allocation9], 1
    %2604 = vsyncpa %s2603, 1
    %2605 = vsyncpa [#allocation12], 1
    %s2606 = scalar_lea.sflag [#allocation12], 1
    %2607 = vsyncpa %s2606, 1
    %2608 = vsyncpa [#allocation10], 1
    %s2609 = scalar_lea.sflag [#allocation10], 1
    %2610 = vsyncpa %s2609, 1

</llo_original>
